<compile_context>
chip_gen: v7x
topology: tpu7x:2x2x1
jax: 0.10.0
libtpu: 0.0.40
codegen_flags: <defaults>
</compile_context>

<pallas_src>
import functools
import math

import jax
import jax.numpy as jnp
from jax.experimental import pallas as pl
from jax.experimental.pallas import tpu as pltpu


# ----------------------------------------------------------------------------
# Kernel A: LSTM + attention + fc1 ("hidden path"), runs once per decode step.
# ----------------------------------------------------------------------------
def _make_hidden_kernel(n_layers: int, hidden: int):
    H = hidden

    def kernel(*refs):
        emb_ref, h0_ref, c0_ref, enc_ref, mask_ref = refs[:5]
        idx = 5
        w_ih = refs[idx:idx + n_layers]; idx += n_layers   # [in_l, 4H] bf16
        w_hh = refs[idx:idx + n_layers]; idx += n_layers   # [H,   4H] bf16
        b_g = refs[idx:idx + n_layers]; idx += n_layers    # [1,   4H] f32 (b_ih+b_hh)
        w1a_ref, w1b_ref, b1_ref = refs[idx:idx + 3]; idx += 3
        hout_ref, cout_ref, attn_ref, hfc_ref = refs[idx:idx + 4]

        # ---- single-step multi-layer LSTM (PyTorch gate order i, f, g, o) ----
        # Two dots per layer against the w_ih / w_hh halves: no in-kernel concat.
        x = emb_ref[...]                                    # [B, E] f32
        for l in range(n_layers):
            h_prev = h0_ref[l, :, :]                        # [B, H]
            c_prev = c0_ref[l, :, :]                        # [B, H]
            gates = (jnp.dot(x.astype(jnp.bfloat16), w_ih[l][...],
                             preferred_element_type=jnp.float32)
                     + jnp.dot(h_prev.astype(jnp.bfloat16), w_hh[l][...],
                               preferred_element_type=jnp.float32)
                     + b_g[l][...])                         # [B, 4H] f32
            sig_if = jax.nn.sigmoid(gates[:, :2 * H])       # fused i/f sigmoid (EUP)
            i_g = sig_if[:, :H]
            f_g = sig_if[:, H:]
            g_g = jnp.tanh(gates[:, 2 * H:3 * H])
            o_g = jax.nn.sigmoid(gates[:, 3 * H:])
            c_new = f_g * c_prev + i_g * g_g
            h_new = o_g * jnp.tanh(c_new)
            hout_ref[l, :, :] = h_new
            cout_ref[l, :, :] = c_new
            x = h_new                                       # recurrent_dropout == 0
        output = x                                          # [B, H] f32

        # ---- masked Luong dot attention (VPU multiply + reduce; q=1 so the MXU
        #      would run at <=1/256 row utilization -- keep it off the MXU) ------
        enc = enc_ref[...].astype(jnp.float32)              # [B, S, H] (bf16 in HBM)
        score = jnp.sum(enc * output[:, None, :], axis=-1)  # [B, S]
        score = jnp.where(mask_ref[...] > 0.5, score, -1e30)
        m = jnp.max(score, axis=1, keepdims=True)
        e = jnp.exp(score - m)
        aw = e * pl.reciprocal(jnp.sum(e, axis=1, keepdims=True), approx=False)
        attn_ref[...] = aw                                  # [B, S] lane-dense
        context = jnp.sum(aw[:, :, None] * enc, axis=1)     # [B, H]

        # ---- fc1 split into context/output halves (no concat) -> leaky_relu ----
        hfc = (jnp.dot(context.astype(jnp.bfloat16), w1a_ref[...],
                       preferred_element_type=jnp.float32)
               + jnp.dot(output.astype(jnp.bfloat16), w1b_ref[...],
                         preferred_element_type=jnp.float32)
               + b1_ref[...])
        hfc = jnp.where(hfc > 0, hfc, 0.01 * hfc)           # leaky_relu(0.01), f32
        hfc_ref[...] = hfc.astype(jnp.bfloat16)             # cast ONCE for fc2

    return kernel


# ----------------------------------------------------------------------------
# Kernel B: fc2 vocab projection, tiled over the (padded) vocab axis.
# ----------------------------------------------------------------------------
def _fc2_bf16_kernel(hfc_ref, w2_ref, b2_ref, logit_ref):
    logit_ref[...] = (jnp.dot(hfc_ref[...], w2_ref[...],
                              preferred_element_type=jnp.float32)
                      + b2_ref[...])


def _fc2_int8_kernel(hfc_ref, w2q_ref, scale_ref, b2_ref, logit_ref):
    # int8 weights halve the dominant w2 HBM stream; int8 values are exactly
    # representable in bf16, per-column f32 scale applied after the dot.
    acc = jnp.dot(hfc_ref[...], w2q_ref[...].astype(jnp.bfloat16),
                  preferred_element_type=jnp.float32)
    logit_ref[...] = acc * scale_ref[...] + b2_ref[...]


# ----------------------------------------------------------------------------
# Parameter init / one-time prep
# ----------------------------------------------------------------------------
def init_params(key, vocab_size, embedding_size, hidden_size, n_layers):
    """Deterministic parameter init (shapes match the nn.Module __init__)."""
    ks = jax.random.split(key, 4 + 4 * n_layers)
    s = 1.0 / jnp.sqrt(hidden_size)
    p = {}
    p["emb"] = jax.random.normal(ks[0], (vocab_size, embedding_size), jnp.float32) * 0.1
    p["lstm"] = []
    for l in range(n_layers):
        in_sz = embedding_size if l == 0 else hidden_size
        k0, k1, k2, k3 = jax.random.split(ks[1 + l], 4)
        p["lstm"].append(dict(
            w_ih=jax.random.uniform(k0, (4 * hidden_size, in_sz), jnp.float32, -s, s),
            w_hh=jax.random.uniform(k1, (4 * hidden_size, hidden_size), jnp.float32, -s, s),
            b_ih=jax.random.uniform(k2, (4 * hidden_size,), jnp.float32, -s, s),
            b_hh=jax.random.uniform(k3, (4 * hidden_size,), jnp.float32, -s, s),
        ))
    k0, k1 = jax.random.split(ks[-2])
    p["fc1_w"] = jax.random.uniform(k0, (hidden_size, 2 * hidden_size), jnp.float32, -s, s)
    p["fc1_b"] = jax.random.uniform(k1, (hidden_size,), jnp.float32, -s, s)
    k0, k1 = jax.random.split(ks[-1])
    p["fc2_w"] = jax.random.uniform(k0, (vocab_size, hidden_size), jnp.float32, -s, s)
    p["fc2_b"] = jax.random.uniform(k1, (vocab_size,), jnp.float32, -s, s)
    return p


def _pick_tile_v(vocab: int) -> int:
    """Large, lane-dense vocab tiles (>=512); vocab is padded to a multiple."""
    if vocab >= 2048:
        return 2048
    return max(512, ((vocab + 127) // 128) * 128)


def prepare_params(params, tile_v, w2_format="bf16"):
    """One-time prep (outside the decode loop): transpose to [in,out], pre-sum the
    LSTM biases, split fc1, cast to bf16, pad vocab to a multiple of tile_v, and
    optionally quantize fc2 to int8 (per-output-column scales)."""
    H = params["fc1_b"].shape[0]
    V = params["fc2_b"].shape[0]
    Vp = ((V + tile_v - 1) // tile_v) * tile_v
    prepped = {"emb": params["emb"]}
    w_ih, w_hh, bias = [], [], []
    for lw in params["lstm"]:
        w_ih.append(lw["w_ih"].T.astype(jnp.bfloat16))                 # [in_l, 4H]
        w_hh.append(lw["w_hh"].T.astype(jnp.bfloat16))                 # [H, 4H]
        bias.append((lw["b_ih"] + lw["b_hh"])[None, :].astype(jnp.float32))
    prepped["lstm_w_ih"] = w_ih
    prepped["lstm_w_hh"] = w_hh
    prepped["lstm_b"] = bias
    w1t = params["fc1_w"].T                                            # [2H, H]
    prepped["w1a"] = w1t[:H].astype(jnp.bfloat16)                      # x context
    prepped["w1b"] = w1t[H:].astype(jnp.bfloat16)                      # x LSTM output
    prepped["b1"] = params["fc1_b"][None, :].astype(jnp.float32)

    w2t = jnp.zeros((H, Vp), jnp.float32).at[:, :V].set(params["fc2_w"].T)
    b2 = jnp.zeros((Vp,), jnp.float32).at[:V].set(params["fc2_b"])
    if w2_format == "int8":
        amax = jnp.max(jnp.abs(w2t), axis=0, keepdims=True)            # [1, Vp]
        scale = jnp.maximum(amax, 1e-8) / 127.0
        prepped["w2_q"] = jnp.clip(jnp.round(w2t / scale), -127, 127).astype(jnp.int8)
        prepped["w2_scale"] = scale.astype(jnp.float32)
        # TODO(synk): on v7x store fp8_e4m3 instead (v7x MXU takes fp8, not int8);
        # the int8 path still halves HBM bytes there via a VPU up-cast to bf16.
    else:
        prepped["w2"] = w2t.astype(jnp.bfloat16)                       # [H, Vp]
    prepped["b2"] = b2[None, :]                                        # [1, Vp]
    return prepped


def prepare_encoder(enc_outputs_sbh, mask_sb1):
    """One-time per sequence (outside the decode loop): batch-major, bf16 enc."""
    enc_bsh = jnp.transpose(enc_outputs_sbh, (1, 0, 2)).astype(jnp.bfloat16)  # [B,S,H]
    mask_bs = jnp.transpose(mask_sb1[:, :, 0], (1, 0)).astype(jnp.float32)    # [B,S]
    return enc_bsh, mask_bs


def _vmem_limit(bytes_needed: int) -> int:
    # Double-buffer allowance + headroom, clamped well below v7x's 64 MiB physical
    # VMEM per TensorCore (and above v5e's 16 MiB scoped default).
    return int(min(max(2 * bytes_needed + (4 << 20), 16 << 20), 56 << 20))


# ----------------------------------------------------------------------------
# One decode step
# ----------------------------------------------------------------------------
@functools.partial(jax.jit, static_argnames=("n_layers", "vocab_size", "tile_v"))
def luong_decoder_step(prepped, input_word_index, h_state, c_state,
                       enc_bsh, mask_bs, n_layers, vocab_size, tile_v):
    """One decode step.  Returns (logit[B,V], h_state, c_state, attention[S,B])."""
    L = n_layers
    B = input_word_index.shape[0]
    S = enc_bsh.shape[1]
    H = h_state.shape[-1]
    E = prepped["emb"].shape[1]
    Vp = prepped["b2"].shape[1]
    assert Vp % tile_v == 0

    # Embedding gather (glue) + embedding_dropout (p=0 -> identity).
    embedded = jnp.take(prepped["emb"], input_word_index, axis=0)      # [B, E]

    # ---------------- Kernel A: hidden path (single grid step) ----------------
    args_a = [embedded, h_state, c_state, enc_bsh, mask_bs]
    args_a += list(prepped["lstm_w_ih"]) + list(prepped["lstm_w_hh"])
    args_a += list(prepped["lstm_b"])
    args_a += [prepped["w1a"], prepped["w1b"], prepped["b1"]]

    def const(shape):
        n = len(shape)
        return pl.BlockSpec(shape, lambda i, _n=n: (0,) * _n)

    in_specs_a = [const(a.shape) for a in args_a]
    out_shapes_a = (
        jax.ShapeDtypeStruct((L, B, H), jnp.float32),   # h_state (aliased in-place)
        jax.ShapeDtypeStruct((L, B, H), jnp.float32),   # c_state (aliased in-place)
        jax.ShapeDtypeStruct((B, S), jnp.float32),      # attention weights (batch-major)
        jax.ShapeDtypeStruct((B, H), jnp.bfloat16),     # fc1 activation for fc2
    )
    out_specs_a = [const(s.shape) for s in out_shapes_a]

    bytes_a = (sum(int(a.size) * a.dtype.itemsize for a in args_a)
               + sum(math.prod(s.shape) * jnp.dtype(s.dtype).itemsize
                     for s in out_shapes_a))

    h_new, c_new, attn_bs, hfc = pl.pallas_call(
        _make_hidden_kernel(L, H),
        out_shape=out_shapes_a,
        grid_spec=pltpu.PrefetchScalarGridSpec(
            num_scalar_prefetch=0,
            grid=(1,),
            in_specs=in_specs_a,
            out_specs=out_specs_a),
        input_output_aliases={1: 0, 2: 1},              # in-place recurrent state
        compiler_params=pltpu.CompilerParams(
            dimension_semantics=("arbitrary",),
            vmem_limit_bytes=_vmem_limit(bytes_a)),
    )(*args_a)

    # ---------------- Kernel B: fc2, vocab-tiled, "parallel" grid --------------
    use_int8 = "w2_q" in prepped
    if use_int8:
        args_b = [hfc, prepped["w2_q"], prepped["w2_scale"], prepped["b2"]]
        in_specs_b = [
            pl.BlockSpec((B, H), lambda j: (0, 0)),          # grid-invariant, tiny
            pl.BlockSpec((H, tile_v), lambda j: (0, j)),     # int8 weight stream
            pl.BlockSpec((1, tile_v), lambda j: (0, j)),     # per-column scales
            pl.BlockSpec((1, tile_v), lambda j: (0, j)),     # bias stream
        ]
        kern_b = _fc2_int8_kernel
        w_tile_bytes = H * tile_v * 1 + tile_v * 4
    else:
        args_b = [hfc, prepped["w2"], prepped["b2"]]
        in_specs_b = [
            pl.BlockSpec((B, H), lambda j: (0, 0)),
            pl.BlockSpec((H, tile_v), lambda j: (0, j)),     # bf16 weight stream
            pl.BlockSpec((1, tile_v), lambda j: (0, j)),
        ]
        kern_b = _fc2_bf16_kernel
        w_tile_bytes = H * tile_v * 2

    bytes_b = B * H * 2 + 2 * (w_tile_bytes + tile_v * 4 + B * tile_v * 4)

    logit_p = pl.pallas_call(
        kern_b,
        out_shape=jax.ShapeDtypeStruct((B, Vp), jnp.float32),
        grid_spec=pltpu.PrefetchScalarGridSpec(
            num_scalar_prefetch=0,
            grid=(Vp // tile_v,),
            in_specs=in_specs_b,
            out_specs=pl.BlockSpec((B, tile_v), lambda j: (0, j))),
        compiler_params=pltpu.CompilerParams(
            # Independent vocab tiles -> megacore-splittable on v7x; harmless on
            # v5e/v6e (single TensorCore per chip).
            dimension_semantics=("parallel",),
            vmem_limit_bytes=_vmem_limit(bytes_b)),
    )(*args_b)

    logit = logit_p[:, :vocab_size]                          # drop vocab padding

    # Back to the module contract: attention_weights.squeeze(2) is [S, B].
    return logit, h_new, c_new, attn_bs.T


# ----------------------------------------------------------------------------
# Pure-JAX f32 reference (for sanity check)
# ----------------------------------------------------------------------------
def _reference(params, input_word_index, h_state, c_state, enc_outputs, mask_bool, n_layers):
    H = h_state.shape[-1]
    x = jnp.take(params["emb"], input_word_index, axis=0)
    h_out, c_out = [], []
    for l in range(n_layers):
        lw = params["lstm"][l]
        g = x @ lw["w_ih"].T + h_state[l] @ lw["w_hh"].T + lw["b_ih"] + lw["b_hh"]
        i, f, gg, o = (jax.nn.sigmoid(g[:, :H]), jax.nn.sigmoid(g[:, H:2*H]),
                       jnp.tanh(g[:, 2*H:3*H]), jax.nn.sigmoid(g[:, 3*H:]))
        c = f * c_state[l] + i * gg
        h = o * jnp.tanh(c)
        h_out.append(h); c_out.append(c); x = h
    out = x
    score = jnp.sum(enc_outputs * out[None], axis=-1)
    score = jnp.where(mask_bool[:, :, 0], score, -1e30)
    aw = jax.nn.softmax(score, axis=0)                        # [S, B]
    ctx = jnp.sum(enc_outputs * aw[:, :, None], axis=0)
    hfc = jnp.concatenate([ctx, out], axis=1) @ params["fc1_w"].T + params["fc1_b"]
    hfc = jnp.where(hfc > 0, hfc, 0.01 * hfc)
    logit = hfc @ params["fc2_w"].T + params["fc2_b"]
    return logit, jnp.stack(h_out), jnp.stack(c_out), aw


if __name__ == "__main__":
    # Small, TPU-friendly shapes.  V=3000 exercises vocab padding (to 4096) and a
    # multi-step "parallel" fc2 grid with tile_v=2048.
    # NOTE: at B=8 every matmul is MXU-starved; batch more decode streams at the
    # caller level to amortize the w2 bytes (see perf notes).
    B, S, H, E, V, L = 8, 8, 128, 128, 3000, 2

    key = jax.random.PRNGKey(0)
    kp, k1, k2, k3, k4 = jax.random.split(key, 5)

    params = init_params(kp, V, E, H, L)

    input_word_index = jax.random.randint(k1, (B,), 0, V, dtype=jnp.int32)
    h_state = jax.random.normal(k2, (L, B, H), jnp.float32) * 0.1
    c_state = jax.random.normal(k3, (L, B, H), jnp.float32) * 0.1
    enc_outputs = jax.random.normal(k4, (S, B, H), jnp.float32) * 0.1
    # mask[s, b, 0] = s < length[b], lengths in [1, S]  (module contract: bool [S,B,1];
    # every row must have length >= 1).
    lengths = (jnp.arange(B) % S) + 1
    mask = (jnp.arange(S)[:, None] < lengths[None, :])[:, :, None]

    tile_v = _pick_tile_v(V)
    enc_bsh, mask_bs = prepare_encoder(enc_outputs, mask)

    r_logit, r_h, r_c, r_attn = _reference(
        params, input_word_index, h_state, c_state, enc_outputs, mask, L)

    # Exercise both the bf16 and the int8-quantized fc2 weight paths.
    for w2_format, tol in (("bf16", 2e-2), ("int8", 3e-2)):
        prepped = prepare_params(params, tile_v, w2_format=w2_format)
        logit, h_new, c_new, attn = luong_decoder_step(
            prepped, input_word_index, h_state, c_state, enc_bsh, mask_bs,
            n_layers=L, vocab_size=V, tile_v=tile_v)
        jax.block_until_ready((logit, h_new, c_new, attn))

        assert logit.shape == (B, V) and attn.shape == (S, B)
        assert jnp.allclose(logit, r_logit, atol=tol, rtol=tol), w2_format
        assert jnp.allclose(h_new, r_h, atol=1e-2, rtol=1e-2), w2_format
        assert jnp.allclose(c_new, r_c, atol=1e-2, rtol=1e-2), w2_format
        assert jnp.allclose(attn, r_attn, atol=1e-2, rtol=1e-2), w2_format

    print("KERNEL_OK")
</pallas_src>

<mosaic_0001>
module attributes {stable_mosaic.version = 11 : i64} {
  func.func @_fc2_bf16_kernel(%arg0: i32, %arg1: memref<8x128xbf16, #tpu.memory_space<vmem>>, %arg2: memref<128x2048xbf16, #tpu.memory_space<vmem>>, %arg3: memref<1x2048xf32, #tpu.memory_space<vmem>>, %arg4: memref<8x2048xf32, #tpu.memory_space<vmem>>) attributes {dimension_semantics = [#tpu.dimension_semantics<parallel>], iteration_bounds = array<i64: 2>, scalar_prefetch = 0 : i64, scratch_operands = 0 : i64, tpu.core_type = #tpu.core_type<tc>, window_params = [{pipeline_mode = #tpu.pipeline_mode<synchronous>, transform_indices = @transform_0, window_bounds = array<i64: 8, 128>}, {transform_indices = @transform_1, window_bounds = array<i64: 128, 2048>}, {transform_indices = @transform_2, window_bounds = array<i64: 1, 2048>}, {transform_indices = @transform_3, window_bounds = array<i64: 8, 2048>}]} {
    %c0 = arith.constant 0 : index
    %c0_0 = arith.constant 0 : index
    %0 = vector.load %arg1[%c0, %c0_0] : memref<8x128xbf16, #tpu.memory_space<vmem>>, vector<8x128xbf16>
    %c0_1 = arith.constant 0 : index
    %c0_2 = arith.constant 0 : index
    %1 = vector.load %arg2[%c0_1, %c0_2] : memref<128x2048xbf16, #tpu.memory_space<vmem>>, vector<128x2048xbf16>
    %cst = arith.constant dense<0.000000e+00> : vector<8x2048xf32>
    %2 = tpu.matmul %0, %1, %cst {dimension_numbers = #tpu.dot_dimension_numbers<[1], [0], [0], [1], [0, 0, 1, 1], [], []>} : vector<8x128xbf16>, vector<128x2048xbf16>, vector<8x2048xf32> -> vector<8x2048xf32>
    %c0_3 = arith.constant 0 : index
    %c0_4 = arith.constant 0 : index
    %3 = vector.load %arg3[%c0_3, %c0_4] : memref<1x2048xf32, #tpu.memory_space<vmem>>, vector<1x2048xf32>
    %4 = vector.broadcast %3 : vector<1x2048xf32> to vector<8x2048xf32>
    %5 = arith.addf %2, %4 : vector<8x2048xf32>
    %c0_5 = arith.constant 0 : index
    %c0_6 = arith.constant 0 : index
    %6 = vector.load %arg4[%c0_5, %c0_6] : memref<8x2048xf32, #tpu.memory_space<vmem>>, vector<8x2048xf32>
    tpu.vector_store %arg4[%c0_5, %c0_6], %5 {strides = array<i32>} : memref<8x2048xf32, #tpu.memory_space<vmem>>, vector<8x2048xf32>,
    return
  }
  func.func @transform_0(%arg0: i32) -> (i32, i32) {
    %c0_i32 = arith.constant 0 : i32
    %c0_i32_0 = arith.constant 0 : i32
    %c0_i32_1 = arith.constant 0 : i32
    return %c0_i32, %c0_i32_0 : i32, i32
  }
  func.func @transform_1(%arg0: i32) -> (i32, i32) {
    %c0_i32 = arith.constant 0 : i32
    %c0_i32_0 = arith.constant 0 : i32
    return %c0_i32, %arg0 : i32, i32
  }
  func.func @transform_2(%arg0: i32) -> (i32, i32) {
    %c0_i32 = arith.constant 0 : i32
    %c0_i32_0 = arith.constant 0 : i32
    return %c0_i32, %arg0 : i32, i32
  }
  func.func @transform_3(%arg0: i32) -> (i32, i32) {
    %c0_i32 = arith.constant 0 : i32
    %c0_i32_0 = arith.constant 0 : i32
    return %c0_i32, %arg0 : i32, i32
  }
}

module attributes {stable_mosaic.version = 11 : i64} {
  func.func @kernel(%arg0: i32, %arg1: memref<8x128xf32, #tpu.memory_space<vmem>>, %arg2: memref<2x8x128xf32, #tpu.memory_space<vmem>>, %arg3: memref<2x8x128xf32, #tpu.memory_space<vmem>>, %arg4: memref<8x8x128xbf16, #tpu.memory_space<vmem>>, %arg5: memref<8x8xf32, #tpu.memory_space<vmem>>, %arg6: memref<128x512xbf16, #tpu.memory_space<vmem>>, %arg7: memref<128x512xbf16, #tpu.memory_space<vmem>>, %arg8: memref<128x512xbf16, #tpu.memory_space<vmem>>, %arg9: memref<128x512xbf16, #tpu.memory_space<vmem>>, %arg10: memref<1x512xf32, #tpu.memory_space<vmem>>, %arg11: memref<1x512xf32, #tpu.memory_space<vmem>>, %arg12: memref<128x128xbf16, #tpu.memory_space<vmem>>, %arg13: memref<128x128xbf16, #tpu.memory_space<vmem>>, %arg14: memref<1x128xf32, #tpu.memory_space<vmem>>, %arg15: memref<2x8x128xf32, #tpu.memory_space<vmem>>, %arg16: memref<2x8x128xf32, #tpu.memory_space<vmem>>, %arg17: memref<8x8xf32, #tpu.memory_space<vmem>>, %arg18: memref<8x128xbf16, #tpu.memory_space<vmem>>) attributes {dimension_semantics = [#tpu.dimension_semantics<arbitrary>], iteration_bounds = array<i64: 1>, scalar_prefetch = 0 : i64, scratch_operands = 0 : i64, tpu.core_type = #tpu.core_type<tc>, window_params = [{pipeline_mode = #tpu.pipeline_mode<synchronous>, transform_indices = @transform_0, window_bounds = array<i64: 8, 128>}, {pipeline_mode = #tpu.pipeline_mode<synchronous>, transform_indices = @transform_1, window_bounds = array<i64: 2, 8, 128>}, {pipeline_mode = #tpu.pipeline_mode<synchronous>, transform_indices = @transform_2, window_bounds = array<i64: 2, 8, 128>}, {pipeline_mode = #tpu.pipeline_mode<synchronous>, transform_indices = @transform_3, window_bounds = array<i64: 8, 8, 128>}, {pipeline_mode = #tpu.pipeline_mode<synchronous>, transform_indices = @transform_4, window_bounds = array<i64: 8, 8>}, {pipeline_mode = #tpu.pipeline_mode<synchronous>, transform_indices = @transform_5, window_bounds = array<i64: 128, 512>}, {pipeline_mode = #tpu.pipeline_mode<synchronous>, transform_indices = @transform_6, window_bounds = array<i64: 128, 512>}, {pipeline_mode = #tpu.pipeline_mode<synchronous>, transform_indices = @transform_7, window_bounds = array<i64: 128, 512>}, {pipeline_mode = #tpu.pipeline_mode<synchronous>, transform_indices = @transform_8, window_bounds = array<i64: 128, 512>}, {pipeline_mode = #tpu.pipeline_mode<synchronous>, transform_indices = @transform_9, window_bounds = array<i64: 1, 512>}, {pipeline_mode = #tpu.pipeline_mode<synchronous>, transform_indices = @transform_10, window_bounds = array<i64: 1, 512>}, {pipeline_mode = #tpu.pipeline_mode<synchronous>, transform_indices = @transform_11, window_bounds = array<i64: 128, 128>}, {pipeline_mode = #tpu.pipeline_mode<synchronous>, transform_indices = @transform_12, window_bounds = array<i64: 128, 128>}, {pipeline_mode = #tpu.pipeline_mode<synchronous>, transform_indices = @transform_13, window_bounds = array<i64: 1, 128>}, {pipeline_mode = #tpu.pipeline_mode<synchronous>, transform_indices = @transform_14, window_bounds = array<i64: 2, 8, 128>}, {pipeline_mode = #tpu.pipeline_mode<synchronous>, transform_indices = @transform_15, window_bounds = array<i64: 2, 8, 128>}, {pipeline_mode = #tpu.pipeline_mode<synchronous>, transform_indices = @transform_16, window_bounds = array<i64: 8, 8>}, {pipeline_mode = #tpu.pipeline_mode<synchronous>, transform_indices = @transform_17, window_bounds = array<i64: 8, 128>}]} {
    %c0 = arith.constant 0 : index
    %c0_0 = arith.constant 0 : index
    %0 = vector.load %arg1[%c0, %c0_0] : memref<8x128xf32, #tpu.memory_space<vmem>>, vector<8x128xf32>
    %c0_1 = arith.constant 0 : index
    %c0_2 = arith.constant 0 : index
    %c0_3 = arith.constant 0 : index
    %1 = vector.load %arg2[%c0_1, %c0_2, %c0_3] : memref<2x8x128xf32, #tpu.memory_space<vmem>>, vector<1x8x128xf32>
    %2 = vector.shape_cast %1 : vector<1x8x128xf32> to vector<8x128xf32>
    %c0_4 = arith.constant 0 : index
    %c0_5 = arith.constant 0 : index
    %c0_6 = arith.constant 0 : index
    %3 = vector.load %arg3[%c0_4, %c0_5, %c0_6] : memref<2x8x128xf32, #tpu.memory_space<vmem>>, vector<1x8x128xf32>
    %4 = vector.shape_cast %3 : vector<1x8x128xf32> to vector<8x128xf32>
    %5 = arith.truncf %0 : vector<8x128xf32> to vector<8x128xbf16>
    %c0_7 = arith.constant 0 : index
    %c0_8 = arith.constant 0 : index
    %6 = vector.load %arg6[%c0_7, %c0_8] : memref<128x512xbf16, #tpu.memory_space<vmem>>, vector<128x512xbf16>
    %cst = arith.constant dense<0.000000e+00> : vector<8x512xf32>
    %7 = tpu.matmul %5, %6, %cst {dimension_numbers = #tpu.dot_dimension_numbers<[1], [0], [0], [1], [0, 0, 1, 1], [], []>} : vector<8x128xbf16>, vector<128x512xbf16>, vector<8x512xf32> -> vector<8x512xf32>
    %8 = arith.truncf %2 : vector<8x128xf32> to vector<8x128xbf16>
    %c0_9 = arith.constant 0 : index
    %c0_10 = arith.constant 0 : index
    %9 = vector.load %arg8[%c0_9, %c0_10] : memref<128x512xbf16, #tpu.memory_space<vmem>>, vector<128x512xbf16>
    %cst_11 = arith.constant dense<0.000000e+00> : vector<8x512xf32>
    %10 = tpu.matmul %8, %9, %cst_11 {dimension_numbers = #tpu.dot_dimension_numbers<[1], [0], [0], [1], [0, 0, 1, 1], [], []>} : vector<8x128xbf16>, vector<128x512xbf16>, vector<8x512xf32> -> vector<8x512xf32>
    %11 = arith.addf %7, %10 : vector<8x512xf32>
    %c0_12 = arith.constant 0 : index
    %c0_13 = arith.constant 0 : index
    %12 = vector.load %arg10[%c0_12, %c0_13] : memref<1x512xf32, #tpu.memory_space<vmem>>, vector<1x512xf32>
    %13 = vector.broadcast %12 : vector<1x512xf32> to vector<8x512xf32>
    %14 = arith.addf %11, %13 : vector<8x512xf32>
    %15 = vector.extract_strided_slice %14 {offsets = [0, 0], sizes = [8, 256], strides = [1, 1]} : vector<8x512xf32> to vector<8x256xf32>
    %16 = arith.negf %15 : vector<8x256xf32>
    %17 = math.exp %16 : vector<8x256xf32>
    %cst_14 = arith.constant 1.000000e+00 : f32
    %18 = vector.broadcast %cst_14 : f32 to vector<8x256xf32>
    %19 = arith.addf %18, %17 : vector<8x256xf32>
    %20 = arith.divf %18, %19 : vector<8x256xf32>
    %21 = vector.extract_strided_slice %20 {offsets = [0, 0], sizes = [8, 128], strides = [1, 1]} : vector<8x256xf32> to vector<8x128xf32>
    %22 = vector.extract_strided_slice %20 {offsets = [0, 128], sizes = [8, 128], strides = [1, 1]} : vector<8x256xf32> to vector<8x128xf32>
    %23 = vector.extract_strided_slice %14 {offsets = [0, 256], sizes = [8, 128], strides = [1, 1]} : vector<8x512xf32> to vector<8x128xf32>
    %24 = math.tanh %23 : vector<8x128xf32>
    %25 = vector.extract_strided_slice %14 {offsets = [0, 384], sizes = [8, 128], strides = [1, 1]} : vector<8x512xf32> to vector<8x128xf32>
    %26 = arith.negf %25 : vector<8x128xf32>
    %27 = math.exp %26 : vector<8x128xf32>
    %cst_15 = arith.constant 1.000000e+00 : f32
    %28 = vector.broadcast %cst_15 : f32 to vector<8x128xf32>
    %29 = arith.addf %28, %27 : vector<8x128xf32>
    %30 = arith.divf %28, %29 : vector<8x128xf32>
    %31 = arith.mulf %22, %4 : vector<8x128xf32>
    %32 = arith.mulf %21, %24 : vector<8x128xf32>
    %33 = arith.addf %31, %32 : vector<8x128xf32>
    %34 = math.tanh %33 : vector<8x128xf32>
    %35 = arith.mulf %30, %34 : vector<8x128xf32>
    %c0_16 = arith.constant 0 : index
    %c0_17 = arith.constant 0 : index
    %c0_18 = arith.constant 0 : index
    %36 = vector.load %arg15[%c0_16, %c0_17, %c0_18] : memref<2x8x128xf32, #tpu.memory_space<vmem>>, vector<1x8x128xf32>
    %37 = vector.shape_cast %36 : vector<1x8x128xf32> to vector<8x128xf32>
    %38 = vector.shape_cast %35 : vector<8x128xf32> to vector<1x8x128xf32>
    tpu.vector_store %arg15[%c0_16, %c0_17, %c0_18], %38 {strides = array<i32>} : memref<2x8x128xf32, #tpu.memory_space<vmem>>, vector<1x8x128xf32>,
    %c0_19 = arith.constant 0 : index
    %c0_20 = arith.constant 0 : index
    %c0_21 = arith.constant 0 : index
    %39 = vector.load %arg16[%c0_19, %c0_20, %c0_21] : memref<2x8x128xf32, #tpu.memory_space<vmem>>, vector<1x8x128xf32>
    %40 = vector.shape_cast %39 : vector<1x8x128xf32> to vector<8x128xf32>
    %41 = vector.shape_cast %33 : vector<8x128xf32> to vector<1x8x128xf32>
    tpu.vector_store %arg16[%c0_19, %c0_20, %c0_21], %41 {strides = array<i32>} : memref<2x8x128xf32, #tpu.memory_space<vmem>>, vector<1x8x128xf32>,
    %c1 = arith.constant 1 : index
    %c0_22 = arith.constant 0 : index
    %c0_23 = arith.constant 0 : index
    %42 = vector.load %arg2[%c1, %c0_22, %c0_23] : memref<2x8x128xf32, #tpu.memory_space<vmem>>, vector<1x8x128xf32>
    %43 = vector.shape_cast %42 : vector<1x8x128xf32> to vector<8x128xf32>
    %c1_24 = arith.constant 1 : index
    %c0_25 = arith.constant 0 : index
    %c0_26 = arith.constant 0 : index
    %44 = vector.load %arg3[%c1_24, %c0_25, %c0_26] : memref<2x8x128xf32, #tpu.memory_space<vmem>>, vector<1x8x128xf32>
    %45 = vector.shape_cast %44 : vector<1x8x128xf32> to vector<8x128xf32>
    %46 = arith.truncf %35 : vector<8x128xf32> to vector<8x128xbf16>
    %c0_27 = arith.constant 0 : index
    %c0_28 = arith.constant 0 : index
    %47 = vector.load %arg7[%c0_27, %c0_28] : memref<128x512xbf16, #tpu.memory_space<vmem>>, vector<128x512xbf16>
    %cst_29 = arith.constant dense<0.000000e+00> : vector<8x512xf32>
    %48 = tpu.matmul %46, %47, %cst_29 {dimension_numbers = #tpu.dot_dimension_numbers<[1], [0], [0], [1], [0, 0, 1, 1], [], []>} : vector<8x128xbf16>, vector<128x512xbf16>, vector<8x512xf32> -> vector<8x512xf32>
    %49 = arith.truncf %43 : vector<8x128xf32> to vector<8x128xbf16>
    %c0_30 = arith.constant 0 : index
    %c0_31 = arith.constant 0 : index
    %50 = vector.load %arg9[%c0_30, %c0_31] : memref<128x512xbf16, #tpu.memory_space<vmem>>, vector<128x512xbf16>
    %cst_32 = arith.constant dense<0.000000e+00> : vector<8x512xf32>
    %51 = tpu.matmul %49, %50, %cst_32 {dimension_numbers = #tpu.dot_dimension_numbers<[1], [0], [0], [1], [0, 0, 1, 1], [], []>} : vector<8x128xbf16>, vector<128x512xbf16>, vector<8x512xf32> -> vector<8x512xf32>
    %52 = arith.addf %48, %51 : vector<8x512xf32>
    %c0_33 = arith.constant 0 : index
    %c0_34 = arith.constant 0 : index
    %53 = vector.load %arg11[%c0_33, %c0_34] : memref<1x512xf32, #tpu.memory_space<vmem>>, vector<1x512xf32>
    %54 = vector.broadcast %53 : vector<1x512xf32> to vector<8x512xf32>
    %55 = arith.addf %52, %54 : vector<8x512xf32>
    %56 = vector.extract_strided_slice %55 {offsets = [0, 0], sizes = [8, 256], strides = [1, 1]} : vector<8x512xf32> to vector<8x256xf32>
    %57 = arith.negf %56 : vector<8x256xf32>
    %58 = math.exp %57 : vector<8x256xf32>
    %cst_35 = arith.constant 1.000000e+00 : f32
    %59 = vector.broadcast %cst_35 : f32 to vector<8x256xf32>
    %60 = arith.addf %59, %58 : vector<8x256xf32>
    %61 = arith.divf %59, %60 : vector<8x256xf32>
    %62 = vector.extract_strided_slice %61 {offsets = [0, 0], sizes = [8, 128], strides = [1, 1]} : vector<8x256xf32> to vector<8x128xf32>
    %63 = vector.extract_strided_slice %61 {offsets = [0, 128], sizes = [8, 128], strides = [1, 1]} : vector<8x256xf32> to vector<8x128xf32>
    %64 = vector.extract_strided_slice %55 {offsets = [0, 256], sizes = [8, 128], strides = [1, 1]} : vector<8x512xf32> to vector<8x128xf32>
    %65 = math.tanh %64 : vector<8x128xf32>
    %66 = vector.extract_strided_slice %55 {offsets = [0, 384], sizes = [8, 128], strides = [1, 1]} : vector<8x512xf32> to vector<8x128xf32>
    %67 = arith.negf %66 : vector<8x128xf32>
    %68 = math.exp %67 : vector<8x128xf32>
    %cst_36 = arith.constant 1.000000e+00 : f32
    %69 = vector.broadcast %cst_36 : f32 to vector<8x128xf32>
    %70 = arith.addf %69, %68 : vector<8x128xf32>
    %71 = arith.divf %69, %70 : vector<8x128xf32>
    %72 = arith.mulf %63, %45 : vector<8x128xf32>
    %73 = arith.mulf %62, %65 : vector<8x128xf32>
    %74 = arith.addf %72, %73 : vector<8x128xf32>
    %75 = math.tanh %74 : vector<8x128xf32>
    %76 = arith.mulf %71, %75 : vector<8x128xf32>
    %c1_37 = arith.constant 1 : index
    %c0_38 = arith.constant 0 : index
    %c0_39 = arith.constant 0 : index
    %77 = vector.load %arg15[%c1_37, %c0_38, %c0_39] : memref<2x8x128xf32, #tpu.memory_space<vmem>>, vector<1x8x128xf32>
    %78 = vector.shape_cast %77 : vector<1x8x128xf32> to vector<8x128xf32>
    %79 = vector.shape_cast %76 : vector<8x128xf32> to vector<1x8x128xf32>
    tpu.vector_store %arg15[%c1_37, %c0_38, %c0_39], %79 {strides = array<i32>} : memref<2x8x128xf32, #tpu.memory_space<vmem>>, vector<1x8x128xf32>,
    %c1_40 = arith.constant 1 : index
    %c0_41 = arith.constant 0 : index
    %c0_42 = arith.constant 0 : index
    %80 = vector.load %arg16[%c1_40, %c0_41, %c0_42] : memref<2x8x128xf32, #tpu.memory_space<vmem>>, vector<1x8x128xf32>
    %81 = vector.shape_cast %80 : vector<1x8x128xf32> to vector<8x128xf32>
    %82 = vector.shape_cast %74 : vector<8x128xf32> to vector<1x8x128xf32>
    tpu.vector_store %arg16[%c1_40, %c0_41, %c0_42], %82 {strides = array<i32>} : memref<2x8x128xf32, #tpu.memory_space<vmem>>, vector<1x8x128xf32>,
    %c0_43 = arith.constant 0 : index
    %c0_44 = arith.constant 0 : index
    %c0_45 = arith.constant 0 : index
    %83 = vector.load %arg4[%c0_43, %c0_44, %c0_45] : memref<8x8x128xbf16, #tpu.memory_space<vmem>>, vector<8x8x128xbf16>
    %84 = arith.extf %83 : vector<8x8x128xbf16> to vector<8x8x128xf32>
    %85 = vector.shape_cast %76 : vector<8x128xf32> to vector<8x1x128xf32>
    %86 = vector.broadcast %85 : vector<8x1x128xf32> to vector<8x8x128xf32>
    %87 = arith.mulf %84, %86 : vector<8x8x128xf32>
    %cst_46 = arith.constant dense<0.000000e+00> : vector<8x8xf32>
    %88 = vector.multi_reduction <add>, %87, %cst_46 [2] : vector<8x8x128xf32> to vector<8x8xf32>
    %c0_47 = arith.constant 0 : index
    %c0_48 = arith.constant 0 : index
    %89 = vector.load %arg5[%c0_47, %c0_48] : memref<8x8xf32, #tpu.memory_space<vmem>>, vector<8x8xf32>
    %cst_49 = arith.constant 5.000000e-01 : f32
    %90 = vector.broadcast %cst_49 : f32 to vector<8x8xf32>
    %91 = arith.cmpf ogt, %89, %90 : vector<8x8xf32>
    %cst_50 = arith.constant -1.000000e+30 : f32
    %92 = vector.broadcast %cst_50 : f32 to vector<8x8xf32>
    %93 = arith.select %91, %88, %92 : vector<8x8xi1>, vector<8x8xf32>
    %cst_51 = arith.constant dense<0xFF800000> : vector<8xf32>
    %94 = vector.multi_reduction <maximumf>, %93, %cst_51 [1] : vector<8x8xf32> to vector<8xf32>
    %95 = vector.shape_cast %94 : vector<8xf32> to vector<8x1xf32>
    %96 = vector.broadcast %95 : vector<8x1xf32> to vector<8x8xf32>
    %97 = arith.subf %93, %96 : vector<8x8xf32>
    %98 = math.exp %97 : vector<8x8xf32>
    %cst_52 = arith.constant dense<0.000000e+00> : vector<8xf32>
    %99 = vector.multi_reduction <add>, %98, %cst_52 [1] : vector<8x8xf32> to vector<8xf32>
    %100 = vector.shape_cast %99 : vector<8xf32> to vector<8x1xf32>
    %101 = tpu.reciprocal %100 : vector<8x1xf32> -> vector<8x1xf32>
    %102 = vector.broadcast %101 : vector<8x1xf32> to vector<8x8xf32>
    %103 = arith.mulf %98, %102 : vector<8x8xf32>
    %c0_53 = arith.constant 0 : index
    %c0_54 = arith.constant 0 : index
    %104 = vector.load %arg17[%c0_53, %c0_54] : memref<8x8xf32, #tpu.memory_space<vmem>>, vector<8x8xf32>
    tpu.vector_store %arg17[%c0_53, %c0_54], %103 {strides = array<i32>} : memref<8x8xf32, #tpu.memory_space<vmem>>, vector<8x8xf32>,
    %105 = vector.shape_cast %103 : vector<8x8xf32> to vector<8x8x1xf32>
    %106 = vector.broadcast %105 : vector<8x8x1xf32> to vector<8x8x128xf32>
    %107 = arith.mulf %106, %84 : vector<8x8x128xf32>
    %cst_55 = arith.constant dense<0.000000e+00> : vector<8x128xf32>
    %108 = vector.multi_reduction <add>, %107, %cst_55 [1] : vector<8x8x128xf32> to vector<8x128xf32>
    %109 = arith.truncf %108 : vector<8x128xf32> to vector<8x128xbf16>
    %c0_56 = arith.constant 0 : index
    %c0_57 = arith.constant 0 : index
    %110 = vector.load %arg12[%c0_56, %c0_57] : memref<128x128xbf16, #tpu.memory_space<vmem>>, vector<128x128xbf16>
    %cst_58 = arith.constant dense<0.000000e+00> : vector<8x128xf32>
    %111 = tpu.matmul %109, %110, %cst_58 {dimension_numbers = #tpu.dot_dimension_numbers<[1], [0], [0], [1], [0, 0, 1, 1], [], []>} : vector<8x128xbf16>, vector<128x128xbf16>, vector<8x128xf32> -> vector<8x128xf32>
    %112 = arith.truncf %76 : vector<8x128xf32> to vector<8x128xbf16>
    %c0_59 = arith.constant 0 : index
    %c0_60 = arith.constant 0 : index
    %113 = vector.load %arg13[%c0_59, %c0_60] : memref<128x128xbf16, #tpu.memory_space<vmem>>, vector<128x128xbf16>
    %cst_61 = arith.constant dense<0.000000e+00> : vector<8x128xf32>
    %114 = tpu.matmul %112, %113, %cst_61 {dimension_numbers = #tpu.dot_dimension_numbers<[1], [0], [0], [1], [0, 0, 1, 1], [], []>} : vector<8x128xbf16>, vector<128x128xbf16>, vector<8x128xf32> -> vector<8x128xf32>
    %115 = arith.addf %111, %114 : vector<8x128xf32>
    %c0_62 = arith.constant 0 : index
    %c0_63 = arith.constant 0 : index
    %116 = vector.load %arg14[%c0_62, %c0_63] : memref<1x128xf32, #tpu.memory_space<vmem>>, vector<1x128xf32>
    %117 = vector.broadcast %116 : vector<1x128xf32> to vector<8x128xf32>
    %118 = arith.addf %115, %117 : vector<8x128xf32>
    %cst_64 = arith.constant 0.000000e+00 : f32
    %119 = vector.broadcast %cst_64 : f32 to vector<8x128xf32>
    %120 = arith.cmpf ogt, %118, %119 : vector<8x128xf32>
    %cst_65 = arith.constant 0.00999999977 : f32
    %121 = vector.broadcast %cst_65 : f32 to vector<8x128xf32>
    %122 = arith.mulf %121, %118 : vector<8x128xf32>
    %123 = arith.select %120, %118, %122 : vector<8x128xi1>, vector<8x128xf32>
    %124 = arith.truncf %123 : vector<8x128xf32> to vector<8x128xbf16>
    %c0_66 = arith.constant 0 : index
    %c0_67 = arith.constant 0 : index
    %125 = vector.load %arg18[%c0_66, %c0_67] : memref<8x128xbf16, #tpu.memory_space<vmem>>, vector<8x128xbf16>
    tpu.vector_store %arg18[%c0_66, %c0_67], %124 {strides = array<i32>} : memref<8x128xbf16, #tpu.memory_space<vmem>>, vector<8x128xbf16>,
    return
  }
  func.func @transform_0(%arg0: i32) -> (i32, i32) {
    %c0_i32 = arith.constant 0 : i32
    %c0_i32_0 = arith.constant 0 : i32
    %c0_i32_1 = arith.constant 0 : i32
    return %c0_i32, %c0_i32_0 : i32, i32
  }
  func.func @transform_1(%arg0: i32) -> (i32, i32, i32) {
    %c0_i32 = arith.constant 0 : i32
    %c0_i32_0 = arith.constant 0 : i32
    %c0_i32_1 = arith.constant 0 : i32
    %c0_i32_2 = arith.constant 0 : i32
    return %c0_i32, %c0_i32_0, %c0_i32_1 : i32, i32, i32
  }
  func.func @transform_2(%arg0: i32) -> (i32, i32, i32) {
    %c0_i32 = arith.constant 0 : i32
    %c0_i32_0 = arith.constant 0 : i32
    %c0_i32_1 = arith.constant 0 : i32
    %c0_i32_2 = arith.constant 0 : i32
    return %c0_i32, %c0_i32_0, %c0_i32_1 : i32, i32, i32
  }
  func.func @transform_3(%arg0: i32) -> (i32, i32, i32) {
    %c0_i32 = arith.constant 0 : i32
    %c0_i32_0 = arith.constant 0 : i32
    %c0_i32_1 = arith.constant 0 : i32
    %c0_i32_2 = arith.constant 0 : i32
    return %c0_i32, %c0_i32_0, %c0_i32_1 : i32, i32, i32
  }
  func.func @transform_4(%arg0: i32) -> (i32, i32) {
    %c0_i32 = arith.constant 0 : i32
    %c0_i32_0 = arith.constant 0 : i32
    %c0_i32_1 = arith.constant 0 : i32
    return %c0_i32, %c0_i32_0 : i32, i32
  }
  func.func @transform_5(%arg0: i32) -> (i32, i32) {
    %c0_i32 = arith.constant 0 : i32
    %c0_i32_0 = arith.constant 0 : i32
    %c0_i32_1 = arith.constant 0 : i32
    return %c0_i32, %c0_i32_0 : i32, i32
  }
  func.func @transform_6(%arg0: i32) -> (i32, i32) {
    %c0_i32 = arith.constant 0 : i32
    %c0_i32_0 = arith.constant 0 : i32
    %c0_i32_1 = arith.constant 0 : i32
    return %c0_i32, %c0_i32_0 : i32, i32
  }
  func.func @transform_7(%arg0: i32) -> (i32, i32) {
    %c0_i32 = arith.constant 0 : i32
    %c0_i32_0 = arith.constant 0 : i32
    %c0_i32_1 = arith.constant 0 : i32
    return %c0_i32, %c0_i32_0 : i32, i32
  }
  func.func @transform_8(%arg0: i32) -> (i32, i32) {
    %c0_i32 = arith.constant 0 : i32
    %c0_i32_0 = arith.constant 0 : i32
    %c0_i32_1 = arith.constant 0 : i32
    return %c0_i32, %c0_i32_0 : i32, i32
  }
  func.func @transform_9(%arg0: i32) -> (i32, i32) {
    %c0_i32 = arith.constant 0 : i32
    %c0_i32_0 = arith.constant 0 : i32
    %c0_i32_1 = arith.constant 0 : i32
    return %c0_i32, %c0_i32_0 : i32, i32
  }
  func.func @transform_10(%arg0: i32) -> (i32, i32) {
    %c0_i32 = arith.constant 0 : i32
    %c0_i32_0 = arith.constant 0 : i32
    %c0_i32_1 = arith.constant 0 : i32
    return %c0_i32, %c0_i32_0 : i32, i32
  }
  func.func @transform_11(%arg0: i32) -> (i32, i32) {
    %c0_i32 = arith.constant 0 : i32
    %c0_i32_0 = arith.constant 0 : i32
    %c0_i32_1 = arith.constant 0 : i32
    return %c0_i32, %c0_i32_0 : i32, i32
  }
  func.func @transform_12(%arg0: i32) -> (i32, i32) {
    %c0_i32 = arith.constant 0 : i32
    %c0_i32_0 = arith.constant 0 : i32
    %c0_i32_1 = arith.constant 0 : i32
    return %c0_i32, %c0_i32_0 : i32, i32
  }
  func.func @transform_13(%arg0: i32) -> (i32, i32) {
    %c0_i32 = arith.constant 0 : i32
    %c0_i32_0 = arith.constant 0 : i32
    %c0_i32_1 = arith.constant 0 : i32
    return %c0_i32, %c0_i32_0 : i32, i32
  }
  func.func @transform_14(%arg0: i32) -> (i32, i32, i32) {
    %c0_i32 = arith.constant 0 : i32
    %c0_i32_0 = arith.constant 0 : i32
    %c0_i32_1 = arith.constant 0 : i32
    %c0_i32_2 = arith.constant 0 : i32
    return %c0_i32, %c0_i32_0, %c0_i32_1 : i32, i32, i32
  }
  func.func @transform_15(%arg0: i32) -> (i32, i32, i32) {
    %c0_i32 = arith.constant 0 : i32
    %c0_i32_0 = arith.constant 0 : i32
    %c0_i32_1 = arith.constant 0 : i32
    %c0_i32_2 = arith.constant 0 : i32
    return %c0_i32, %c0_i32_0, %c0_i32_1 : i32, i32, i32
  }
  func.func @transform_16(%arg0: i32) -> (i32, i32) {
    %c0_i32 = arith.constant 0 : i32
    %c0_i32_0 = arith.constant 0 : i32
    %c0_i32_1 = arith.constant 0 : i32
    return %c0_i32, %c0_i32_0 : i32, i32
  }
  func.func @transform_17(%arg0: i32) -> (i32, i32) {
    %c0_i32 = arith.constant 0 : i32
    %c0_i32_0 = arith.constant 0 : i32
    %c0_i32_1 = arith.constant 0 : i32
    return %c0_i32, %c0_i32_0 : i32, i32
  }
}

</mosaic_0001>

<llo_original>
// kernel: luong_decoder_step.3
$region0: #{luong_decoder_step.3}
  #allocation0 [shape = 'u32[]', space=smem, size = 0x4, offset = 0x4, fixed_abs, tag = 'smem constant byte address 0x4 - core index']
  #allocation1 [shape = 'u32[144,128]{1,0:T(1,128)}', space=vmem, size = 0x12000, scoped, tag = 'internal scratch']
  %s0 = inlined_call_operand.vmem [shape: bf16[8,128], index: 0, kind: input, shape index: {}]
  %s1 = inlined_call_operand.hbm [shape: bf16[128,4096], index: 1, kind: input, shape index: {}]
  %s2 = inlined_call_operand.hbm [shape: f32[1,4096], index: 2, kind: input, shape index: {}]
  %s3 = inlined_call_operand.vmem [shape: f32[8,4096], index: 3, kind: output, shape index: {}]
  %s4 = sld [smem:[#allocation0]]
  $region53: #{luong_decoder_step.3} parent=0
    _
  %s6 = ssub.s32 1, %s4
  %s7 = scalar_select 0, %s6, %s4
  $region1: #{luong_decoder_step.3} parent=0
    #allocation2 [shape = 'u8[1048576]{0}', space=vmem, size = 0x100000, scoped, tag = 'input window, operand 1']
    #allocation3 [shape = 's32[2]{0}', space=sflag, size = 0x8, scoped, tag = 'scoped memory for luong_decoder_step.3']
    #allocation4 [shape = 'u8[16384]{0}', space=vmem, size = 0x4000, scoped, tag = 'input window, operand 2']
    #allocation5 [shape = 's32[2]{0}', space=sflag, size = 0x8, scoped, tag = 'scoped memory for luong_decoder_step.3']
    %8 = vsyncpa [#allocation3], 0
    %s9 = scalar_lea.sflag [#allocation3], 1
    %10 = vsyncpa %s9, 0
    %11 = vsyncpa [#allocation5], 0
    %s12 = scalar_lea.sflag [#allocation5], 1
    %13 = vsyncpa %s12, 0
    loop: start=0, step=1, limit=4
    $region2: #{luong_decoder_step.3} parent=1 // loop_pre_header
      _
    $region3: #{luong_decoder_step.3} parent=1 // loop_header
      %s15 = sphi 0, %s19
      %p16 = scmp.ge.s32.totalorder %s15, 4
      %s23 = sphi 0, %s23
      %s25 = sphi 0, %s23
      %s26 = sphi 0, %s25
      %s40 = sphi 0, %s26
      %s46 = sphi 0, %s48
      %s49 = sphi 0, %s46
      %s50 = sphi 0, %s49
      %s66 = sphi 0, %s50
      %s72 = sphi 0, %s74
      %s75 = sphi 0, %s72
      %s76 = sphi 0, %s75
      %s92 = sphi 0, %s76
      %s98 = sphi 0, %s100
      %s101 = sphi 0, %s98
      %s102 = sphi 0, %s101
      %s118 = sphi 0, %s102
    $region4: #{luong_decoder_step.3} parent=1 // loop_header_branch
      %18 = sbr.rel (%p16) target = $region8
    $region5: #{luong_decoder_step.3} parent=1 // loop_body
      %s20 = ssub.s32 %s15, 1
      %s21 = ssub.s32 %s15, 2
      %s22 = sadd.s32 %s15, 1
      %s24 = sadd.s32 %s23, 1
      %p27 = scmp.eq.s32.totalorder %s15, 1
      %p28 = scmp.ne.s32.totalorder %s23, %s25
      %p29 = scmp.eq.s32.totalorder %s15, 0
      %p30 = por %p28, %p29
      %p31 = scmp.ne.s32.totalorder %s23, %s25
      %p32 = scmp.eq.s32.totalorder %s20, 1
      %p33 = por %p31, %p32
      %p34 = scmp.ne.s32.totalorder %s25, %s26
      %p35 = scmp.eq.s32.totalorder %s20, 0
      %p36 = por %p34, %p35
      %p37 = scmp.ne.s32.totalorder %s25, %s26
      %p38 = scmp.eq.s32.totalorder %s21, 1
      %p39 = por %p37, %p38
      %p41 = scmp.ne.s32.totalorder %s26, %s40
      %p42 = scmp.eq.s32.totalorder %s21, 0
      %p43 = por %p41, %p42
      %s44 = ssub.s32 %s15, %s22
      %p45 = scmp.eq.s32.totalorder %s44, 0
      %s47 = sadd.s32 %s46, 1
      %s48 = scalar_select %p45, %s46, %s47
      %p51 = pneg %p45
      %p52 = scmp.eq.s32.totalorder %s15, 1
      %p53 = por %p51, %p52
      %p54 = scmp.ne.s32.totalorder %s46, %s49
      %p55 = scmp.eq.s32.totalorder %s15, 0
      %p56 = por %p54, %p55
      %p57 = scmp.ne.s32.totalorder %s46, %s49
      %p58 = scmp.eq.s32.totalorder %s20, 1
      %p59 = por %p57, %p58
      %p60 = scmp.ne.s32.totalorder %s49, %s50
      %p61 = scmp.eq.s32.totalorder %s20, 0
      %p62 = por %p60, %p61
      %p63 = scmp.ne.s32.totalorder %s49, %s50
      %p64 = scmp.eq.s32.totalorder %s21, 1
      %p65 = por %p63, %p64
      %p67 = scmp.ne.s32.totalorder %s50, %s66
      %p68 = scmp.eq.s32.totalorder %s21, 0
      %p69 = por %p67, %p68
      %s70 = ssub.s32 %s15, %s22
      %p71 = scmp.eq.s32.totalorder %s70, 0
      %s73 = sadd.s32 %s72, 1
      %s74 = scalar_select %p71, %s72, %s73
      %p77 = pneg %p71
      %p78 = scmp.eq.s32.totalorder %s15, 1
      %p79 = por %p77, %p78
      %p80 = scmp.ne.s32.totalorder %s72, %s75
      %p81 = scmp.eq.s32.totalorder %s15, 0
      %p82 = por %p80, %p81
      %p83 = scmp.ne.s32.totalorder %s72, %s75
      %p84 = scmp.eq.s32.totalorder %s20, 1
      %p85 = por %p83, %p84
      %p86 = scmp.ne.s32.totalorder %s75, %s76
      %p87 = scmp.eq.s32.totalorder %s20, 0
      %p88 = por %p86, %p87
      %p89 = scmp.ne.s32.totalorder %s75, %s76
      %p90 = scmp.eq.s32.totalorder %s21, 1
      %p91 = por %p89, %p90
      %p93 = scmp.ne.s32.totalorder %s76, %s92
      %p94 = scmp.eq.s32.totalorder %s21, 0
      %p95 = por %p93, %p94
      %s96 = ssub.s32 %s15, %s22
      %p97 = scmp.eq.s32.totalorder %s96, 0
      %s99 = sadd.s32 %s98, 1
      %s100 = scalar_select %p97, %s98, %s99
      %p103 = pneg %p97
      %p104 = scmp.eq.s32.totalorder %s15, 1
      %p105 = por %p103, %p104
      %p106 = scmp.ne.s32.totalorder %s98, %s101
      %p107 = scmp.eq.s32.totalorder %s15, 0
      %p108 = por %p106, %p107
      %p109 = scmp.ne.s32.totalorder %s98, %s101
      %p110 = scmp.eq.s32.totalorder %s20, 1
      %p111 = por %p109, %p110
      %p112 = scmp.ne.s32.totalorder %s101, %s102
      %p113 = scmp.eq.s32.totalorder %s20, 0
      %p114 = por %p112, %p113
      %p115 = scmp.ne.s32.totalorder %s101, %s102
      %p116 = scmp.eq.s32.totalorder %s21, 1
      %p117 = por %p115, %p116
      %p119 = scmp.ne.s32.totalorder %s102, %s118
      %p120 = scmp.eq.s32.totalorder %s21, 0
      %p121 = por %p119, %p120
      %p122 = scmp.le.s32.totalorder 1, %s15
      %p123 = scmp.lt.s32.totalorder %s15, 3
      %p124 = pnand %p122, %p123
      %p125 = pneg %p124
      // Predicated region
      $region9: #{luong_decoder_step.3} parent=5 // pred_check
        _
      $region10: #{luong_decoder_step.3} parent=5 // pred_check_branch
        %127 = sbr.rel (%p124) target = $region12
      $region11: #{luong_decoder_step.3} parent=5 // pred_region
        %s128 = ssub.s32 %s15, 1
        // Predicated region
        $region13: #{luong_decoder_step.3} parent=11 // pred_check
          %p129 = pneg %p36
        $region14: #{luong_decoder_step.3} parent=11 // pred_check_branch
          %131 = sbr.rel (%p129) target = $region16
        $region15: #{luong_decoder_step.3} parent=11 // pred_region
          _
        $region16: #{luong_decoder_step.3} parent=11 // pred_fallthru
          _
      $region12: #{luong_decoder_step.3} parent=5 // pred_fallthru
        _
      %p132 = scmp.lt.s32.totalorder %s15, 2
      // Predicated region
      $region17: #{luong_decoder_step.3} parent=5 // pred_check
        %p133 = pneg %p132
      $region18: #{luong_decoder_step.3} parent=5 // pred_check_branch
        %135 = sbr.rel (%p133) target = $region20
      $region19: #{luong_decoder_step.3} parent=5 // pred_region
        // Predicated region
        $region21: #{luong_decoder_step.3} parent=19 // pred_check
          %p136 = pneg %p56
        $region22: #{luong_decoder_step.3} parent=19 // pred_check_branch
          %138 = sbr.rel (%p136) target = $region24
        $region23: #{luong_decoder_step.3} parent=19 // pred_region
          %s139 = sand.u32 %s46, 1
          %s140 = scalar_lea.sflag [#allocation3], %s139
          %s141 = sand.u32 %s46, 1
          %s142 = smul.addr %s141, 1024
          %s143 = scalar_lea.vmem [#allocation2], %s142
          %s144 = smul.u32 16, %s15
          %s146 = ssub.s32 16384, 16384
          %147 = vsyncadd %s140, %s146
          %s148 = smul.addr %s144, 64
          %s149 = scalar_lea.hbm %s1, %s148
          %s150 = sshll.u32 %s143, 4
          %s151 = int_to_ptr.vmem [resolvable:$true] %s150
          %156 = dma.hbm_to_vmem [thread:$0]  %s149, 16384, %s151, %s140, 2048, 1024, 64
        $region24: #{luong_decoder_step.3} parent=19 // pred_fallthru
          _
        // Predicated region
        $region25: #{luong_decoder_step.3} parent=19 // pred_check
          %p157 = pneg %p82
        $region26: #{luong_decoder_step.3} parent=19 // pred_check_branch
          %159 = sbr.rel (%p157) target = $region28
        $region27: #{luong_decoder_step.3} parent=19 // pred_region
          %s160 = sand.u32 %s72, 1
          %s161 = scalar_lea.sflag [#allocation5], %s160
          %s162 = sand.u32 %s72, 1
          %s163 = smul.addr %s162, 16
          %s164 = scalar_lea.vmem [#allocation4], %s163
          %s165 = smul.u32 16, %s15
          %s167 = ssub.s32 256, 256
          %168 = vsyncadd %s161, %s167
          %s169 = smul.addr %s165, 16
          %s170 = scalar_lea.hbm %s2, %s169
          %s172 = sshll.u32 %s164, 4
          %s173 = int_to_ptr.vmem [resolvable:$true] %s172
          %175 = dma.hbm_to_vmem [thread:$0]  %s170, 256, %s173, %s161
        $region28: #{luong_decoder_step.3} parent=19 // pred_fallthru
          _
      $region20: #{luong_decoder_step.3} parent=5 // pred_fallthru
        _
      %p176 = scmp.le.s32.totalorder 1, %s15
      %p177 = scmp.lt.s32.totalorder %s15, 3
      %p178 = pnand %p176, %p177
      %p179 = pneg %p178
      // Predicated region
      $region29: #{luong_decoder_step.3} parent=5 // pred_check
        _
      $region30: #{luong_decoder_step.3} parent=5 // pred_check_branch
        %181 = sbr.rel (%p178) target = $region32
      $region31: #{luong_decoder_step.3} parent=5 // pred_region
        %s182 = ssub.s32 %s15, 1
        %s183 = sand.u32 %s49, 1
        %s184 = scalar_lea.sflag [#allocation3], %s183
        %s185 = sand.u32 %s49, 1
        %s186 = smul.addr %s185, 1024
        %s187 = scalar_lea.vmem [#allocation2], %s186
        // Predicated region
        $region33: #{luong_decoder_step.3} parent=31 // pred_check
          %p188 = pneg %p62
        $region34: #{luong_decoder_step.3} parent=31 // pred_check_branch
          %190 = sbr.rel (%p188) target = $region36
        $region35: #{luong_decoder_step.3} parent=31 // pred_region
          %191 = dma.done %s184, 16384
        $region36: #{luong_decoder_step.3} parent=31 // pred_fallthru
          _
        %s192 = sand.u32 %s75, 1
        %s193 = scalar_lea.sflag [#allocation5], %s192
        %s194 = sand.u32 %s75, 1
        %s195 = smul.addr %s194, 16
        %s196 = scalar_lea.vmem [#allocation4], %s195
        // Predicated region
        $region37: #{luong_decoder_step.3} parent=31 // pred_check
          %p197 = pneg %p88
        $region38: #{luong_decoder_step.3} parent=31 // pred_check_branch
          %199 = sbr.rel (%p197) target = $region40
        $region39: #{luong_decoder_step.3} parent=31 // pred_region
          %200 = dma.done %s193, 256
        $region40: #{luong_decoder_step.3} parent=31 // pred_fallthru
          _
        %p201 = pneg %p36
        %p202 = pneg %p33
        %s203 = sand.u32 %s49, 1
        %s204 = scalar_lea.sflag [#allocation3], %s203
        %s205 = sand.u32 %s49, 1
        %s206 = smul.addr %s205, 1024
        %s207 = scalar_lea.vmem [#allocation2], %s206
        %p208 = pneg %p62
        %p209 = pneg %p59
        %s210 = sand.u32 %s75, 1
        %s211 = scalar_lea.sflag [#allocation5], %s210
        %s212 = sand.u32 %s75, 1
        %s213 = smul.addr %s212, 16
        %s214 = scalar_lea.vmem [#allocation4], %s213
        %p215 = pneg %p88
        %p216 = pneg %p85
        %p217 = pneg %p114
        %p218 = pneg %p111
        %s219 = smul.u32 16, %s20
        %p220 = scmp.lt.s32.totalorder %s219, 31
        %s221 = scalar_select %p220, %s219, 31
        %s222 = smul.addr %s221, 8
        %s223 = scalar_lea.vmem %s3, %s222
        %s224 = smul.u32 16, %s20
        %s225 = smul.u32 16, %s20
        %s226 = smul.u32 16, %s20
        %p227 = scmp.lt.s32.totalorder %s226, 31
        %s228 = scalar_select %p227, %s226, 31
        %s229 = smul.addr %s228, 8
        %s230 = scalar_lea.vmem %s3, %s229
        %s231 = smul.u32 16, %s20
        %v233 = vld [vmem:[%s0] sm:$0xf]
        %v234 = vld [vmem:[%s187] sm:$0xff]
        %v235 = vld [vmem:[%s187 + $0x8] sm:$0xff]
        %v236 = vld [vmem:[%s187 + $0x10] sm:$0xff]
        %v237 = vld [vmem:[%s187 + $0x18] sm:$0xff]
        %v238 = vld [vmem:[%s187 + $0x20] sm:$0xff]
        %v239 = vld [vmem:[%s187 + $0x28] sm:$0xff]
        %v240 = vld [vmem:[%s187 + $0x30] sm:$0xff]
        %v241 = vld [vmem:[%s187 + $0x38] sm:$0xff]
        %v242 = vld [vmem:[%s187 + $0x40] sm:$0xff]
        %v243 = vld [vmem:[%s187 + $0x48] sm:$0xff]
        %v244 = vld [vmem:[%s187 + $0x50] sm:$0xff]
        %v245 = vld [vmem:[%s187 + $0x58] sm:$0xff]
        %v246 = vld [vmem:[%s187 + $0x60] sm:$0xff]
        %v247 = vld [vmem:[%s187 + $0x68] sm:$0xff]
        %v248 = vld [vmem:[%s187 + $0x70] sm:$0xff]
        %v249 = vld [vmem:[%s187 + $0x78] sm:$0xff]
        %v250 = vld [vmem:[%s187 + $0x80] sm:$0xff]
        %v251 = vld [vmem:[%s187 + $0x88] sm:$0xff]
        %v252 = vld [vmem:[%s187 + $0x90] sm:$0xff]
        %v253 = vld [vmem:[%s187 + $0x98] sm:$0xff]
        %v254 = vld [vmem:[%s187 + $0xa0] sm:$0xff]
        %v255 = vld [vmem:[%s187 + $0xa8] sm:$0xff]
        %v256 = vld [vmem:[%s187 + $0xb0] sm:$0xff]
        %v257 = vld [vmem:[%s187 + $0xb8] sm:$0xff]
        %v258 = vld [vmem:[%s187 + $0xc0] sm:$0xff]
        %v259 = vld [vmem:[%s187 + $0xc8] sm:$0xff]
        %v260 = vld [vmem:[%s187 + $0xd0] sm:$0xff]
        %v261 = vld [vmem:[%s187 + $0xd8] sm:$0xff]
        %v262 = vld [vmem:[%s187 + $0xe0] sm:$0xff]
        %v263 = vld [vmem:[%s187 + $0xe8] sm:$0xff]
        %v264 = vld [vmem:[%s187 + $0xf0] sm:$0xff]
        %v265 = vld [vmem:[%s187 + $0xf8] sm:$0xff]
        %v266 = vld [vmem:[%s187 + $0x100] sm:$0xff]
        %v267 = vld [vmem:[%s187 + $0x108] sm:$0xff]
        %v268 = vld [vmem:[%s187 + $0x110] sm:$0xff]
        %v269 = vld [vmem:[%s187 + $0x118] sm:$0xff]
        %v270 = vld [vmem:[%s187 + $0x120] sm:$0xff]
        %v271 = vld [vmem:[%s187 + $0x128] sm:$0xff]
        %v272 = vld [vmem:[%s187 + $0x130] sm:$0xff]
        %v273 = vld [vmem:[%s187 + $0x138] sm:$0xff]
        %v274 = vld [vmem:[%s187 + $0x140] sm:$0xff]
        %v275 = vld [vmem:[%s187 + $0x148] sm:$0xff]
        %v276 = vld [vmem:[%s187 + $0x150] sm:$0xff]
        %v277 = vld [vmem:[%s187 + $0x158] sm:$0xff]
        %v278 = vld [vmem:[%s187 + $0x160] sm:$0xff]
        %v279 = vld [vmem:[%s187 + $0x168] sm:$0xff]
        %v280 = vld [vmem:[%s187 + $0x170] sm:$0xff]
        %v281 = vld [vmem:[%s187 + $0x178] sm:$0xff]
        %v282 = vld [vmem:[%s187 + $0x180] sm:$0xff]
        %v283 = vld [vmem:[%s187 + $0x188] sm:$0xff]
        %v284 = vld [vmem:[%s187 + $0x190] sm:$0xff]
        %v285 = vld [vmem:[%s187 + $0x198] sm:$0xff]
        %v286 = vld [vmem:[%s187 + $0x1a0] sm:$0xff]
        %v287 = vld [vmem:[%s187 + $0x1a8] sm:$0xff]
        %v288 = vld [vmem:[%s187 + $0x1b0] sm:$0xff]
        %v289 = vld [vmem:[%s187 + $0x1b8] sm:$0xff]
        %v290 = vld [vmem:[%s187 + $0x1c0] sm:$0xff]
        %v291 = vld [vmem:[%s187 + $0x1c8] sm:$0xff]
        %v292 = vld [vmem:[%s187 + $0x1d0] sm:$0xff]
        %v293 = vld [vmem:[%s187 + $0x1d8] sm:$0xff]
        %v294 = vld [vmem:[%s187 + $0x1e0] sm:$0xff]
        %v295 = vld [vmem:[%s187 + $0x1e8] sm:$0xff]
        %v296 = vld [vmem:[%s187 + $0x1f0] sm:$0xff]
        %v297 = vld [vmem:[%s187 + $0x1f8] sm:$0xff]
        %v298 = vld [vmem:[%s187 + $0x200] sm:$0xff]
        %v299 = vld [vmem:[%s187 + $0x208] sm:$0xff]
        %v300 = vld [vmem:[%s187 + $0x210] sm:$0xff]
        %v301 = vld [vmem:[%s187 + $0x218] sm:$0xff]
        %v302 = vld [vmem:[%s187 + $0x220] sm:$0xff]
        %v303 = vld [vmem:[%s187 + $0x228] sm:$0xff]
        %v304 = vld [vmem:[%s187 + $0x230] sm:$0xff]
        %v305 = vld [vmem:[%s187 + $0x238] sm:$0xff]
        %v306 = vld [vmem:[%s187 + $0x240] sm:$0xff]
        %v307 = vld [vmem:[%s187 + $0x248] sm:$0xff]
        %v308 = vld [vmem:[%s187 + $0x250] sm:$0xff]
        %v309 = vld [vmem:[%s187 + $0x258] sm:$0xff]
        %v310 = vld [vmem:[%s187 + $0x260] sm:$0xff]
        %v311 = vld [vmem:[%s187 + $0x268] sm:$0xff]
        %v312 = vld [vmem:[%s187 + $0x270] sm:$0xff]
        %v313 = vld [vmem:[%s187 + $0x278] sm:$0xff]
        %v314 = vld [vmem:[%s187 + $0x280] sm:$0xff]
        %v315 = vld [vmem:[%s187 + $0x288] sm:$0xff]
        %v316 = vld [vmem:[%s187 + $0x290] sm:$0xff]
        %v317 = vld [vmem:[%s187 + $0x298] sm:$0xff]
        %v318 = vld [vmem:[%s187 + $0x2a0] sm:$0xff]
        %v319 = vld [vmem:[%s187 + $0x2a8] sm:$0xff]
        %v320 = vld [vmem:[%s187 + $0x2b0] sm:$0xff]
        %v321 = vld [vmem:[%s187 + $0x2b8] sm:$0xff]
        %v322 = vld [vmem:[%s187 + $0x2c0] sm:$0xff]
        %v323 = vld [vmem:[%s187 + $0x2c8] sm:$0xff]
        %v324 = vld [vmem:[%s187 + $0x2d0] sm:$0xff]
        %v325 = vld [vmem:[%s187 + $0x2d8] sm:$0xff]
        %v326 = vld [vmem:[%s187 + $0x2e0] sm:$0xff]
        %v327 = vld [vmem:[%s187 + $0x2e8] sm:$0xff]
        %v328 = vld [vmem:[%s187 + $0x2f0] sm:$0xff]
        %v329 = vld [vmem:[%s187 + $0x2f8] sm:$0xff]
        %v330 = vld [vmem:[%s187 + $0x300] sm:$0xff]
        %v331 = vld [vmem:[%s187 + $0x308] sm:$0xff]
        %v332 = vld [vmem:[%s187 + $0x310] sm:$0xff]
        %v333 = vld [vmem:[%s187 + $0x318] sm:$0xff]
        %v334 = vld [vmem:[%s187 + $0x320] sm:$0xff]
        %v335 = vld [vmem:[%s187 + $0x328] sm:$0xff]
        %v336 = vld [vmem:[%s187 + $0x330] sm:$0xff]
        %v337 = vld [vmem:[%s187 + $0x338] sm:$0xff]
        %v338 = vld [vmem:[%s187 + $0x340] sm:$0xff]
        %v339 = vld [vmem:[%s187 + $0x348] sm:$0xff]
        %v340 = vld [vmem:[%s187 + $0x350] sm:$0xff]
        %v341 = vld [vmem:[%s187 + $0x358] sm:$0xff]
        %v342 = vld [vmem:[%s187 + $0x360] sm:$0xff]
        %v343 = vld [vmem:[%s187 + $0x368] sm:$0xff]
        %v344 = vld [vmem:[%s187 + $0x370] sm:$0xff]
        %v345 = vld [vmem:[%s187 + $0x378] sm:$0xff]
        %v346 = vld [vmem:[%s187 + $0x380] sm:$0xff]
        %v347 = vld [vmem:[%s187 + $0x388] sm:$0xff]
        %v348 = vld [vmem:[%s187 + $0x390] sm:$0xff]
        %v349 = vld [vmem:[%s187 + $0x398] sm:$0xff]
        %v350 = vld [vmem:[%s187 + $0x3a0] sm:$0xff]
        %v351 = vld [vmem:[%s187 + $0x3a8] sm:$0xff]
        %v352 = vld [vmem:[%s187 + $0x3b0] sm:$0xff]
        %v353 = vld [vmem:[%s187 + $0x3b8] sm:$0xff]
        %v354 = vld [vmem:[%s187 + $0x3c0] sm:$0xff]
        %v355 = vld [vmem:[%s187 + $0x3c8] sm:$0xff]
        %v356 = vld [vmem:[%s187 + $0x3d0] sm:$0xff]
        %v357 = vld [vmem:[%s187 + $0x3d8] sm:$0xff]
        %v358 = vld [vmem:[%s187 + $0x3e0] sm:$0xff]
        %v359 = vld [vmem:[%s187 + $0x3e8] sm:$0xff]
        %v360 = vld [vmem:[%s187 + $0x3f0] sm:$0xff]
        %v361 = vld [vmem:[%s187 + $0x3f8] sm:$0xff]
        %v362 = vld [vmem:[%s196] sm:$0xff]
        %v363 = vld [vmem:[%s196 + $0x8] sm:$0xff]
        %v366 = vlaneseq
        %v367 = vshrl.u32 %v366, 7
        %v368 = vsub.s32 0, %v367
        %v369 = vrot.slane %v362, %v368
        %v370 = vlaneseq
        %v371 = vshrl.u32 %v370, 7
        %v372 = vsub.s32 1, %v371
        %v373 = vrot.slane %v362, %v372
        %v374 = vlaneseq
        %v375 = vshrl.u32 %v374, 7
        %v376 = vsub.s32 2, %v375
        %v377 = vrot.slane %v362, %v376
        %v378 = vlaneseq
        %v379 = vshrl.u32 %v378, 7
        %v380 = vsub.s32 3, %v379
        %v381 = vrot.slane %v362, %v380
        %v382 = vlaneseq
        %v383 = vshrl.u32 %v382, 7
        %v384 = vsub.s32 4, %v383
        %v385 = vrot.slane %v362, %v384
        %v386 = vlaneseq
        %v387 = vshrl.u32 %v386, 7
        %v388 = vsub.s32 5, %v387
        %v389 = vrot.slane %v362, %v388
        %v390 = vlaneseq
        %v391 = vshrl.u32 %v390, 7
        %v392 = vsub.s32 6, %v391
        %v393 = vrot.slane %v362, %v392
        %v394 = vlaneseq
        %v395 = vshrl.u32 %v394, 7
        %v396 = vsub.s32 7, %v395
        %v397 = vrot.slane %v362, %v396
        %v398 = vlaneseq
        %v399 = vshrl.u32 %v398, 7
        %v400 = vsub.s32 0, %v399
        %v401 = vrot.slane %v363, %v400
        %v402 = vlaneseq
        %v403 = vshrl.u32 %v402, 7
        %v404 = vsub.s32 1, %v403
        %v405 = vrot.slane %v363, %v404
        %v406 = vlaneseq
        %v407 = vshrl.u32 %v406, 7
        %v408 = vsub.s32 2, %v407
        %v409 = vrot.slane %v363, %v408
        %v410 = vlaneseq
        %v411 = vshrl.u32 %v410, 7
        %v412 = vsub.s32 3, %v411
        %v413 = vrot.slane %v363, %v412
        %v414 = vlaneseq
        %v415 = vshrl.u32 %v414, 7
        %v416 = vsub.s32 4, %v415
        %v417 = vrot.slane %v363, %v416
        %v418 = vlaneseq
        %v419 = vshrl.u32 %v418, 7
        %v420 = vsub.s32 5, %v419
        %v421 = vrot.slane %v363, %v420
        %v422 = vlaneseq
        %v423 = vshrl.u32 %v422, 7
        %v424 = vsub.s32 6, %v423
        %v425 = vrot.slane %v363, %v424
        %v426 = vlaneseq
        %v427 = vshrl.u32 %v426, 7
        %v428 = vsub.s32 7, %v427
        %v429 = vrot.slane %v363, %v428
        %v574 = vunpack.c.l.b16 %v234
        %v575 = vunpack.c.h.b16 %v234
        %v576 = vunpack.c.l.b16 %v235
        %v577 = vunpack.c.h.b16 %v235
        %v578 = vunpack.c.l.b16 %v236
        %v579 = vunpack.c.h.b16 %v236
        %v580 = vunpack.c.l.b16 %v237
        %v581 = vunpack.c.h.b16 %v237
        %v582 = vunpack.c.l.b16 %v238
        %v583 = vunpack.c.h.b16 %v238
        %v584 = vunpack.c.l.b16 %v239
        %v585 = vunpack.c.h.b16 %v239
        %v586 = vunpack.c.l.b16 %v240
        %v587 = vunpack.c.h.b16 %v240
        %v588 = vunpack.c.l.b16 %v241
        %v589 = vunpack.c.h.b16 %v241
        %v590 = vunpack.c.l.b16 %v242
        %v591 = vunpack.c.h.b16 %v242
        %v592 = vunpack.c.l.b16 %v243
        %v593 = vunpack.c.h.b16 %v243
        %v594 = vunpack.c.l.b16 %v244
        %v595 = vunpack.c.h.b16 %v244
        %v596 = vunpack.c.l.b16 %v245
        %v597 = vunpack.c.h.b16 %v245
        %v598 = vunpack.c.l.b16 %v246
        %v599 = vunpack.c.h.b16 %v246
        %v600 = vunpack.c.l.b16 %v247
        %v601 = vunpack.c.h.b16 %v247
        %v602 = vunpack.c.l.b16 %v248
        %v603 = vunpack.c.h.b16 %v248
        %v604 = vunpack.c.l.b16 %v249
        %v605 = vunpack.c.h.b16 %v249
        %v606 = vunpack.c.l.b16 %v250
        %v607 = vunpack.c.h.b16 %v250
        %v608 = vunpack.c.l.b16 %v251
        %v609 = vunpack.c.h.b16 %v251
        %v610 = vunpack.c.l.b16 %v252
        %v611 = vunpack.c.h.b16 %v252
        %v612 = vunpack.c.l.b16 %v253
        %v613 = vunpack.c.h.b16 %v253
        %v614 = vunpack.c.l.b16 %v254
        %v615 = vunpack.c.h.b16 %v254
        %v616 = vunpack.c.l.b16 %v255
        %v617 = vunpack.c.h.b16 %v255
        %v618 = vunpack.c.l.b16 %v256
        %v619 = vunpack.c.h.b16 %v256
        %v620 = vunpack.c.l.b16 %v257
        %v621 = vunpack.c.h.b16 %v257
        %v622 = vunpack.c.l.b16 %v258
        %v623 = vunpack.c.h.b16 %v258
        %v624 = vunpack.c.l.b16 %v259
        %v625 = vunpack.c.h.b16 %v259
        %v626 = vunpack.c.l.b16 %v260
        %v627 = vunpack.c.h.b16 %v260
        %v628 = vunpack.c.l.b16 %v261
        %v629 = vunpack.c.h.b16 %v261
        %v630 = vunpack.c.l.b16 %v262
        %v631 = vunpack.c.h.b16 %v262
        %v632 = vunpack.c.l.b16 %v263
        %v633 = vunpack.c.h.b16 %v263
        %v634 = vunpack.c.l.b16 %v264
        %v635 = vunpack.c.h.b16 %v264
        %v636 = vunpack.c.l.b16 %v265
        %v637 = vunpack.c.h.b16 %v265
        %v638 = vunpack.c.l.b16 %v266
        %v639 = vunpack.c.h.b16 %v266
        %v640 = vunpack.c.l.b16 %v267
        %v641 = vunpack.c.h.b16 %v267
        %v642 = vunpack.c.l.b16 %v268
        %v643 = vunpack.c.h.b16 %v268
        %v644 = vunpack.c.l.b16 %v269
        %v645 = vunpack.c.h.b16 %v269
        %v646 = vunpack.c.l.b16 %v270
        %v647 = vunpack.c.h.b16 %v270
        %v648 = vunpack.c.l.b16 %v271
        %v649 = vunpack.c.h.b16 %v271
        %v650 = vunpack.c.l.b16 %v272
        %v651 = vunpack.c.h.b16 %v272
        %v652 = vunpack.c.l.b16 %v273
        %v653 = vunpack.c.h.b16 %v273
        %v654 = vunpack.c.l.b16 %v274
        %v655 = vunpack.c.h.b16 %v274
        %v656 = vunpack.c.l.b16 %v275
        %v657 = vunpack.c.h.b16 %v275
        %v658 = vunpack.c.l.b16 %v276
        %v659 = vunpack.c.h.b16 %v276
        %v660 = vunpack.c.l.b16 %v277
        %v661 = vunpack.c.h.b16 %v277
        %v662 = vunpack.c.l.b16 %v278
        %v663 = vunpack.c.h.b16 %v278
        %v664 = vunpack.c.l.b16 %v279
        %v665 = vunpack.c.h.b16 %v279
        %v666 = vunpack.c.l.b16 %v280
        %v667 = vunpack.c.h.b16 %v280
        %v668 = vunpack.c.l.b16 %v281
        %v669 = vunpack.c.h.b16 %v281
        %v670 = vunpack.c.l.b16 %v282
        %v671 = vunpack.c.h.b16 %v282
        %v672 = vunpack.c.l.b16 %v283
        %v673 = vunpack.c.h.b16 %v283
        %v674 = vunpack.c.l.b16 %v284
        %v675 = vunpack.c.h.b16 %v284
        %v676 = vunpack.c.l.b16 %v285
        %v677 = vunpack.c.h.b16 %v285
        %v678 = vunpack.c.l.b16 %v286
        %v679 = vunpack.c.h.b16 %v286
        %v680 = vunpack.c.l.b16 %v287
        %v681 = vunpack.c.h.b16 %v287
        %v682 = vunpack.c.l.b16 %v288
        %v683 = vunpack.c.h.b16 %v288
        %v684 = vunpack.c.l.b16 %v289
        %v685 = vunpack.c.h.b16 %v289
        %v686 = vunpack.c.l.b16 %v290
        %v687 = vunpack.c.h.b16 %v290
        %v688 = vunpack.c.l.b16 %v291
        %v689 = vunpack.c.h.b16 %v291
        %v690 = vunpack.c.l.b16 %v292
        %v691 = vunpack.c.h.b16 %v292
        %v692 = vunpack.c.l.b16 %v293
        %v693 = vunpack.c.h.b16 %v293
        %v694 = vunpack.c.l.b16 %v294
        %v695 = vunpack.c.h.b16 %v294
        %v696 = vunpack.c.l.b16 %v295
        %v697 = vunpack.c.h.b16 %v295
        %v698 = vunpack.c.l.b16 %v296
        %v699 = vunpack.c.h.b16 %v296
        %v700 = vunpack.c.l.b16 %v297
        %v701 = vunpack.c.h.b16 %v297
        %v702 = vunpack.c.l.b16 %v298
        %v703 = vunpack.c.h.b16 %v298
        %v704 = vunpack.c.l.b16 %v299
        %v705 = vunpack.c.h.b16 %v299
        %v706 = vunpack.c.l.b16 %v300
        %v707 = vunpack.c.h.b16 %v300
        %v708 = vunpack.c.l.b16 %v301
        %v709 = vunpack.c.h.b16 %v301
        %v710 = vunpack.c.l.b16 %v302
        %v711 = vunpack.c.h.b16 %v302
        %v712 = vunpack.c.l.b16 %v303
        %v713 = vunpack.c.h.b16 %v303
        %v714 = vunpack.c.l.b16 %v304
        %v715 = vunpack.c.h.b16 %v304
        %v716 = vunpack.c.l.b16 %v305
        %v717 = vunpack.c.h.b16 %v305
        %v718 = vunpack.c.l.b16 %v306
        %v719 = vunpack.c.h.b16 %v306
        %v720 = vunpack.c.l.b16 %v307
        %v721 = vunpack.c.h.b16 %v307
        %v722 = vunpack.c.l.b16 %v308
        %v723 = vunpack.c.h.b16 %v308
        %v724 = vunpack.c.l.b16 %v309
        %v725 = vunpack.c.h.b16 %v309
        %v726 = vunpack.c.l.b16 %v310
        %v727 = vunpack.c.h.b16 %v310
        %v728 = vunpack.c.l.b16 %v311
        %v729 = vunpack.c.h.b16 %v311
        %v730 = vunpack.c.l.b16 %v312
        %v731 = vunpack.c.h.b16 %v312
        %v732 = vunpack.c.l.b16 %v313
        %v733 = vunpack.c.h.b16 %v313
        %v734 = vunpack.c.l.b16 %v314
        %v735 = vunpack.c.h.b16 %v314
        %v736 = vunpack.c.l.b16 %v315
        %v737 = vunpack.c.h.b16 %v315
        %v738 = vunpack.c.l.b16 %v316
        %v739 = vunpack.c.h.b16 %v316
        %v740 = vunpack.c.l.b16 %v317
        %v741 = vunpack.c.h.b16 %v317
        %v742 = vunpack.c.l.b16 %v318
        %v743 = vunpack.c.h.b16 %v318
        %v744 = vunpack.c.l.b16 %v319
        %v745 = vunpack.c.h.b16 %v319
        %v746 = vunpack.c.l.b16 %v320
        %v747 = vunpack.c.h.b16 %v320
        %v748 = vunpack.c.l.b16 %v321
        %v749 = vunpack.c.h.b16 %v321
        %v750 = vunpack.c.l.b16 %v322
        %v751 = vunpack.c.h.b16 %v322
        %v752 = vunpack.c.l.b16 %v323
        %v753 = vunpack.c.h.b16 %v323
        %v754 = vunpack.c.l.b16 %v324
        %v755 = vunpack.c.h.b16 %v324
        %v756 = vunpack.c.l.b16 %v325
        %v757 = vunpack.c.h.b16 %v325
        %v758 = vunpack.c.l.b16 %v326
        %v759 = vunpack.c.h.b16 %v326
        %v760 = vunpack.c.l.b16 %v327
        %v761 = vunpack.c.h.b16 %v327
        %v762 = vunpack.c.l.b16 %v328
        %v763 = vunpack.c.h.b16 %v328
        %v764 = vunpack.c.l.b16 %v329
        %v765 = vunpack.c.h.b16 %v329
        %v766 = vunpack.c.l.b16 %v330
        %v767 = vunpack.c.h.b16 %v330
        %v768 = vunpack.c.l.b16 %v331
        %v769 = vunpack.c.h.b16 %v331
        %v770 = vunpack.c.l.b16 %v332
        %v771 = vunpack.c.h.b16 %v332
        %v772 = vunpack.c.l.b16 %v333
        %v773 = vunpack.c.h.b16 %v333
        %v774 = vunpack.c.l.b16 %v334
        %v775 = vunpack.c.h.b16 %v334
        %v776 = vunpack.c.l.b16 %v335
        %v777 = vunpack.c.h.b16 %v335
        %v778 = vunpack.c.l.b16 %v336
        %v779 = vunpack.c.h.b16 %v336
        %v780 = vunpack.c.l.b16 %v337
        %v781 = vunpack.c.h.b16 %v337
        %v782 = vunpack.c.l.b16 %v338
        %v783 = vunpack.c.h.b16 %v338
        %v784 = vunpack.c.l.b16 %v339
        %v785 = vunpack.c.h.b16 %v339
        %v786 = vunpack.c.l.b16 %v340
        %v787 = vunpack.c.h.b16 %v340
        %v788 = vunpack.c.l.b16 %v341
        %v789 = vunpack.c.h.b16 %v341
        %v790 = vunpack.c.l.b16 %v342
        %v791 = vunpack.c.h.b16 %v342
        %v792 = vunpack.c.l.b16 %v343
        %v793 = vunpack.c.h.b16 %v343
        %v794 = vunpack.c.l.b16 %v344
        %v795 = vunpack.c.h.b16 %v344
        %v796 = vunpack.c.l.b16 %v345
        %v797 = vunpack.c.h.b16 %v345
        %v798 = vunpack.c.l.b16 %v346
        %v799 = vunpack.c.h.b16 %v346
        %v800 = vunpack.c.l.b16 %v347
        %v801 = vunpack.c.h.b16 %v347
        %v802 = vunpack.c.l.b16 %v348
        %v803 = vunpack.c.h.b16 %v348
        %v804 = vunpack.c.l.b16 %v349
        %v805 = vunpack.c.h.b16 %v349
        %v806 = vunpack.c.l.b16 %v350
        %v807 = vunpack.c.h.b16 %v350
        %v808 = vunpack.c.l.b16 %v351
        %v809 = vunpack.c.h.b16 %v351
        %v810 = vunpack.c.l.b16 %v352
        %v811 = vunpack.c.h.b16 %v352
        %v812 = vunpack.c.l.b16 %v353
        %v813 = vunpack.c.h.b16 %v353
        %v814 = vunpack.c.l.b16 %v354
        %v815 = vunpack.c.h.b16 %v354
        %v816 = vunpack.c.l.b16 %v355
        %v817 = vunpack.c.h.b16 %v355
        %v818 = vunpack.c.l.b16 %v356
        %v819 = vunpack.c.h.b16 %v356
        %v820 = vunpack.c.l.b16 %v357
        %v821 = vunpack.c.h.b16 %v357
        %v822 = vunpack.c.l.b16 %v358
        %v823 = vunpack.c.h.b16 %v358
        %v824 = vunpack.c.l.b16 %v359
        %v825 = vunpack.c.h.b16 %v359
        %v826 = vunpack.c.l.b16 %v360
        %v827 = vunpack.c.h.b16 %v360
        %v828 = vunpack.c.l.b16 %v361
        %v829 = vunpack.c.h.b16 %v361
        %v830 = vpack.c.b16 %v590, %v574
        %v831 = vpack.c.b16 %v591, %v575
        %v832 = vpack.c.b16 %v592, %v576
        %v833 = vpack.c.b16 %v593, %v577
        %v834 = vpack.c.b16 %v594, %v578
        %v835 = vpack.c.b16 %v595, %v579
        %v836 = vpack.c.b16 %v596, %v580
        %v837 = vpack.c.b16 %v597, %v581
        %v838 = vpack.c.b16 %v598, %v582
        %v839 = vpack.c.b16 %v599, %v583
        %v840 = vpack.c.b16 %v600, %v584
        %v841 = vpack.c.b16 %v601, %v585
        %v842 = vpack.c.b16 %v602, %v586
        %v843 = vpack.c.b16 %v603, %v587
        %v844 = vpack.c.b16 %v604, %v588
        %v845 = vpack.c.b16 %v605, %v589
        %v846 = vpack.c.b16 %v622, %v606
        %v847 = vpack.c.b16 %v623, %v607
        %v848 = vpack.c.b16 %v624, %v608
        %v849 = vpack.c.b16 %v625, %v609
        %v850 = vpack.c.b16 %v626, %v610
        %v851 = vpack.c.b16 %v627, %v611
        %v852 = vpack.c.b16 %v628, %v612
        %v853 = vpack.c.b16 %v629, %v613
        %v854 = vpack.c.b16 %v630, %v614
        %v855 = vpack.c.b16 %v631, %v615
        %v856 = vpack.c.b16 %v632, %v616
        %v857 = vpack.c.b16 %v633, %v617
        %v858 = vpack.c.b16 %v634, %v618
        %v859 = vpack.c.b16 %v635, %v619
        %v860 = vpack.c.b16 %v636, %v620
        %v861 = vpack.c.b16 %v637, %v621
        %v862 = vpack.c.b16 %v654, %v638
        %v863 = vpack.c.b16 %v655, %v639
        %v864 = vpack.c.b16 %v656, %v640
        %v865 = vpack.c.b16 %v657, %v641
        %v866 = vpack.c.b16 %v658, %v642
        %v867 = vpack.c.b16 %v659, %v643
        %v868 = vpack.c.b16 %v660, %v644
        %v869 = vpack.c.b16 %v661, %v645
        %v870 = vpack.c.b16 %v662, %v646
        %v871 = vpack.c.b16 %v663, %v647
        %v872 = vpack.c.b16 %v664, %v648
        %v873 = vpack.c.b16 %v665, %v649
        %v874 = vpack.c.b16 %v666, %v650
        %v875 = vpack.c.b16 %v667, %v651
        %v876 = vpack.c.b16 %v668, %v652
        %v877 = vpack.c.b16 %v669, %v653
        %v878 = vpack.c.b16 %v686, %v670
        %v879 = vpack.c.b16 %v687, %v671
        %v880 = vpack.c.b16 %v688, %v672
        %v881 = vpack.c.b16 %v689, %v673
        %v882 = vpack.c.b16 %v690, %v674
        %v883 = vpack.c.b16 %v691, %v675
        %v884 = vpack.c.b16 %v692, %v676
        %v885 = vpack.c.b16 %v693, %v677
        %v886 = vpack.c.b16 %v694, %v678
        %v887 = vpack.c.b16 %v695, %v679
        %v888 = vpack.c.b16 %v696, %v680
        %v889 = vpack.c.b16 %v697, %v681
        %v890 = vpack.c.b16 %v698, %v682
        %v891 = vpack.c.b16 %v699, %v683
        %v892 = vpack.c.b16 %v700, %v684
        %v893 = vpack.c.b16 %v701, %v685
        %v894 = vpack.c.b16 %v718, %v702
        %v895 = vpack.c.b16 %v719, %v703
        %v896 = vpack.c.b16 %v720, %v704
        %v897 = vpack.c.b16 %v721, %v705
        %v898 = vpack.c.b16 %v722, %v706
        %v899 = vpack.c.b16 %v723, %v707
        %v900 = vpack.c.b16 %v724, %v708
        %v901 = vpack.c.b16 %v725, %v709
        %v902 = vpack.c.b16 %v726, %v710
        %v903 = vpack.c.b16 %v727, %v711
        %v904 = vpack.c.b16 %v728, %v712
        %v905 = vpack.c.b16 %v729, %v713
        %v906 = vpack.c.b16 %v730, %v714
        %v907 = vpack.c.b16 %v731, %v715
        %v908 = vpack.c.b16 %v732, %v716
        %v909 = vpack.c.b16 %v733, %v717
        %v910 = vpack.c.b16 %v750, %v734
        %v911 = vpack.c.b16 %v751, %v735
        %v912 = vpack.c.b16 %v752, %v736
        %v913 = vpack.c.b16 %v753, %v737
        %v914 = vpack.c.b16 %v754, %v738
        %v915 = vpack.c.b16 %v755, %v739
        %v916 = vpack.c.b16 %v756, %v740
        %v917 = vpack.c.b16 %v757, %v741
        %v918 = vpack.c.b16 %v758, %v742
        %v919 = vpack.c.b16 %v759, %v743
        %v920 = vpack.c.b16 %v760, %v744
        %v921 = vpack.c.b16 %v761, %v745
        %v922 = vpack.c.b16 %v762, %v746
        %v923 = vpack.c.b16 %v763, %v747
        %v924 = vpack.c.b16 %v764, %v748
        %v925 = vpack.c.b16 %v765, %v749
        %v926 = vpack.c.b16 %v782, %v766
        %v927 = vpack.c.b16 %v783, %v767
        %v928 = vpack.c.b16 %v784, %v768
        %v929 = vpack.c.b16 %v785, %v769
        %v930 = vpack.c.b16 %v786, %v770
        %v931 = vpack.c.b16 %v787, %v771
        %v932 = vpack.c.b16 %v788, %v772
        %v933 = vpack.c.b16 %v789, %v773
        %v934 = vpack.c.b16 %v790, %v774
        %v935 = vpack.c.b16 %v791, %v775
        %v936 = vpack.c.b16 %v792, %v776
        %v937 = vpack.c.b16 %v793, %v777
        %v938 = vpack.c.b16 %v794, %v778
        %v939 = vpack.c.b16 %v795, %v779
        %v940 = vpack.c.b16 %v796, %v780
        %v941 = vpack.c.b16 %v797, %v781
        %v942 = vpack.c.b16 %v814, %v798
        %v943 = vpack.c.b16 %v815, %v799
        %v944 = vpack.c.b16 %v816, %v800
        %v945 = vpack.c.b16 %v817, %v801
        %v946 = vpack.c.b16 %v818, %v802
        %v947 = vpack.c.b16 %v819, %v803
        %v948 = vpack.c.b16 %v820, %v804
        %v949 = vpack.c.b16 %v821, %v805
        %v950 = vpack.c.b16 %v822, %v806
        %v951 = vpack.c.b16 %v823, %v807
        %v952 = vpack.c.b16 %v824, %v808
        %v953 = vpack.c.b16 %v825, %v809
        %v954 = vpack.c.b16 %v826, %v810
        %v955 = vpack.c.b16 %v827, %v811
        %v956 = vpack.c.b16 %v828, %v812
        %v957 = vpack.c.b16 %v829, %v813
        %1086 = vmatprep.subr.bf16.mxu0 %v831
        %1087 = vmatpush1.bf16.msra.mxu0 %v830
        %1088 = vmatprep.subr.bf16.mxu0 %v847
        %1089 = vmatpush1.bf16.msra.mxu0 %v846
        %1090 = vmatprep.subr.bf16.mxu0 %v863
        %1091 = vmatpush1.bf16.msra.mxu0 %v862
        %1092 = vmatprep.subr.bf16.mxu0 %v879
        %1093 = vmatpush1.bf16.msra.mxu0 %v878
        %1094 = vmatprep.subr.bf16.mxu0 %v895
        %1095 = vmatpush1.bf16.msra.mxu0 %v894
        %1096 = vmatprep.subr.bf16.mxu0 %v911
        %1097 = vmatpush1.bf16.msra.mxu0 %v910
        %1098 = vmatprep.subr.bf16.mxu0 %v927
        %1099 = vmatpush1.bf16.msra.mxu0 %v926
        %1100 = vmatprep.subr.bf16.mxu0 %v943
        %1101 = vmatpush1.bf16.msra.mxu0 %v942
        %1102 = vmatprep.subr.bf16.mxu0 0
        %1103 = vmatpush1.bf16.msra.mxu0 0
        %1104 = vmatprep.subr.bf16.mxu0 0
        %1105 = vmatpush1.bf16.msra.mxu0 0
        %1106 = vmatprep.subr.bf16.mxu0 0
        %1107 = vmatpush1.bf16.msra.mxu0 0
        %1108 = vmatprep.subr.bf16.mxu0 0
        %1109 = vmatpush1.bf16.msra.mxu0 0
        %1110 = vmatprep.subr.bf16.mxu0 0
        %1111 = vmatpush1.bf16.msra.mxu0 0
        %1112 = vmatprep.subr.bf16.mxu0 0
        %1113 = vmatpush1.bf16.msra.mxu0 0
        %1114 = vmatprep.subr.bf16.mxu0 0
        %1115 = vmatpush1.bf16.msra.mxu0 0
        %1116 = vmatprep.subr.bf16.mxu0 0
        %1117 = vmatpush1.bf16.msra.mxu0 0
        %1118 = vmatprep.mubr.bf16.mxu0 0
        %1119 = vmatmul.mubr.bf16.gmra.mrb[0].mxu0 %v233
        %v1120 = vpop.f32.mrb[0].mxu0
        %v1121 = vadd.f32 %v369, %v1120
        %v1122 = vpop.f32.mrb[0].mxu0
        %v1123 = vadd.f32 %v373, %v1122
        %v1124 = vpop.f32.mrb[0].mxu0
        %v1125 = vpop.f32.mrb[0].mxu0
        %1126 = vdwg.mxu0
        %1127 = vmatprep.subr.bf16.mxu0 %v833
        %1128 = vmatpush1.bf16.msra.mxu0 %v832
        %1129 = vmatprep.subr.bf16.mxu0 %v849
        %1130 = vmatpush1.bf16.msra.mxu0 %v848
        %1131 = vmatprep.subr.bf16.mxu0 %v865
        %1132 = vmatpush1.bf16.msra.mxu0 %v864
        %1133 = vmatprep.subr.bf16.mxu0 %v881
        %1134 = vmatpush1.bf16.msra.mxu0 %v880
        %1135 = vmatprep.subr.bf16.mxu0 %v897
        %1136 = vmatpush1.bf16.msra.mxu0 %v896
        %1137 = vmatprep.subr.bf16.mxu0 %v913
        %1138 = vmatpush1.bf16.msra.mxu0 %v912
        %1139 = vmatprep.subr.bf16.mxu0 %v929
        %1140 = vmatpush1.bf16.msra.mxu0 %v928
        %1141 = vmatprep.subr.bf16.mxu0 %v945
        %1142 = vmatpush1.bf16.msra.mxu0 %v944
        %1143 = vmatprep.subr.bf16.mxu0 0
        %1144 = vmatpush1.bf16.msra.mxu0 0
        %1145 = vmatprep.subr.bf16.mxu0 0
        %1146 = vmatpush1.bf16.msra.mxu0 0
        %1147 = vmatprep.subr.bf16.mxu0 0
        %1148 = vmatpush1.bf16.msra.mxu0 0
        %1149 = vmatprep.subr.bf16.mxu0 0
        %1150 = vmatpush1.bf16.msra.mxu0 0
        %1151 = vmatprep.subr.bf16.mxu0 0
        %1152 = vmatpush1.bf16.msra.mxu0 0
        %1153 = vmatprep.subr.bf16.mxu0 0
        %1154 = vmatpush1.bf16.msra.mxu0 0
        %1155 = vmatprep.subr.bf16.mxu0 0
        %1156 = vmatpush1.bf16.msra.mxu0 0
        %1157 = vmatprep.subr.bf16.mxu0 0
        %1158 = vmatpush1.bf16.msra.mxu0 0
        %1159 = vmatprep.mubr.bf16.mxu0 0
        %1160 = vmatmul.mubr.bf16.gmra.mrb[0].mxu0 %v233
        %v1161 = vpop.f32.mrb[0].mxu0
        %v1162 = vadd.f32 %v377, %v1161
        %v1163 = vpop.f32.mrb[0].mxu0
        %v1164 = vadd.f32 %v381, %v1163
        %v1165 = vpop.f32.mrb[0].mxu0
        %v1166 = vpop.f32.mrb[0].mxu0
        %1167 = vdwg.mxu0
        %1168 = vmatprep.subr.bf16.mxu0 %v835
        %1169 = vmatpush1.bf16.msra.mxu0 %v834
        %1170 = vmatprep.subr.bf16.mxu0 %v851
        %1171 = vmatpush1.bf16.msra.mxu0 %v850
        %1172 = vmatprep.subr.bf16.mxu0 %v867
        %1173 = vmatpush1.bf16.msra.mxu0 %v866
        %1174 = vmatprep.subr.bf16.mxu0 %v883
        %1175 = vmatpush1.bf16.msra.mxu0 %v882
        %1176 = vmatprep.subr.bf16.mxu0 %v899
        %1177 = vmatpush1.bf16.msra.mxu0 %v898
        %1178 = vmatprep.subr.bf16.mxu0 %v915
        %1179 = vmatpush1.bf16.msra.mxu0 %v914
        %1180 = vmatprep.subr.bf16.mxu0 %v931
        %1181 = vmatpush1.bf16.msra.mxu0 %v930
        %1182 = vmatprep.subr.bf16.mxu0 %v947
        %1183 = vmatpush1.bf16.msra.mxu0 %v946
        %1184 = vmatprep.subr.bf16.mxu0 0
        %1185 = vmatpush1.bf16.msra.mxu0 0
        %1186 = vmatprep.subr.bf16.mxu0 0
        %1187 = vmatpush1.bf16.msra.mxu0 0
        %1188 = vmatprep.subr.bf16.mxu0 0
        %1189 = vmatpush1.bf16.msra.mxu0 0
        %1190 = vmatprep.subr.bf16.mxu0 0
        %1191 = vmatpush1.bf16.msra.mxu0 0
        %1192 = vmatprep.subr.bf16.mxu0 0
        %1193 = vmatpush1.bf16.msra.mxu0 0
        %1194 = vmatprep.subr.bf16.mxu0 0
        %1195 = vmatpush1.bf16.msra.mxu0 0
        %1196 = vmatprep.subr.bf16.mxu0 0
        %1197 = vmatpush1.bf16.msra.mxu0 0
        %1198 = vmatprep.subr.bf16.mxu0 0
        %1199 = vmatpush1.bf16.msra.mxu0 0
        %1200 = vmatprep.mubr.bf16.mxu0 0
        %1201 = vmatmul.mubr.bf16.gmra.mrb[0].mxu0 %v233
        %v1202 = vpop.f32.mrb[0].mxu0
        %v1203 = vadd.f32 %v385, %v1202
        %v1204 = vpop.f32.mrb[0].mxu0
        %v1205 = vadd.f32 %v389, %v1204
        %v1206 = vpop.f32.mrb[0].mxu0
        %v1207 = vpop.f32.mrb[0].mxu0
        %1208 = vdwg.mxu0
        %1209 = vmatprep.subr.bf16.mxu0 %v837
        %1210 = vmatpush1.bf16.msra.mxu0 %v836
        %1211 = vmatprep.subr.bf16.mxu0 %v853
        %1212 = vmatpush1.bf16.msra.mxu0 %v852
        %1213 = vmatprep.subr.bf16.mxu0 %v869
        %1214 = vmatpush1.bf16.msra.mxu0 %v868
        %1215 = vmatprep.subr.bf16.mxu0 %v885
        %1216 = vmatpush1.bf16.msra.mxu0 %v884
        %1217 = vmatprep.subr.bf16.mxu0 %v901
        %1218 = vmatpush1.bf16.msra.mxu0 %v900
        %1219 = vmatprep.subr.bf16.mxu0 %v917
        %1220 = vmatpush1.bf16.msra.mxu0 %v916
        %1221 = vmatprep.subr.bf16.mxu0 %v933
        %1222 = vmatpush1.bf16.msra.mxu0 %v932
        %1223 = vmatprep.subr.bf16.mxu0 %v949
        %1224 = vmatpush1.bf16.msra.mxu0 %v948
        %1225 = vmatprep.subr.bf16.mxu0 0
        %1226 = vmatpush1.bf16.msra.mxu0 0
        %1227 = vmatprep.subr.bf16.mxu0 0
        %1228 = vmatpush1.bf16.msra.mxu0 0
        %1229 = vmatprep.subr.bf16.mxu0 0
        %1230 = vmatpush1.bf16.msra.mxu0 0
        %1231 = vmatprep.subr.bf16.mxu0 0
        %1232 = vmatpush1.bf16.msra.mxu0 0
        %1233 = vmatprep.subr.bf16.mxu0 0
        %1234 = vmatpush1.bf16.msra.mxu0 0
        %1235 = vmatprep.subr.bf16.mxu0 0
        %1236 = vmatpush1.bf16.msra.mxu0 0
        %1237 = vmatprep.subr.bf16.mxu0 0
        %1238 = vmatpush1.bf16.msra.mxu0 0
        %1239 = vmatprep.subr.bf16.mxu0 0
        %1240 = vmatpush1.bf16.msra.mxu0 0
        %1241 = vmatprep.mubr.bf16.mxu0 0
        %1242 = vmatmul.mubr.bf16.gmra.mrb[0].mxu0 %v233
        %v1243 = vpop.f32.mrb[0].mxu0
        %v1244 = vadd.f32 %v393, %v1243
        %v1245 = vpop.f32.mrb[0].mxu0
        %v1246 = vadd.f32 %v397, %v1245
        %v1247 = vpop.f32.mrb[0].mxu0
        %v1248 = vpop.f32.mrb[0].mxu0
        %1249 = vdwg.mxu0
        %1250 = vmatprep.subr.bf16.mxu0 %v839
        %1251 = vmatpush1.bf16.msra.mxu0 %v838
        %1252 = vmatprep.subr.bf16.mxu0 %v855
        %1253 = vmatpush1.bf16.msra.mxu0 %v854
        %1254 = vmatprep.subr.bf16.mxu0 %v871
        %1255 = vmatpush1.bf16.msra.mxu0 %v870
        %1256 = vmatprep.subr.bf16.mxu0 %v887
        %1257 = vmatpush1.bf16.msra.mxu0 %v886
        %1258 = vmatprep.subr.bf16.mxu0 %v903
        %1259 = vmatpush1.bf16.msra.mxu0 %v902
        %1260 = vmatprep.subr.bf16.mxu0 %v919
        %1261 = vmatpush1.bf16.msra.mxu0 %v918
        %1262 = vmatprep.subr.bf16.mxu0 %v935
        %1263 = vmatpush1.bf16.msra.mxu0 %v934
        %1264 = vmatprep.subr.bf16.mxu0 %v951
        %1265 = vmatpush1.bf16.msra.mxu0 %v950
        %1266 = vmatprep.subr.bf16.mxu0 0
        %1267 = vmatpush1.bf16.msra.mxu0 0
        %1268 = vmatprep.subr.bf16.mxu0 0
        %1269 = vmatpush1.bf16.msra.mxu0 0
        %1270 = vmatprep.subr.bf16.mxu0 0
        %1271 = vmatpush1.bf16.msra.mxu0 0
        %1272 = vmatprep.subr.bf16.mxu0 0
        %1273 = vmatpush1.bf16.msra.mxu0 0
        %1274 = vmatprep.subr.bf16.mxu0 0
        %1275 = vmatpush1.bf16.msra.mxu0 0
        %1276 = vmatprep.subr.bf16.mxu0 0
        %1277 = vmatpush1.bf16.msra.mxu0 0
        %1278 = vmatprep.subr.bf16.mxu0 0
        %1279 = vmatpush1.bf16.msra.mxu0 0
        %1280 = vmatprep.subr.bf16.mxu0 0
        %1281 = vmatpush1.bf16.msra.mxu0 0
        %1282 = vmatprep.mubr.bf16.mxu0 0
        %1283 = vmatmul.mubr.bf16.gmra.mrb[0].mxu0 %v233
        %v1284 = vpop.f32.mrb[0].mxu0
        %v1285 = vadd.f32 %v401, %v1284
        %v1286 = vpop.f32.mrb[0].mxu0
        %v1287 = vadd.f32 %v405, %v1286
        %v1288 = vpop.f32.mrb[0].mxu0
        %v1289 = vpop.f32.mrb[0].mxu0
        %1290 = vdwg.mxu0
        %1291 = vmatprep.subr.bf16.mxu0 %v841
        %1292 = vmatpush1.bf16.msra.mxu0 %v840
        %1293 = vmatprep.subr.bf16.mxu0 %v857
        %1294 = vmatpush1.bf16.msra.mxu0 %v856
        %1295 = vmatprep.subr.bf16.mxu0 %v873
        %1296 = vmatpush1.bf16.msra.mxu0 %v872
        %1297 = vmatprep.subr.bf16.mxu0 %v889
        %1298 = vmatpush1.bf16.msra.mxu0 %v888
        %1299 = vmatprep.subr.bf16.mxu0 %v905
        %1300 = vmatpush1.bf16.msra.mxu0 %v904
        %1301 = vmatprep.subr.bf16.mxu0 %v921
        %1302 = vmatpush1.bf16.msra.mxu0 %v920
        %1303 = vmatprep.subr.bf16.mxu0 %v937
        %1304 = vmatpush1.bf16.msra.mxu0 %v936
        %1305 = vmatprep.subr.bf16.mxu0 %v953
        %1306 = vmatpush1.bf16.msra.mxu0 %v952
        %1307 = vmatprep.subr.bf16.mxu0 0
        %1308 = vmatpush1.bf16.msra.mxu0 0
        %1309 = vmatprep.subr.bf16.mxu0 0
        %1310 = vmatpush1.bf16.msra.mxu0 0
        %1311 = vmatprep.subr.bf16.mxu0 0
        %1312 = vmatpush1.bf16.msra.mxu0 0
        %1313 = vmatprep.subr.bf16.mxu0 0
        %1314 = vmatpush1.bf16.msra.mxu0 0
        %1315 = vmatprep.subr.bf16.mxu0 0
        %1316 = vmatpush1.bf16.msra.mxu0 0
        %1317 = vmatprep.subr.bf16.mxu0 0
        %1318 = vmatpush1.bf16.msra.mxu0 0
        %1319 = vmatprep.subr.bf16.mxu0 0
        %1320 = vmatpush1.bf16.msra.mxu0 0
        %1321 = vmatprep.subr.bf16.mxu0 0
        %1322 = vmatpush1.bf16.msra.mxu0 0
        %1323 = vmatprep.mubr.bf16.mxu0 0
        %1324 = vmatmul.mubr.bf16.gmra.mrb[0].mxu0 %v233
        %v1325 = vpop.f32.mrb[0].mxu0
        %v1326 = vadd.f32 %v409, %v1325
        %v1327 = vpop.f32.mrb[0].mxu0
        %v1328 = vadd.f32 %v413, %v1327
        %v1329 = vpop.f32.mrb[0].mxu0
        %v1330 = vpop.f32.mrb[0].mxu0
        %1331 = vdwg.mxu0
        %1332 = vmatprep.subr.bf16.mxu0 %v843
        %1333 = vmatpush1.bf16.msra.mxu0 %v842
        %1334 = vmatprep.subr.bf16.mxu0 %v859
        %1335 = vmatpush1.bf16.msra.mxu0 %v858
        %1336 = vmatprep.subr.bf16.mxu0 %v875
        %1337 = vmatpush1.bf16.msra.mxu0 %v874
        %1338 = vmatprep.subr.bf16.mxu0 %v891
        %1339 = vmatpush1.bf16.msra.mxu0 %v890
        %1340 = vmatprep.subr.bf16.mxu0 %v907
        %1341 = vmatpush1.bf16.msra.mxu0 %v906
        %1342 = vmatprep.subr.bf16.mxu0 %v923
        %1343 = vmatpush1.bf16.msra.mxu0 %v922
        %1344 = vmatprep.subr.bf16.mxu0 %v939
        %1345 = vmatpush1.bf16.msra.mxu0 %v938
        %1346 = vmatprep.subr.bf16.mxu0 %v955
        %1347 = vmatpush1.bf16.msra.mxu0 %v954
        %1348 = vmatprep.subr.bf16.mxu0 0
        %1349 = vmatpush1.bf16.msra.mxu0 0
        %1350 = vmatprep.subr.bf16.mxu0 0
        %1351 = vmatpush1.bf16.msra.mxu0 0
        %1352 = vmatprep.subr.bf16.mxu0 0
        %1353 = vmatpush1.bf16.msra.mxu0 0
        %1354 = vmatprep.subr.bf16.mxu0 0
        %1355 = vmatpush1.bf16.msra.mxu0 0
        %1356 = vmatprep.subr.bf16.mxu0 0
        %1357 = vmatpush1.bf16.msra.mxu0 0
        %1358 = vmatprep.subr.bf16.mxu0 0
        %1359 = vmatpush1.bf16.msra.mxu0 0
        %1360 = vmatprep.subr.bf16.mxu0 0
        %1361 = vmatpush1.bf16.msra.mxu0 0
        %1362 = vmatprep.subr.bf16.mxu0 0
        %1363 = vmatpush1.bf16.msra.mxu0 0
        %1364 = vmatprep.mubr.bf16.mxu0 0
        %1365 = vmatmul.mubr.bf16.gmra.mrb[0].mxu0 %v233
        %v1366 = vpop.f32.mrb[0].mxu0
        %v1367 = vadd.f32 %v417, %v1366
        %v1368 = vpop.f32.mrb[0].mxu0
        %v1369 = vadd.f32 %v421, %v1368
        %v1370 = vpop.f32.mrb[0].mxu0
        %v1371 = vpop.f32.mrb[0].mxu0
        %1372 = vdwg.mxu0
        %1373 = vmatprep.subr.bf16.mxu0 %v845
        %1374 = vmatpush1.bf16.msra.mxu0 %v844
        %1375 = vmatprep.subr.bf16.mxu0 %v861
        %1376 = vmatpush1.bf16.msra.mxu0 %v860
        %1377 = vmatprep.subr.bf16.mxu0 %v877
        %1378 = vmatpush1.bf16.msra.mxu0 %v876
        %1379 = vmatprep.subr.bf16.mxu0 %v893
        %1380 = vmatpush1.bf16.msra.mxu0 %v892
        %1381 = vmatprep.subr.bf16.mxu0 %v909
        %1382 = vmatpush1.bf16.msra.mxu0 %v908
        %1383 = vmatprep.subr.bf16.mxu0 %v925
        %1384 = vmatpush1.bf16.msra.mxu0 %v924
        %1385 = vmatprep.subr.bf16.mxu0 %v941
        %1386 = vmatpush1.bf16.msra.mxu0 %v940
        %1387 = vmatprep.subr.bf16.mxu0 %v957
        %1388 = vmatpush1.bf16.msra.mxu0 %v956
        %1389 = vmatprep.subr.bf16.mxu0 0
        %1390 = vmatpush1.bf16.msra.mxu0 0
        %1391 = vmatprep.subr.bf16.mxu0 0
        %1392 = vmatpush1.bf16.msra.mxu0 0
        %1393 = vmatprep.subr.bf16.mxu0 0
        %1394 = vmatpush1.bf16.msra.mxu0 0
        %1395 = vmatprep.subr.bf16.mxu0 0
        %1396 = vmatpush1.bf16.msra.mxu0 0
        %1397 = vmatprep.subr.bf16.mxu0 0
        %1398 = vmatpush1.bf16.msra.mxu0 0
        %1399 = vmatprep.subr.bf16.mxu0 0
        %1400 = vmatpush1.bf16.msra.mxu0 0
        %1401 = vmatprep.subr.bf16.mxu0 0
        %1402 = vmatpush1.bf16.msra.mxu0 0
        %1403 = vmatprep.subr.bf16.mxu0 0
        %1404 = vmatpush1.bf16.msra.mxu0 0
        %1405 = vmatprep.mubr.bf16.mxu0 0
        %1406 = vmatmul.mubr.bf16.gmra.mrb[0].mxu0 %v233
        %v1407 = vpop.f32.mrb[0].mxu0
        %v1408 = vadd.f32 %v425, %v1407
        %v1409 = vpop.f32.mrb[0].mxu0
        %v1410 = vadd.f32 %v429, %v1409
        %v1411 = vpop.f32.mrb[0].mxu0
        %v1412 = vpop.f32.mrb[0].mxu0
        %1413 = vdwg.mxu0
        %1414 = vst [vmem:[%s230] sm:$0xff] %v1121
        %1415 = vst [vmem:[%s230 + $0x8] sm:$0xff] %v1123
        %1416 = vst [vmem:[%s230 + $0x10] sm:$0xff] %v1162
        %1417 = vst [vmem:[%s230 + $0x18] sm:$0xff] %v1164
        %1418 = vst [vmem:[%s230 + $0x20] sm:$0xff] %v1203
        %1419 = vst [vmem:[%s230 + $0x28] sm:$0xff] %v1205
        %1420 = vst [vmem:[%s230 + $0x30] sm:$0xff] %v1244
        %1421 = vst [vmem:[%s230 + $0x38] sm:$0xff] %v1246
        %1422 = vst [vmem:[%s230 + $0x40] sm:$0xff] %v1285
        %1423 = vst [vmem:[%s230 + $0x48] sm:$0xff] %v1287
        %1424 = vst [vmem:[%s230 + $0x50] sm:$0xff] %v1326
        %1425 = vst [vmem:[%s230 + $0x58] sm:$0xff] %v1328
        %1426 = vst [vmem:[%s230 + $0x60] sm:$0xff] %v1367
        %1427 = vst [vmem:[%s230 + $0x68] sm:$0xff] %v1369
        %1428 = vst [vmem:[%s230 + $0x70] sm:$0xff] %v1408
        %1429 = vst [vmem:[%s230 + $0x78] sm:$0xff] %v1410
        %s1430 = smul.u32 16, %s20
        %p1431 = scmp.lt.s32.totalorder %s1430, 31
        %s1432 = scalar_select %p1431, %s1430, 31
        %s1433 = smul.addr %s1432, 8
        %s1434 = scalar_lea.vmem %s3, %s1433
        // Predicated region
        $region41: #{luong_decoder_step.3} parent=31 // pred_check
          %p1435 = pneg %p111
        $region42: #{luong_decoder_step.3} parent=31 // pred_check_branch
          %1437 = sbr.rel (%p1435) target = $region44
        $region43: #{luong_decoder_step.3} parent=31 // pred_region
          %s1438 = smul.u32 16, %s20
        $region44: #{luong_decoder_step.3} parent=31 // pred_fallthru
          _
      $region32: #{luong_decoder_step.3} parent=5 // pred_fallthru
        _
      %p1439 = scmp.le.s32.totalorder 2, %s15
      // Predicated region
      $region45: #{luong_decoder_step.3} parent=5 // pred_check
        %p1440 = pneg %p1439
      $region46: #{luong_decoder_step.3} parent=5 // pred_check_branch
        %1442 = sbr.rel (%p1440) target = $region48
      $region47: #{luong_decoder_step.3} parent=5 // pred_region
        %s1443 = ssub.s32 %s15, 2
        // Predicated region
        $region49: #{luong_decoder_step.3} parent=47 // pred_check
          %p1444 = pneg %p117
        $region50: #{luong_decoder_step.3} parent=47 // pred_check_branch
          %1446 = sbr.rel (%p1444) target = $region52
        $region51: #{luong_decoder_step.3} parent=47 // pred_region
          %s1447 = smul.u32 16, %s21
          %p1448 = scmp.lt.s32.totalorder %s1447, 31
          %s1449 = scalar_select %p1448, %s1447, 31
          %s1450 = smul.addr %s1449, 8
          %s1451 = scalar_lea.vmem %s3, %s1450
        $region52: #{luong_decoder_step.3} parent=47 // pred_fallthru
          _
      $region48: #{luong_decoder_step.3} parent=5 // pred_fallthru
        _
    $region6: #{luong_decoder_step.3} parent=1 // loop_footer
      %s19 = sadd.s32 1, %s15
    $region7: #{luong_decoder_step.3} parent=1 // loop_footer_branch
      %14 = sbr.rel target = $region3
    $region8: #{luong_decoder_step.3} parent=1 // loop_exit
      _
    %1452 = vsyncpa [#allocation3], 1
    %s1453 = scalar_lea.sflag [#allocation3], 1
    %1454 = vsyncpa %s1453, 1
    %1455 = vsyncpa [#allocation5], 1
    %s1456 = scalar_lea.sflag [#allocation5], 1
    %1457 = vsyncpa %s1456, 1

// kernel: luong_decoder_step.2
$region0: #{luong_decoder_step.2}
  #allocation0 [shape = 'u32[]', space=smem, size = 0x4, offset = 0x4, fixed_abs, tag = 'smem constant byte address 0x4 - core index']
  #allocation1 [shape = 'u32[144,128]{1,0:T(1,128)}', space=vmem, size = 0x12000, scoped, tag = 'internal scratch']
  %s0 = inlined_call_operand.vmem [shape: f32[8,128], index: 0, kind: input, shape index: {}]
  %s1 = inlined_call_operand.vmem [shape: f32[2,8,128], index: 1, kind: input, shape index: {}, may-alias: {1,14}]
  %s2 = inlined_call_operand.vmem [shape: f32[2,8,128], index: 2, kind: input, shape index: {}, may-alias: {2,15}]
  %s3 = inlined_call_operand.hbm [shape: bf16[8,8,128], index: 3, kind: input, shape index: {}]
  %s4 = inlined_call_operand.hbm [shape: f32[8,8], index: 4, kind: input, shape index: {}]
  %s5 = inlined_call_operand.hbm [shape: bf16[128,512], index: 5, kind: input, shape index: {}]
  %s6 = inlined_call_operand.hbm [shape: bf16[128,512], index: 6, kind: input, shape index: {}]
  %s7 = inlined_call_operand.hbm [shape: bf16[128,512], index: 7, kind: input, shape index: {}]
  %s8 = inlined_call_operand.hbm [shape: bf16[128,512], index: 8, kind: input, shape index: {}]
  %s9 = inlined_call_operand.hbm [shape: f32[1,512], index: 9, kind: input, shape index: {}]
  %s10 = inlined_call_operand.hbm [shape: f32[1,512], index: 10, kind: input, shape index: {}]
  %s11 = inlined_call_operand.hbm [shape: bf16[128,128], index: 11, kind: input, shape index: {}]
  %s12 = inlined_call_operand.hbm [shape: bf16[128,128], index: 12, kind: input, shape index: {}]
  %s13 = inlined_call_operand.hbm [shape: f32[1,128], index: 13, kind: input, shape index: {}]
  %s14 = inlined_call_operand.vmem [shape: f32[2,8,128], index: 14, kind: output, shape index: {0}, may-alias: {1,14}]
  %s15 = inlined_call_operand.vmem [shape: f32[2,8,128], index: 15, kind: output, shape index: {1}, may-alias: {2,15}]
  %s16 = inlined_call_operand.vmem [shape: f32[8,8], index: 16, kind: output, shape index: {2}]
  %s17 = inlined_call_operand.vmem [shape: bf16[8,128], index: 17, kind: output, shape index: {3}]
  %18 = xla_tuple %s14, %s15, %s16, %s17
  %s19 = sld [smem:[#allocation0]]
  $region134: #{luong_decoder_step.2} parent=0
    _
  %s21 = ssub.s32 1, %s19
  %s22 = scalar_select 0, %s21, %s19
  $region1: #{luong_decoder_step.2} parent=0
    #allocation2 [shape = 'u8[16384]{0}', space=vmem, size = 0x4000, scoped, tag = 'input window, operand 3, single buffered']
    #allocation3 [shape = 's32[1]{0}', space=sflag, size = 0x4, scoped, tag = 'scoped memory for luong_decoder_step.2']
    #allocation4 [shape = 'u8[4096]{0}', space=vmem, size = 0x1000, scoped, tag = 'input window, operand 4, single buffered']
    #allocation5 [shape = 's32[1]{0}', space=sflag, size = 0x4, scoped, tag = 'scoped memory for luong_decoder_step.2']
    #allocation6 [shape = 'u8[131072]{0}', space=vmem, size = 0x20000, scoped, tag = 'input window, operand 5, single buffered']
    #allocation7 [shape = 'u8[131072]{0}', space=vmem, size = 0x20000, scoped, tag = 'input window, operand 6, single buffered']
    #allocation8 [shape = 's32[1]{0}', space=sflag, size = 0x4, scoped, tag = 'scoped memory for luong_decoder_step.2']
    #allocation9 [shape = 'u8[131072]{0}', space=vmem, size = 0x20000, scoped, tag = 'input window, operand 7, single buffered']
    #allocation10 [shape = 'u8[131072]{0}', space=vmem, size = 0x20000, scoped, tag = 'input window, operand 8, single buffered']
    #allocation11 [shape = 's32[1]{0}', space=sflag, size = 0x4, scoped, tag = 'scoped memory for luong_decoder_step.2']
    #allocation12 [shape = 'u8[2048]{0}', space=vmem, size = 0x800, scoped, tag = 'input window, operand 9, single buffered']
    #allocation13 [shape = 'u8[2048]{0}', space=vmem, size = 0x800, scoped, tag = 'input window, operand 10, single buffered']
    #allocation14 [shape = 's32[1]{0}', space=sflag, size = 0x4, scoped, tag = 'scoped memory for luong_decoder_step.2']
    #allocation15 [shape = 'u8[32768]{0}', space=vmem, size = 0x8000, scoped, tag = 'input window, operand 11, single buffered']
    #allocation16 [shape = 'u8[32768]{0}', space=vmem, size = 0x8000, scoped, tag = 'input window, operand 12, single buffered']
    #allocation17 [shape = 's32[1]{0}', space=sflag, size = 0x4, scoped, tag = 'scoped memory for luong_decoder_step.2']
    #allocation18 [shape = 'u8[512]{0}', space=vmem, size = 0x400, scoped, tag = 'input window, operand 13, single buffered']
    %23 = vsyncpa [#allocation3], 0
    %24 = vsyncpa [#allocation5], 0
    %25 = vsyncpa [#allocation8], 0
    %26 = vsyncpa [#allocation11], 0
    %27 = vsyncpa [#allocation14], 0
    %28 = vsyncpa [#allocation17], 0
    // Predicated region
    $region2: #{luong_decoder_step.2} parent=1 // pred_check
      _
    $region3: #{luong_decoder_step.2} parent=1 // pred_check_branch
      %30 = sbr.rel (0) target = $region5
    $region4: #{luong_decoder_step.2} parent=1 // pred_region
      _
    $region5: #{luong_decoder_step.2} parent=1 // pred_fallthru
      _
    // Predicated region
    $region6: #{luong_decoder_step.2} parent=1 // pred_check
      _
    $region7: #{luong_decoder_step.2} parent=1 // pred_check_branch
      %32 = sbr.rel (0) target = $region9
    $region8: #{luong_decoder_step.2} parent=1 // pred_region
      _
    $region9: #{luong_decoder_step.2} parent=1 // pred_fallthru
      _
    // Predicated region
    $region10: #{luong_decoder_step.2} parent=1 // pred_check
      _
    $region11: #{luong_decoder_step.2} parent=1 // pred_check_branch
      %34 = sbr.rel (0) target = $region13
    $region12: #{luong_decoder_step.2} parent=1 // pred_region
      _
    $region13: #{luong_decoder_step.2} parent=1 // pred_fallthru
      _
    // Predicated region
    $region14: #{luong_decoder_step.2} parent=1 // pred_check
      _
    $region15: #{luong_decoder_step.2} parent=1 // pred_check_branch
      %36 = sbr.rel (0) target = $region17
    $region16: #{luong_decoder_step.2} parent=1 // pred_region
      %s38 = ssub.s32 512, 512
      %39 = vsyncadd [#allocation3], %s38
      %s40 = sshll.u32 [#allocation2], 4
      %s41 = int_to_ptr.vmem [resolvable:$true] %s40
      %46 = dma.hbm_to_vmem [thread:$0]  %s3, 512, %s41, [#allocation3], 64, 64, 4
    $region17: #{luong_decoder_step.2} parent=1 // pred_fallthru
      _
    // Predicated region
    $region18: #{luong_decoder_step.2} parent=1 // pred_check
      _
    $region19: #{luong_decoder_step.2} parent=1 // pred_check_branch
      %48 = sbr.rel (0) target = $region21
    $region20: #{luong_decoder_step.2} parent=1 // pred_region
      %s50 = ssub.s32 128, 128
      %51 = vsyncadd [#allocation5], %s50
      %s53 = sshll.u32 [#allocation4], 4
      %s54 = int_to_ptr.vmem [resolvable:$true] %s53
      %56 = dma.hbm_to_vmem [thread:$0]  %s4, 128, %s54, [#allocation5]
    $region21: #{luong_decoder_step.2} parent=1 // pred_fallthru
      _
    // Predicated region
    $region22: #{luong_decoder_step.2} parent=1 // pred_check
      _
    $region23: #{luong_decoder_step.2} parent=1 // pred_check_branch
      %58 = sbr.rel (0) target = $region25
    $region24: #{luong_decoder_step.2} parent=1 // pred_region
      %s60 = ssub.s32 4096, 4096
      %61 = vsyncadd [#allocation5], %s60
      %s62 = sshll.u32 [#allocation6], 4
      %s63 = int_to_ptr.vmem [resolvable:$true] %s62
      %68 = dma.hbm_to_vmem [thread:$0]  %s5, 4096, %s63, [#allocation5], 256, 256, 16
    $region25: #{luong_decoder_step.2} parent=1 // pred_fallthru
      _
    // Predicated region
    $region26: #{luong_decoder_step.2} parent=1 // pred_check
      _
    $region27: #{luong_decoder_step.2} parent=1 // pred_check_branch
      %70 = sbr.rel (0) target = $region29
    $region28: #{luong_decoder_step.2} parent=1 // pred_region
      %s72 = ssub.s32 4096, 4096
      %73 = vsyncadd [#allocation8], %s72
      %s74 = sshll.u32 [#allocation7], 4
      %s75 = int_to_ptr.vmem [resolvable:$true] %s74
      %80 = dma.hbm_to_vmem [thread:$0]  %s6, 4096, %s75, [#allocation8], 256, 256, 16
    $region29: #{luong_decoder_step.2} parent=1 // pred_fallthru
      _
    // Predicated region
    $region30: #{luong_decoder_step.2} parent=1 // pred_check
      _
    $region31: #{luong_decoder_step.2} parent=1 // pred_check_branch
      %82 = sbr.rel (0) target = $region33
    $region32: #{luong_decoder_step.2} parent=1 // pred_region
      %s84 = ssub.s32 4096, 4096
      %85 = vsyncadd [#allocation8], %s84
      %s86 = sshll.u32 [#allocation9], 4
      %s87 = int_to_ptr.vmem [resolvable:$true] %s86
      %92 = dma.hbm_to_vmem [thread:$0]  %s7, 4096, %s87, [#allocation8], 256, 256, 16
    $region33: #{luong_decoder_step.2} parent=1 // pred_fallthru
      _
    // Predicated region
    $region34: #{luong_decoder_step.2} parent=1 // pred_check
      _
    $region35: #{luong_decoder_step.2} parent=1 // pred_check_branch
      %94 = sbr.rel (0) target = $region37
    $region36: #{luong_decoder_step.2} parent=1 // pred_region
      %s96 = ssub.s32 4096, 4096
      %97 = vsyncadd [#allocation11], %s96
      %s98 = sshll.u32 [#allocation10], 4
      %s99 = int_to_ptr.vmem [resolvable:$true] %s98
      %104 = dma.hbm_to_vmem [thread:$0]  %s8, 4096, %s99, [#allocation11], 256, 256, 16
    $region37: #{luong_decoder_step.2} parent=1 // pred_fallthru
      _
    // Predicated region
    $region38: #{luong_decoder_step.2} parent=1 // pred_check
      _
    $region39: #{luong_decoder_step.2} parent=1 // pred_check_branch
      %106 = sbr.rel (0) target = $region41
    $region40: #{luong_decoder_step.2} parent=1 // pred_region
      %s108 = ssub.s32 64, 64
      %109 = vsyncadd [#allocation11], %s108
      %s111 = sshll.u32 [#allocation12], 4
      %s112 = int_to_ptr.vmem [resolvable:$true] %s111
      %114 = dma.hbm_to_vmem [thread:$0]  %s9, 64, %s112, [#allocation11]
    $region41: #{luong_decoder_step.2} parent=1 // pred_fallthru
      _
    // Predicated region
    $region42: #{luong_decoder_step.2} parent=1 // pred_check
      _
    $region43: #{luong_decoder_step.2} parent=1 // pred_check_branch
      %116 = sbr.rel (0) target = $region45
    $region44: #{luong_decoder_step.2} parent=1 // pred_region
      %s118 = ssub.s32 64, 64
      %119 = vsyncadd [#allocation14], %s118
      %s121 = sshll.u32 [#allocation13], 4
      %s122 = int_to_ptr.vmem [resolvable:$true] %s121
      %124 = dma.hbm_to_vmem [thread:$0]  %s10, 64, %s122, [#allocation14]
    $region45: #{luong_decoder_step.2} parent=1 // pred_fallthru
      _
    // Predicated region
    $region46: #{luong_decoder_step.2} parent=1 // pred_check
      _
    $region47: #{luong_decoder_step.2} parent=1 // pred_check_branch
      %126 = sbr.rel (0) target = $region49
    $region48: #{luong_decoder_step.2} parent=1 // pred_region
      %s128 = ssub.s32 1024, 1024
      %129 = vsyncadd [#allocation14], %s128
      %s130 = sshll.u32 [#allocation15], 4
      %s131 = int_to_ptr.vmem [resolvable:$true] %s130
      %136 = dma.hbm_to_vmem [thread:$0]  %s11, 1024, %s131, [#allocation14], 64, 64, 4
    $region49: #{luong_decoder_step.2} parent=1 // pred_fallthru
      _
    // Predicated region
    $region50: #{luong_decoder_step.2} parent=1 // pred_check
      _
    $region51: #{luong_decoder_step.2} parent=1 // pred_check_branch
      %138 = sbr.rel (0) target = $region53
    $region52: #{luong_decoder_step.2} parent=1 // pred_region
      %s140 = ssub.s32 1024, 1024
      %141 = vsyncadd [#allocation17], %s140
      %s142 = sshll.u32 [#allocation16], 4
      %s143 = int_to_ptr.vmem [resolvable:$true] %s142
      %148 = dma.hbm_to_vmem [thread:$0]  %s12, 1024, %s143, [#allocation17], 64, 64, 4
    $region53: #{luong_decoder_step.2} parent=1 // pred_fallthru
      _
    // Predicated region
    $region54: #{luong_decoder_step.2} parent=1 // pred_check
      _
    $region55: #{luong_decoder_step.2} parent=1 // pred_check_branch
      %150 = sbr.rel (0) target = $region57
    $region56: #{luong_decoder_step.2} parent=1 // pred_region
      %s152 = ssub.s32 16, 16
      %153 = vsyncadd [#allocation17], %s152
      %s155 = sshll.u32 [#allocation18], 4
      %s156 = int_to_ptr.vmem [resolvable:$true] %s155
      %158 = dma.hbm_to_vmem [thread:$0]  %s13, 16, %s156, [#allocation17]
    $region57: #{luong_decoder_step.2} parent=1 // pred_fallthru
      _
    // Predicated region
    $region58: #{luong_decoder_step.2} parent=1 // pred_check
      _
    $region59: #{luong_decoder_step.2} parent=1 // pred_check_branch
      %160 = sbr.rel (0) target = $region61
    $region60: #{luong_decoder_step.2} parent=1 // pred_region
      %161 = dma.done [#allocation3], 512
    $region61: #{luong_decoder_step.2} parent=1 // pred_fallthru
      _
    // Predicated region
    $region62: #{luong_decoder_step.2} parent=1 // pred_check
      _
    $region63: #{luong_decoder_step.2} parent=1 // pred_check_branch
      %163 = sbr.rel (0) target = $region65
    $region64: #{luong_decoder_step.2} parent=1 // pred_region
      %164 = dma.done [#allocation5], 128
    $region65: #{luong_decoder_step.2} parent=1 // pred_fallthru
      _
    // Predicated region
    $region66: #{luong_decoder_step.2} parent=1 // pred_check
      _
    $region67: #{luong_decoder_step.2} parent=1 // pred_check_branch
      %166 = sbr.rel (0) target = $region69
    $region68: #{luong_decoder_step.2} parent=1 // pred_region
      %167 = dma.done [#allocation5], 4096
    $region69: #{luong_decoder_step.2} parent=1 // pred_fallthru
      _
    // Predicated region
    $region70: #{luong_decoder_step.2} parent=1 // pred_check
      _
    $region71: #{luong_decoder_step.2} parent=1 // pred_check_branch
      %169 = sbr.rel (0) target = $region73
    $region72: #{luong_decoder_step.2} parent=1 // pred_region
      %170 = dma.done [#allocation8], 4096
    $region73: #{luong_decoder_step.2} parent=1 // pred_fallthru
      _
    // Predicated region
    $region74: #{luong_decoder_step.2} parent=1 // pred_check
      _
    $region75: #{luong_decoder_step.2} parent=1 // pred_check_branch
      %172 = sbr.rel (0) target = $region77
    $region76: #{luong_decoder_step.2} parent=1 // pred_region
      %173 = dma.done [#allocation8], 4096
    $region77: #{luong_decoder_step.2} parent=1 // pred_fallthru
      _
    // Predicated region
    $region78: #{luong_decoder_step.2} parent=1 // pred_check
      _
    $region79: #{luong_decoder_step.2} parent=1 // pred_check_branch
      %175 = sbr.rel (0) target = $region81
    $region80: #{luong_decoder_step.2} parent=1 // pred_region
      %176 = dma.done [#allocation11], 4096
    $region81: #{luong_decoder_step.2} parent=1 // pred_fallthru
      _
    // Predicated region
    $region82: #{luong_decoder_step.2} parent=1 // pred_check
      _
    $region83: #{luong_decoder_step.2} parent=1 // pred_check_branch
      %178 = sbr.rel (0) target = $region85
    $region84: #{luong_decoder_step.2} parent=1 // pred_region
      %179 = dma.done [#allocation11], 64
    $region85: #{luong_decoder_step.2} parent=1 // pred_fallthru
      _
    // Predicated region
    $region86: #{luong_decoder_step.2} parent=1 // pred_check
      _
    $region87: #{luong_decoder_step.2} parent=1 // pred_check_branch
      %181 = sbr.rel (0) target = $region89
    $region88: #{luong_decoder_step.2} parent=1 // pred_region
      %182 = dma.done [#allocation14], 64
    $region89: #{luong_decoder_step.2} parent=1 // pred_fallthru
      _
    // Predicated region
    $region90: #{luong_decoder_step.2} parent=1 // pred_check
      _
    $region91: #{luong_decoder_step.2} parent=1 // pred_check_branch
      %184 = sbr.rel (0) target = $region93
    $region92: #{luong_decoder_step.2} parent=1 // pred_region
      %185 = dma.done [#allocation14], 1024
    $region93: #{luong_decoder_step.2} parent=1 // pred_fallthru
      _
    // Predicated region
    $region94: #{luong_decoder_step.2} parent=1 // pred_check
      _
    $region95: #{luong_decoder_step.2} parent=1 // pred_check_branch
      %187 = sbr.rel (0) target = $region97
    $region96: #{luong_decoder_step.2} parent=1 // pred_region
      %188 = dma.done [#allocation17], 1024
    $region97: #{luong_decoder_step.2} parent=1 // pred_fallthru
      _
    // Predicated region
    $region98: #{luong_decoder_step.2} parent=1 // pred_check
      _
    $region99: #{luong_decoder_step.2} parent=1 // pred_check_branch
      %190 = sbr.rel (0) target = $region101
    $region100: #{luong_decoder_step.2} parent=1 // pred_region
      %191 = dma.done [#allocation17], 16
    $region101: #{luong_decoder_step.2} parent=1 // pred_fallthru
      _
    %v193 = vld [vmem:[%s0] sm:$0xff]
    %v194 = vld [vmem:[%s1] sm:$0xff]
    %v195 = vld [vmem:[%s2] sm:$0xff]
    %v196 = vpack.c.bf16 %v193, %v193
    %v197 = vld [vmem:[#allocation6] sm:$0xff]
    %v198 = vld [vmem:[#allocation6 + $0x8] sm:$0xff]
    %v199 = vld [vmem:[#allocation6 + $0x10] sm:$0xff]
    %v200 = vld [vmem:[#allocation6 + $0x18] sm:$0xff]
    %v201 = vld [vmem:[#allocation6 + $0x20] sm:$0xff]
    %v202 = vld [vmem:[#allocation6 + $0x28] sm:$0xff]
    %v203 = vld [vmem:[#allocation6 + $0x30] sm:$0xff]
    %v204 = vld [vmem:[#allocation6 + $0x38] sm:$0xff]
    %v205 = vld [vmem:[#allocation6 + $0x40] sm:$0xff]
    %v206 = vld [vmem:[#allocation6 + $0x48] sm:$0xff]
    %v207 = vld [vmem:[#allocation6 + $0x50] sm:$0xff]
    %v208 = vld [vmem:[#allocation6 + $0x58] sm:$0xff]
    %v209 = vld [vmem:[#allocation6 + $0x60] sm:$0xff]
    %v210 = vld [vmem:[#allocation6 + $0x68] sm:$0xff]
    %v211 = vld [vmem:[#allocation6 + $0x70] sm:$0xff]
    %v212 = vld [vmem:[#allocation6 + $0x78] sm:$0xff]
    %v213 = vld [vmem:[#allocation6 + $0x80] sm:$0xff]
    %v214 = vld [vmem:[#allocation6 + $0x88] sm:$0xff]
    %v215 = vld [vmem:[#allocation6 + $0x90] sm:$0xff]
    %v216 = vld [vmem:[#allocation6 + $0x98] sm:$0xff]
    %v217 = vld [vmem:[#allocation6 + $0xa0] sm:$0xff]
    %v218 = vld [vmem:[#allocation6 + $0xa8] sm:$0xff]
    %v219 = vld [vmem:[#allocation6 + $0xb0] sm:$0xff]
    %v220 = vld [vmem:[#allocation6 + $0xb8] sm:$0xff]
    %v221 = vld [vmem:[#allocation6 + $0xc0] sm:$0xff]
    %v222 = vld [vmem:[#allocation6 + $0xc8] sm:$0xff]
    %v223 = vld [vmem:[#allocation6 + $0xd0] sm:$0xff]
    %v224 = vld [vmem:[#allocation6 + $0xd8] sm:$0xff]
    %v225 = vld [vmem:[#allocation6 + $0xe0] sm:$0xff]
    %v226 = vld [vmem:[#allocation6 + $0xe8] sm:$0xff]
    %v227 = vld [vmem:[#allocation6 + $0xf0] sm:$0xff]
    %v228 = vld [vmem:[#allocation6 + $0xf8] sm:$0xff]
    %v229 = vpack.c.bf16 %v194, %v194
    %v230 = vld [vmem:[#allocation9] sm:$0xff]
    %v231 = vld [vmem:[#allocation9 + $0x8] sm:$0xff]
    %v232 = vld [vmem:[#allocation9 + $0x10] sm:$0xff]
    %v233 = vld [vmem:[#allocation9 + $0x18] sm:$0xff]
    %v234 = vld [vmem:[#allocation9 + $0x20] sm:$0xff]
    %v235 = vld [vmem:[#allocation9 + $0x28] sm:$0xff]
    %v236 = vld [vmem:[#allocation9 + $0x30] sm:$0xff]
    %v237 = vld [vmem:[#allocation9 + $0x38] sm:$0xff]
    %v238 = vld [vmem:[#allocation9 + $0x40] sm:$0xff]
    %v239 = vld [vmem:[#allocation9 + $0x48] sm:$0xff]
    %v240 = vld [vmem:[#allocation9 + $0x50] sm:$0xff]
    %v241 = vld [vmem:[#allocation9 + $0x58] sm:$0xff]
    %v242 = vld [vmem:[#allocation9 + $0x60] sm:$0xff]
    %v243 = vld [vmem:[#allocation9 + $0x68] sm:$0xff]
    %v244 = vld [vmem:[#allocation9 + $0x70] sm:$0xff]
    %v245 = vld [vmem:[#allocation9 + $0x78] sm:$0xff]
    %v246 = vld [vmem:[#allocation9 + $0x80] sm:$0xff]
    %v247 = vld [vmem:[#allocation9 + $0x88] sm:$0xff]
    %v248 = vld [vmem:[#allocation9 + $0x90] sm:$0xff]
    %v249 = vld [vmem:[#allocation9 + $0x98] sm:$0xff]
    %v250 = vld [vmem:[#allocation9 + $0xa0] sm:$0xff]
    %v251 = vld [vmem:[#allocation9 + $0xa8] sm:$0xff]
    %v252 = vld [vmem:[#allocation9 + $0xb0] sm:$0xff]
    %v253 = vld [vmem:[#allocation9 + $0xb8] sm:$0xff]
    %v254 = vld [vmem:[#allocation9 + $0xc0] sm:$0xff]
    %v255 = vld [vmem:[#allocation9 + $0xc8] sm:$0xff]
    %v256 = vld [vmem:[#allocation9 + $0xd0] sm:$0xff]
    %v257 = vld [vmem:[#allocation9 + $0xd8] sm:$0xff]
    %v258 = vld [vmem:[#allocation9 + $0xe0] sm:$0xff]
    %v259 = vld [vmem:[#allocation9 + $0xe8] sm:$0xff]
    %v260 = vld [vmem:[#allocation9 + $0xf0] sm:$0xff]
    %v261 = vld [vmem:[#allocation9 + $0xf8] sm:$0xff]
    %v294 = vunpack.c.l.b16 %v230
    %v295 = vunpack.c.h.b16 %v230
    %v296 = vunpack.c.l.b16 %v231
    %v297 = vunpack.c.h.b16 %v231
    %v298 = vunpack.c.l.b16 %v232
    %v299 = vunpack.c.h.b16 %v232
    %v300 = vunpack.c.l.b16 %v233
    %v301 = vunpack.c.h.b16 %v233
    %v302 = vunpack.c.l.b16 %v234
    %v303 = vunpack.c.h.b16 %v234
    %v304 = vunpack.c.l.b16 %v235
    %v305 = vunpack.c.h.b16 %v235
    %v306 = vunpack.c.l.b16 %v236
    %v307 = vunpack.c.h.b16 %v236
    %v308 = vunpack.c.l.b16 %v237
    %v309 = vunpack.c.h.b16 %v237
    %v310 = vunpack.c.l.b16 %v238
    %v311 = vunpack.c.h.b16 %v238
    %v312 = vunpack.c.l.b16 %v239
    %v313 = vunpack.c.h.b16 %v239
    %v314 = vunpack.c.l.b16 %v240
    %v315 = vunpack.c.h.b16 %v240
    %v316 = vunpack.c.l.b16 %v241
    %v317 = vunpack.c.h.b16 %v241
    %v318 = vunpack.c.l.b16 %v242
    %v319 = vunpack.c.h.b16 %v242
    %v320 = vunpack.c.l.b16 %v243
    %v321 = vunpack.c.h.b16 %v243
    %v322 = vunpack.c.l.b16 %v244
    %v323 = vunpack.c.h.b16 %v244
    %v324 = vunpack.c.l.b16 %v245
    %v325 = vunpack.c.h.b16 %v245
    %v326 = vunpack.c.l.b16 %v246
    %v327 = vunpack.c.h.b16 %v246
    %v328 = vunpack.c.l.b16 %v247
    %v329 = vunpack.c.h.b16 %v247
    %v330 = vunpack.c.l.b16 %v248
    %v331 = vunpack.c.h.b16 %v248
    %v332 = vunpack.c.l.b16 %v249
    %v333 = vunpack.c.h.b16 %v249
    %v334 = vunpack.c.l.b16 %v250
    %v335 = vunpack.c.h.b16 %v250
    %v336 = vunpack.c.l.b16 %v251
    %v337 = vunpack.c.h.b16 %v251
    %v338 = vunpack.c.l.b16 %v252
    %v339 = vunpack.c.h.b16 %v252
    %v340 = vunpack.c.l.b16 %v253
    %v341 = vunpack.c.h.b16 %v253
    %v342 = vunpack.c.l.b16 %v254
    %v343 = vunpack.c.h.b16 %v254
    %v344 = vunpack.c.l.b16 %v255
    %v345 = vunpack.c.h.b16 %v255
    %v346 = vunpack.c.l.b16 %v256
    %v347 = vunpack.c.h.b16 %v256
    %v348 = vunpack.c.l.b16 %v257
    %v349 = vunpack.c.h.b16 %v257
    %v350 = vunpack.c.l.b16 %v258
    %v351 = vunpack.c.h.b16 %v258
    %v352 = vunpack.c.l.b16 %v259
    %v353 = vunpack.c.h.b16 %v259
    %v354 = vunpack.c.l.b16 %v260
    %v355 = vunpack.c.h.b16 %v260
    %v356 = vunpack.c.l.b16 %v261
    %v357 = vunpack.c.h.b16 %v261
    %v358 = vpack.c.b16 %v298, %v294
    %v359 = vpack.c.b16 %v299, %v295
    %v360 = vpack.c.b16 %v300, %v296
    %v361 = vpack.c.b16 %v301, %v297
    %v362 = vpack.c.b16 %v306, %v302
    %v363 = vpack.c.b16 %v307, %v303
    %v364 = vpack.c.b16 %v308, %v304
    %v365 = vpack.c.b16 %v309, %v305
    %v366 = vpack.c.b16 %v314, %v310
    %v367 = vpack.c.b16 %v315, %v311
    %v368 = vpack.c.b16 %v316, %v312
    %v369 = vpack.c.b16 %v317, %v313
    %v370 = vpack.c.b16 %v322, %v318
    %v371 = vpack.c.b16 %v323, %v319
    %v372 = vpack.c.b16 %v324, %v320
    %v373 = vpack.c.b16 %v325, %v321
    %v374 = vpack.c.b16 %v330, %v326
    %v375 = vpack.c.b16 %v331, %v327
    %v376 = vpack.c.b16 %v332, %v328
    %v377 = vpack.c.b16 %v333, %v329
    %v378 = vpack.c.b16 %v338, %v334
    %v379 = vpack.c.b16 %v339, %v335
    %v380 = vpack.c.b16 %v340, %v336
    %v381 = vpack.c.b16 %v341, %v337
    %v382 = vpack.c.b16 %v346, %v342
    %v383 = vpack.c.b16 %v347, %v343
    %v384 = vpack.c.b16 %v348, %v344
    %v385 = vpack.c.b16 %v349, %v345
    %v386 = vpack.c.b16 %v354, %v350
    %v387 = vpack.c.b16 %v355, %v351
    %v388 = vpack.c.b16 %v356, %v352
    %v389 = vpack.c.b16 %v357, %v353
    %422 = vmatprep.subr.bf16.mxu0 %v359
    %423 = vmatpush1.bf16.msra.mxu0 %v358
    %424 = vmatprep.subr.bf16.mxu0 %v363
    %425 = vmatpush1.bf16.msra.mxu0 %v362
    %426 = vmatprep.subr.bf16.mxu0 %v367
    %427 = vmatpush1.bf16.msra.mxu0 %v366
    %428 = vmatprep.subr.bf16.mxu0 %v371
    %429 = vmatpush1.bf16.msra.mxu0 %v370
    %430 = vmatprep.subr.bf16.mxu0 %v375
    %431 = vmatpush1.bf16.msra.mxu0 %v374
    %432 = vmatprep.subr.bf16.mxu0 %v379
    %433 = vmatpush1.bf16.msra.mxu0 %v378
    %434 = vmatprep.subr.bf16.mxu0 %v383
    %435 = vmatpush1.bf16.msra.mxu0 %v382
    %436 = vmatprep.subr.bf16.mxu0 %v387
    %437 = vmatpush1.bf16.msra.mxu0 %v386
    %438 = vmatprep.subr.bf16.mxu0 0
    %439 = vmatpush1.bf16.msra.mxu0 0
    %440 = vmatprep.subr.bf16.mxu0 0
    %441 = vmatpush1.bf16.msra.mxu0 0
    %442 = vmatprep.subr.bf16.mxu0 0
    %443 = vmatpush1.bf16.msra.mxu0 0
    %444 = vmatprep.subr.bf16.mxu0 0
    %445 = vmatpush1.bf16.msra.mxu0 0
    %446 = vmatprep.subr.bf16.mxu0 0
    %447 = vmatpush1.bf16.msra.mxu0 0
    %448 = vmatprep.subr.bf16.mxu0 0
    %449 = vmatpush1.bf16.msra.mxu0 0
    %450 = vmatprep.subr.bf16.mxu0 0
    %451 = vmatpush1.bf16.msra.mxu0 0
    %452 = vmatprep.subr.bf16.mxu0 0
    %453 = vmatpush1.bf16.msra.mxu0 0
    %454 = vmatprep.mubr.bf16.mxu0 0
    %455 = vmatmul.mubr.bf16.gmra.mrb[0].mxu0 %v229
    %v456 = vpop.f32.mrb[0].mxu0
    %v457 = vadd.f32 0.0, %v456
    %v458 = vpop.f32.mrb[0].mxu0
    %v459 = vadd.f32 0.0, %v458
    %v460 = vpop.f32.mrb[0].mxu0
    %v461 = vpop.f32.mrb[0].mxu0
    %462 = vdwg.mxu0
    %463 = vmatprep.subr.bf16.mxu0 %v361
    %464 = vmatpush1.bf16.msra.mxu0 %v360
    %465 = vmatprep.subr.bf16.mxu0 %v365
    %466 = vmatpush1.bf16.msra.mxu0 %v364
    %467 = vmatprep.subr.bf16.mxu0 %v369
    %468 = vmatpush1.bf16.msra.mxu0 %v368
    %469 = vmatprep.subr.bf16.mxu0 %v373
    %470 = vmatpush1.bf16.msra.mxu0 %v372
    %471 = vmatprep.subr.bf16.mxu0 %v377
    %472 = vmatpush1.bf16.msra.mxu0 %v376
    %473 = vmatprep.subr.bf16.mxu0 %v381
    %474 = vmatpush1.bf16.msra.mxu0 %v380
    %475 = vmatprep.subr.bf16.mxu0 %v385
    %476 = vmatpush1.bf16.msra.mxu0 %v384
    %477 = vmatprep.subr.bf16.mxu0 %v389
    %478 = vmatpush1.bf16.msra.mxu0 %v388
    %479 = vmatprep.subr.bf16.mxu0 0
    %480 = vmatpush1.bf16.msra.mxu0 0
    %481 = vmatprep.subr.bf16.mxu0 0
    %482 = vmatpush1.bf16.msra.mxu0 0
    %483 = vmatprep.subr.bf16.mxu0 0
    %484 = vmatpush1.bf16.msra.mxu0 0
    %485 = vmatprep.subr.bf16.mxu0 0
    %486 = vmatpush1.bf16.msra.mxu0 0
    %487 = vmatprep.subr.bf16.mxu0 0
    %488 = vmatpush1.bf16.msra.mxu0 0
    %489 = vmatprep.subr.bf16.mxu0 0
    %490 = vmatpush1.bf16.msra.mxu0 0
    %491 = vmatprep.subr.bf16.mxu0 0
    %492 = vmatpush1.bf16.msra.mxu0 0
    %493 = vmatprep.subr.bf16.mxu0 0
    %494 = vmatpush1.bf16.msra.mxu0 0
    %495 = vmatprep.mubr.bf16.mxu0 0
    %496 = vmatmul.mubr.bf16.gmra.mrb[0].mxu0 %v229
    %v497 = vpop.f32.mrb[0].mxu0
    %v498 = vadd.f32 0.0, %v497
    %v499 = vpop.f32.mrb[0].mxu0
    %v500 = vadd.f32 0.0, %v499
    %v501 = vpop.f32.mrb[0].mxu0
    %v502 = vpop.f32.mrb[0].mxu0
    %503 = vdwg.mxu0
    %v536 = vunpack.c.l.b16 %v197
    %v537 = vunpack.c.h.b16 %v197
    %v538 = vunpack.c.l.b16 %v198
    %v539 = vunpack.c.h.b16 %v198
    %v540 = vunpack.c.l.b16 %v199
    %v541 = vunpack.c.h.b16 %v199
    %v542 = vunpack.c.l.b16 %v200
    %v543 = vunpack.c.h.b16 %v200
    %v544 = vunpack.c.l.b16 %v201
    %v545 = vunpack.c.h.b16 %v201
    %v546 = vunpack.c.l.b16 %v202
    %v547 = vunpack.c.h.b16 %v202
    %v548 = vunpack.c.l.b16 %v203
    %v549 = vunpack.c.h.b16 %v203
    %v550 = vunpack.c.l.b16 %v204
    %v551 = vunpack.c.h.b16 %v204
    %v552 = vunpack.c.l.b16 %v205
    %v553 = vunpack.c.h.b16 %v205
    %v554 = vunpack.c.l.b16 %v206
    %v555 = vunpack.c.h.b16 %v206
    %v556 = vunpack.c.l.b16 %v207
    %v557 = vunpack.c.h.b16 %v207
    %v558 = vunpack.c.l.b16 %v208
    %v559 = vunpack.c.h.b16 %v208
    %v560 = vunpack.c.l.b16 %v209
    %v561 = vunpack.c.h.b16 %v209
    %v562 = vunpack.c.l.b16 %v210
    %v563 = vunpack.c.h.b16 %v210
    %v564 = vunpack.c.l.b16 %v211
    %v565 = vunpack.c.h.b16 %v211
    %v566 = vunpack.c.l.b16 %v212
    %v567 = vunpack.c.h.b16 %v212
    %v568 = vunpack.c.l.b16 %v213
    %v569 = vunpack.c.h.b16 %v213
    %v570 = vunpack.c.l.b16 %v214
    %v571 = vunpack.c.h.b16 %v214
    %v572 = vunpack.c.l.b16 %v215
    %v573 = vunpack.c.h.b16 %v215
    %v574 = vunpack.c.l.b16 %v216
    %v575 = vunpack.c.h.b16 %v216
    %v576 = vunpack.c.l.b16 %v217
    %v577 = vunpack.c.h.b16 %v217
    %v578 = vunpack.c.l.b16 %v218
    %v579 = vunpack.c.h.b16 %v218
    %v580 = vunpack.c.l.b16 %v219
    %v581 = vunpack.c.h.b16 %v219
    %v582 = vunpack.c.l.b16 %v220
    %v583 = vunpack.c.h.b16 %v220
    %v584 = vunpack.c.l.b16 %v221
    %v585 = vunpack.c.h.b16 %v221
    %v586 = vunpack.c.l.b16 %v222
    %v587 = vunpack.c.h.b16 %v222
    %v588 = vunpack.c.l.b16 %v223
    %v589 = vunpack.c.h.b16 %v223
    %v590 = vunpack.c.l.b16 %v224
    %v591 = vunpack.c.h.b16 %v224
    %v592 = vunpack.c.l.b16 %v225
    %v593 = vunpack.c.h.b16 %v225
    %v594 = vunpack.c.l.b16 %v226
    %v595 = vunpack.c.h.b16 %v226
    %v596 = vunpack.c.l.b16 %v227
    %v597 = vunpack.c.h.b16 %v227
    %v598 = vunpack.c.l.b16 %v228
    %v599 = vunpack.c.h.b16 %v228
    %v600 = vpack.c.b16 %v540, %v536
    %v601 = vpack.c.b16 %v541, %v537
    %v602 = vpack.c.b16 %v542, %v538
    %v603 = vpack.c.b16 %v543, %v539
    %v604 = vpack.c.b16 %v548, %v544
    %v605 = vpack.c.b16 %v549, %v545
    %v606 = vpack.c.b16 %v550, %v546
    %v607 = vpack.c.b16 %v551, %v547
    %v608 = vpack.c.b16 %v556, %v552
    %v609 = vpack.c.b16 %v557, %v553
    %v610 = vpack.c.b16 %v558, %v554
    %v611 = vpack.c.b16 %v559, %v555
    %v612 = vpack.c.b16 %v564, %v560
    %v613 = vpack.c.b16 %v565, %v561
    %v614 = vpack.c.b16 %v566, %v562
    %v615 = vpack.c.b16 %v567, %v563
    %v616 = vpack.c.b16 %v572, %v568
    %v617 = vpack.c.b16 %v573, %v569
    %v618 = vpack.c.b16 %v574, %v570
    %v619 = vpack.c.b16 %v575, %v571
    %v620 = vpack.c.b16 %v580, %v576
    %v621 = vpack.c.b16 %v581, %v577
    %v622 = vpack.c.b16 %v582, %v578
    %v623 = vpack.c.b16 %v583, %v579
    %v624 = vpack.c.b16 %v588, %v584
    %v625 = vpack.c.b16 %v589, %v585
    %v626 = vpack.c.b16 %v590, %v586
    %v627 = vpack.c.b16 %v591, %v587
    %v628 = vpack.c.b16 %v596, %v592
    %v629 = vpack.c.b16 %v597, %v593
    %v630 = vpack.c.b16 %v598, %v594
    %v631 = vpack.c.b16 %v599, %v595
    %664 = vmatprep.subr.bf16.mxu0 %v601
    %665 = vmatpush1.bf16.msra.mxu0 %v600
    %666 = vmatprep.subr.bf16.mxu0 %v605
    %667 = vmatpush1.bf16.msra.mxu0 %v604
    %668 = vmatprep.subr.bf16.mxu0 %v609
    %669 = vmatpush1.bf16.msra.mxu0 %v608
    %670 = vmatprep.subr.bf16.mxu0 %v613
    %671 = vmatpush1.bf16.msra.mxu0 %v612
    %672 = vmatprep.subr.bf16.mxu0 %v617
    %673 = vmatpush1.bf16.msra.mxu0 %v616
    %674 = vmatprep.subr.bf16.mxu0 %v621
    %675 = vmatpush1.bf16.msra.mxu0 %v620
    %676 = vmatprep.subr.bf16.mxu0 %v625
    %677 = vmatpush1.bf16.msra.mxu0 %v624
    %678 = vmatprep.subr.bf16.mxu0 %v629
    %679 = vmatpush1.bf16.msra.mxu0 %v628
    %680 = vmatprep.subr.bf16.mxu0 0
    %681 = vmatpush1.bf16.msra.mxu0 0
    %682 = vmatprep.subr.bf16.mxu0 0
    %683 = vmatpush1.bf16.msra.mxu0 0
    %684 = vmatprep.subr.bf16.mxu0 0
    %685 = vmatpush1.bf16.msra.mxu0 0
    %686 = vmatprep.subr.bf16.mxu0 0
    %687 = vmatpush1.bf16.msra.mxu0 0
    %688 = vmatprep.subr.bf16.mxu0 0
    %689 = vmatpush1.bf16.msra.mxu0 0
    %690 = vmatprep.subr.bf16.mxu0 0
    %691 = vmatpush1.bf16.msra.mxu0 0
    %692 = vmatprep.subr.bf16.mxu0 0
    %693 = vmatpush1.bf16.msra.mxu0 0
    %694 = vmatprep.subr.bf16.mxu0 0
    %695 = vmatpush1.bf16.msra.mxu0 0
    %696 = vmatprep.mubr.bf16.mxu0 0
    %697 = vmatmul.mubr.bf16.gmra.mrb[0].mxu0 %v196
    %v698 = vpop.f32.mrb[0].mxu0
    %v699 = vadd.f32 %v457, %v698
    %v700 = vpop.f32.mrb[0].mxu0
    %v701 = vadd.f32 %v459, %v700
    %v702 = vpop.f32.mrb[0].mxu0
    %v703 = vpop.f32.mrb[0].mxu0
    %704 = vdwg.mxu0
    %705 = vmatprep.subr.bf16.mxu0 %v603
    %706 = vmatpush1.bf16.msra.mxu0 %v602
    %707 = vmatprep.subr.bf16.mxu0 %v607
    %708 = vmatpush1.bf16.msra.mxu0 %v606
    %709 = vmatprep.subr.bf16.mxu0 %v611
    %710 = vmatpush1.bf16.msra.mxu0 %v610
    %711 = vmatprep.subr.bf16.mxu0 %v615
    %712 = vmatpush1.bf16.msra.mxu0 %v614
    %713 = vmatprep.subr.bf16.mxu0 %v619
    %714 = vmatpush1.bf16.msra.mxu0 %v618
    %715 = vmatprep.subr.bf16.mxu0 %v623
    %716 = vmatpush1.bf16.msra.mxu0 %v622
    %717 = vmatprep.subr.bf16.mxu0 %v627
    %718 = vmatpush1.bf16.msra.mxu0 %v626
    %719 = vmatprep.subr.bf16.mxu0 %v631
    %720 = vmatpush1.bf16.msra.mxu0 %v630
    %721 = vmatprep.subr.bf16.mxu0 0
    %722 = vmatpush1.bf16.msra.mxu0 0
    %723 = vmatprep.subr.bf16.mxu0 0
    %724 = vmatpush1.bf16.msra.mxu0 0
    %725 = vmatprep.subr.bf16.mxu0 0
    %726 = vmatpush1.bf16.msra.mxu0 0
    %727 = vmatprep.subr.bf16.mxu0 0
    %728 = vmatpush1.bf16.msra.mxu0 0
    %729 = vmatprep.subr.bf16.mxu0 0
    %730 = vmatpush1.bf16.msra.mxu0 0
    %731 = vmatprep.subr.bf16.mxu0 0
    %732 = vmatpush1.bf16.msra.mxu0 0
    %733 = vmatprep.subr.bf16.mxu0 0
    %734 = vmatpush1.bf16.msra.mxu0 0
    %735 = vmatprep.subr.bf16.mxu0 0
    %736 = vmatpush1.bf16.msra.mxu0 0
    %737 = vmatprep.mubr.bf16.mxu0 0
    %738 = vmatmul.mubr.bf16.gmra.mrb[0].mxu0 %v196
    %v739 = vpop.f32.mrb[0].mxu0
    %v740 = vadd.f32 %v498, %v739
    %v741 = vpop.f32.mrb[0].mxu0
    %v742 = vadd.f32 %v500, %v741
    %v743 = vpop.f32.mrb[0].mxu0
    %v744 = vpop.f32.mrb[0].mxu0
    %745 = vdwg.mxu0
    %v746 = vld [vmem:[#allocation12] sm:$0xf]
    %v748 = vlaneseq
    %v749 = vshrl.u32 %v748, 7
    %v750 = vsub.s32 0, %v749
    %v751 = vrot.slane %v746, %v750
    %v752 = vlaneseq
    %v753 = vshrl.u32 %v752, 7
    %v754 = vsub.s32 1, %v753
    %v755 = vrot.slane %v746, %v754
    %v756 = vlaneseq
    %v757 = vshrl.u32 %v756, 7
    %v758 = vsub.s32 2, %v757
    %v759 = vrot.slane %v746, %v758
    %v760 = vlaneseq
    %v761 = vshrl.u32 %v760, 7
    %v762 = vsub.s32 3, %v761
    %v763 = vrot.slane %v746, %v762
    %v768 = vadd.f32 %v699, %v751
    %v769 = vadd.f32 %v701, %v755
    %v770 = vadd.f32 %v740, %v759
    %v771 = vadd.f32 %v742, %v763
    %v772 = vxor.u32 %v768, 2147483648
    %v773 = vxor.u32 %v769, 2147483648
    %v774 = vmul.f32 %v772, 1.442695
    %v775 = vpow.pop %v774
    %v776 = vmul.f32 %v773, 1.442695
    %v777 = vpow.pop %v776
    %v778 = vadd.f32 %v775, 1.0
    %v779 = vadd.f32 %v777, 1.0
    %v780 = vrcp.pop %v778
    %v781 = vmul.f32 1.0, %v780
    %v782 = vrcp.pop %v779
    %v783 = vmul.f32 1.0, %v782
    %v784 = vtanh.pop %v770
    %v785 = vxor.u32 %v771, 2147483648
    %v786 = vmul.f32 %v785, 1.442695
    %v787 = vpow.pop %v786
    %v788 = vadd.f32 %v787, 1.0
    %v789 = vrcp.pop %v788
    %v790 = vmul.f32 1.0, %v789
    %v791 = vmul.f32 %v783, %v195
    %v792 = vmul.f32 %v781, %v784
    %v793 = vadd.f32 %v791, %v792
    %v794 = vtanh.pop %v793
    %v795 = vmul.f32 %v790, %v794
    %796 = vst [vmem:[%s14] sm:$0xff] %v795
    %797 = vst [vmem:[%s15] sm:$0xff] %v793
    %s798 = scalar_lea.vmem %s1, 8
    %v799 = vld [vmem:[%s798] sm:$0xff]
    %s800 = scalar_lea.vmem %s2, 8
    %v801 = vld [vmem:[%s800] sm:$0xff]
    %v802 = vpack.c.bf16 %v795, %v795
    %v803 = vld [vmem:[#allocation7] sm:$0xff]
    %v804 = vld [vmem:[#allocation7 + $0x8] sm:$0xff]
    %v805 = vld [vmem:[#allocation7 + $0x10] sm:$0xff]
    %v806 = vld [vmem:[#allocation7 + $0x18] sm:$0xff]
    %v807 = vld [vmem:[#allocation7 + $0x20] sm:$0xff]
    %v808 = vld [vmem:[#allocation7 + $0x28] sm:$0xff]
    %v809 = vld [vmem:[#allocation7 + $0x30] sm:$0xff]
    %v810 = vld [vmem:[#allocation7 + $0x38] sm:$0xff]
    %v811 = vld [vmem:[#allocation7 + $0x40] sm:$0xff]
    %v812 = vld [vmem:[#allocation7 + $0x48] sm:$0xff]
    %v813 = vld [vmem:[#allocation7 + $0x50] sm:$0xff]
    %v814 = vld [vmem:[#allocation7 + $0x58] sm:$0xff]
    %v815 = vld [vmem:[#allocation7 + $0x60] sm:$0xff]
    %v816 = vld [vmem:[#allocation7 + $0x68] sm:$0xff]
    %v817 = vld [vmem:[#allocation7 + $0x70] sm:$0xff]
    %v818 = vld [vmem:[#allocation7 + $0x78] sm:$0xff]
    %v819 = vld [vmem:[#allocation7 + $0x80] sm:$0xff]
    %v820 = vld [vmem:[#allocation7 + $0x88] sm:$0xff]
    %v821 = vld [vmem:[#allocation7 + $0x90] sm:$0xff]
    %v822 = vld [vmem:[#allocation7 + $0x98] sm:$0xff]
    %v823 = vld [vmem:[#allocation7 + $0xa0] sm:$0xff]
    %v824 = vld [vmem:[#allocation7 + $0xa8] sm:$0xff]
    %v825 = vld [vmem:[#allocation7 + $0xb0] sm:$0xff]
    %v826 = vld [vmem:[#allocation7 + $0xb8] sm:$0xff]
    %v827 = vld [vmem:[#allocation7 + $0xc0] sm:$0xff]
    %v828 = vld [vmem:[#allocation7 + $0xc8] sm:$0xff]
    %v829 = vld [vmem:[#allocation7 + $0xd0] sm:$0xff]
    %v830 = vld [vmem:[#allocation7 + $0xd8] sm:$0xff]
    %v831 = vld [vmem:[#allocation7 + $0xe0] sm:$0xff]
    %v832 = vld [vmem:[#allocation7 + $0xe8] sm:$0xff]
    %v833 = vld [vmem:[#allocation7 + $0xf0] sm:$0xff]
    %v834 = vld [vmem:[#allocation7 + $0xf8] sm:$0xff]
    %v835 = vpack.c.bf16 %v799, %v799
    %v836 = vld [vmem:[#allocation10] sm:$0xff]
    %v837 = vld [vmem:[#allocation10 + $0x8] sm:$0xff]
    %v838 = vld [vmem:[#allocation10 + $0x10] sm:$0xff]
    %v839 = vld [vmem:[#allocation10 + $0x18] sm:$0xff]
    %v840 = vld [vmem:[#allocation10 + $0x20] sm:$0xff]
    %v841 = vld [vmem:[#allocation10 + $0x28] sm:$0xff]
    %v842 = vld [vmem:[#allocation10 + $0x30] sm:$0xff]
    %v843 = vld [vmem:[#allocation10 + $0x38] sm:$0xff]
    %v844 = vld [vmem:[#allocation10 + $0x40] sm:$0xff]
    %v845 = vld [vmem:[#allocation10 + $0x48] sm:$0xff]
    %v846 = vld [vmem:[#allocation10 + $0x50] sm:$0xff]
    %v847 = vld [vmem:[#allocation10 + $0x58] sm:$0xff]
    %v848 = vld [vmem:[#allocation10 + $0x60] sm:$0xff]
    %v849 = vld [vmem:[#allocation10 + $0x68] sm:$0xff]
    %v850 = vld [vmem:[#allocation10 + $0x70] sm:$0xff]
    %v851 = vld [vmem:[#allocation10 + $0x78] sm:$0xff]
    %v852 = vld [vmem:[#allocation10 + $0x80] sm:$0xff]
    %v853 = vld [vmem:[#allocation10 + $0x88] sm:$0xff]
    %v854 = vld [vmem:[#allocation10 + $0x90] sm:$0xff]
    %v855 = vld [vmem:[#allocation10 + $0x98] sm:$0xff]
    %v856 = vld [vmem:[#allocation10 + $0xa0] sm:$0xff]
    %v857 = vld [vmem:[#allocation10 + $0xa8] sm:$0xff]
    %v858 = vld [vmem:[#allocation10 + $0xb0] sm:$0xff]
    %v859 = vld [vmem:[#allocation10 + $0xb8] sm:$0xff]
    %v860 = vld [vmem:[#allocation10 + $0xc0] sm:$0xff]
    %v861 = vld [vmem:[#allocation10 + $0xc8] sm:$0xff]
    %v862 = vld [vmem:[#allocation10 + $0xd0] sm:$0xff]
    %v863 = vld [vmem:[#allocation10 + $0xd8] sm:$0xff]
    %v864 = vld [vmem:[#allocation10 + $0xe0] sm:$0xff]
    %v865 = vld [vmem:[#allocation10 + $0xe8] sm:$0xff]
    %v866 = vld [vmem:[#allocation10 + $0xf0] sm:$0xff]
    %v867 = vld [vmem:[#allocation10 + $0xf8] sm:$0xff]
    %v900 = vunpack.c.l.b16 %v836
    %v901 = vunpack.c.h.b16 %v836
    %v902 = vunpack.c.l.b16 %v837
    %v903 = vunpack.c.h.b16 %v837
    %v904 = vunpack.c.l.b16 %v838
    %v905 = vunpack.c.h.b16 %v838
    %v906 = vunpack.c.l.b16 %v839
    %v907 = vunpack.c.h.b16 %v839
    %v908 = vunpack.c.l.b16 %v840
    %v909 = vunpack.c.h.b16 %v840
    %v910 = vunpack.c.l.b16 %v841
    %v911 = vunpack.c.h.b16 %v841
    %v912 = vunpack.c.l.b16 %v842
    %v913 = vunpack.c.h.b16 %v842
    %v914 = vunpack.c.l.b16 %v843
    %v915 = vunpack.c.h.b16 %v843
    %v916 = vunpack.c.l.b16 %v844
    %v917 = vunpack.c.h.b16 %v844
    %v918 = vunpack.c.l.b16 %v845
    %v919 = vunpack.c.h.b16 %v845
    %v920 = vunpack.c.l.b16 %v846
    %v921 = vunpack.c.h.b16 %v846
    %v922 = vunpack.c.l.b16 %v847
    %v923 = vunpack.c.h.b16 %v847
    %v924 = vunpack.c.l.b16 %v848
    %v925 = vunpack.c.h.b16 %v848
    %v926 = vunpack.c.l.b16 %v849
    %v927 = vunpack.c.h.b16 %v849
    %v928 = vunpack.c.l.b16 %v850
    %v929 = vunpack.c.h.b16 %v850
    %v930 = vunpack.c.l.b16 %v851
    %v931 = vunpack.c.h.b16 %v851
    %v932 = vunpack.c.l.b16 %v852
    %v933 = vunpack.c.h.b16 %v852
    %v934 = vunpack.c.l.b16 %v853
    %v935 = vunpack.c.h.b16 %v853
    %v936 = vunpack.c.l.b16 %v854
    %v937 = vunpack.c.h.b16 %v854
    %v938 = vunpack.c.l.b16 %v855
    %v939 = vunpack.c.h.b16 %v855
    %v940 = vunpack.c.l.b16 %v856
    %v941 = vunpack.c.h.b16 %v856
    %v942 = vunpack.c.l.b16 %v857
    %v943 = vunpack.c.h.b16 %v857
    %v944 = vunpack.c.l.b16 %v858
    %v945 = vunpack.c.h.b16 %v858
    %v946 = vunpack.c.l.b16 %v859
    %v947 = vunpack.c.h.b16 %v859
    %v948 = vunpack.c.l.b16 %v860
    %v949 = vunpack.c.h.b16 %v860
    %v950 = vunpack.c.l.b16 %v861
    %v951 = vunpack.c.h.b16 %v861
    %v952 = vunpack.c.l.b16 %v862
    %v953 = vunpack.c.h.b16 %v862
    %v954 = vunpack.c.l.b16 %v863
    %v955 = vunpack.c.h.b16 %v863
    %v956 = vunpack.c.l.b16 %v864
    %v957 = vunpack.c.h.b16 %v864
    %v958 = vunpack.c.l.b16 %v865
    %v959 = vunpack.c.h.b16 %v865
    %v960 = vunpack.c.l.b16 %v866
    %v961 = vunpack.c.h.b16 %v866
    %v962 = vunpack.c.l.b16 %v867
    %v963 = vunpack.c.h.b16 %v867
    %v964 = vpack.c.b16 %v904, %v900
    %v965 = vpack.c.b16 %v905, %v901
    %v966 = vpack.c.b16 %v906, %v902
    %v967 = vpack.c.b16 %v907, %v903
    %v968 = vpack.c.b16 %v912, %v908
    %v969 = vpack.c.b16 %v913, %v909
    %v970 = vpack.c.b16 %v914, %v910
    %v971 = vpack.c.b16 %v915, %v911
    %v972 = vpack.c.b16 %v920, %v916
    %v973 = vpack.c.b16 %v921, %v917
    %v974 = vpack.c.b16 %v922, %v918
    %v975 = vpack.c.b16 %v923, %v919
    %v976 = vpack.c.b16 %v928, %v924
    %v977 = vpack.c.b16 %v929, %v925
    %v978 = vpack.c.b16 %v930, %v926
    %v979 = vpack.c.b16 %v931, %v927
    %v980 = vpack.c.b16 %v936, %v932
    %v981 = vpack.c.b16 %v937, %v933
    %v982 = vpack.c.b16 %v938, %v934
    %v983 = vpack.c.b16 %v939, %v935
    %v984 = vpack.c.b16 %v944, %v940
    %v985 = vpack.c.b16 %v945, %v941
    %v986 = vpack.c.b16 %v946, %v942
    %v987 = vpack.c.b16 %v947, %v943
    %v988 = vpack.c.b16 %v952, %v948
    %v989 = vpack.c.b16 %v953, %v949
    %v990 = vpack.c.b16 %v954, %v950
    %v991 = vpack.c.b16 %v955, %v951
    %v992 = vpack.c.b16 %v960, %v956
    %v993 = vpack.c.b16 %v961, %v957
    %v994 = vpack.c.b16 %v962, %v958
    %v995 = vpack.c.b16 %v963, %v959
    %1028 = vmatprep.subr.bf16.mxu0 %v965
    %1029 = vmatpush1.bf16.msra.mxu0 %v964
    %1030 = vmatprep.subr.bf16.mxu0 %v969
    %1031 = vmatpush1.bf16.msra.mxu0 %v968
    %1032 = vmatprep.subr.bf16.mxu0 %v973
    %1033 = vmatpush1.bf16.msra.mxu0 %v972
    %1034 = vmatprep.subr.bf16.mxu0 %v977
    %1035 = vmatpush1.bf16.msra.mxu0 %v976
    %1036 = vmatprep.subr.bf16.mxu0 %v981
    %1037 = vmatpush1.bf16.msra.mxu0 %v980
    %1038 = vmatprep.subr.bf16.mxu0 %v985
    %1039 = vmatpush1.bf16.msra.mxu0 %v984
    %1040 = vmatprep.subr.bf16.mxu0 %v989
    %1041 = vmatpush1.bf16.msra.mxu0 %v988
    %1042 = vmatprep.subr.bf16.mxu0 %v993
    %1043 = vmatpush1.bf16.msra.mxu0 %v992
    %1044 = vmatprep.subr.bf16.mxu0 0
    %1045 = vmatpush1.bf16.msra.mxu0 0
    %1046 = vmatprep.subr.bf16.mxu0 0
    %1047 = vmatpush1.bf16.msra.mxu0 0
    %1048 = vmatprep.subr.bf16.mxu0 0
    %1049 = vmatpush1.bf16.msra.mxu0 0
    %1050 = vmatprep.subr.bf16.mxu0 0
    %1051 = vmatpush1.bf16.msra.mxu0 0
    %1052 = vmatprep.subr.bf16.mxu0 0
    %1053 = vmatpush1.bf16.msra.mxu0 0
    %1054 = vmatprep.subr.bf16.mxu0 0
    %1055 = vmatpush1.bf16.msra.mxu0 0
    %1056 = vmatprep.subr.bf16.mxu0 0
    %1057 = vmatpush1.bf16.msra.mxu0 0
    %1058 = vmatprep.subr.bf16.mxu0 0
    %1059 = vmatpush1.bf16.msra.mxu0 0
    %1060 = vmatprep.mubr.bf16.mxu0 0
    %1061 = vmatmul.mubr.bf16.gmra.mrb[0].mxu0 %v835
    %v1062 = vpop.f32.mrb[0].mxu0
    %v1063 = vadd.f32 0.0, %v1062
    %v1064 = vpop.f32.mrb[0].mxu0
    %v1065 = vadd.f32 0.0, %v1064
    %v1066 = vpop.f32.mrb[0].mxu0
    %v1067 = vpop.f32.mrb[0].mxu0
    %1068 = vdwg.mxu0
    %1069 = vmatprep.subr.bf16.mxu0 %v967
    %1070 = vmatpush1.bf16.msra.mxu0 %v966
    %1071 = vmatprep.subr.bf16.mxu0 %v971
    %1072 = vmatpush1.bf16.msra.mxu0 %v970
    %1073 = vmatprep.subr.bf16.mxu0 %v975
    %1074 = vmatpush1.bf16.msra.mxu0 %v974
    %1075 = vmatprep.subr.bf16.mxu0 %v979
    %1076 = vmatpush1.bf16.msra.mxu0 %v978
    %1077 = vmatprep.subr.bf16.mxu0 %v983
    %1078 = vmatpush1.bf16.msra.mxu0 %v982
    %1079 = vmatprep.subr.bf16.mxu0 %v987
    %1080 = vmatpush1.bf16.msra.mxu0 %v986
    %1081 = vmatprep.subr.bf16.mxu0 %v991
    %1082 = vmatpush1.bf16.msra.mxu0 %v990
    %1083 = vmatprep.subr.bf16.mxu0 %v995
    %1084 = vmatpush1.bf16.msra.mxu0 %v994
    %1085 = vmatprep.subr.bf16.mxu0 0
    %1086 = vmatpush1.bf16.msra.mxu0 0
    %1087 = vmatprep.subr.bf16.mxu0 0
    %1088 = vmatpush1.bf16.msra.mxu0 0
    %1089 = vmatprep.subr.bf16.mxu0 0
    %1090 = vmatpush1.bf16.msra.mxu0 0
    %1091 = vmatprep.subr.bf16.mxu0 0
    %1092 = vmatpush1.bf16.msra.mxu0 0
    %1093 = vmatprep.subr.bf16.mxu0 0
    %1094 = vmatpush1.bf16.msra.mxu0 0
    %1095 = vmatprep.subr.bf16.mxu0 0
    %1096 = vmatpush1.bf16.msra.mxu0 0
    %1097 = vmatprep.subr.bf16.mxu0 0
    %1098 = vmatpush1.bf16.msra.mxu0 0
    %1099 = vmatprep.subr.bf16.mxu0 0
    %1100 = vmatpush1.bf16.msra.mxu0 0
    %1101 = vmatprep.mubr.bf16.mxu0 0
    %1102 = vmatmul.mubr.bf16.gmra.mrb[0].mxu0 %v835
    %v1103 = vpop.f32.mrb[0].mxu0
    %v1104 = vadd.f32 0.0, %v1103
    %v1105 = vpop.f32.mrb[0].mxu0
    %v1106 = vadd.f32 0.0, %v1105
    %v1107 = vpop.f32.mrb[0].mxu0
    %v1108 = vpop.f32.mrb[0].mxu0
    %1109 = vdwg.mxu0
    %v1142 = vunpack.c.l.b16 %v803
    %v1143 = vunpack.c.h.b16 %v803
    %v1144 = vunpack.c.l.b16 %v804
    %v1145 = vunpack.c.h.b16 %v804
    %v1146 = vunpack.c.l.b16 %v805
    %v1147 = vunpack.c.h.b16 %v805
    %v1148 = vunpack.c.l.b16 %v806
    %v1149 = vunpack.c.h.b16 %v806
    %v1150 = vunpack.c.l.b16 %v807
    %v1151 = vunpack.c.h.b16 %v807
    %v1152 = vunpack.c.l.b16 %v808
    %v1153 = vunpack.c.h.b16 %v808
    %v1154 = vunpack.c.l.b16 %v809
    %v1155 = vunpack.c.h.b16 %v809
    %v1156 = vunpack.c.l.b16 %v810
    %v1157 = vunpack.c.h.b16 %v810
    %v1158 = vunpack.c.l.b16 %v811
    %v1159 = vunpack.c.h.b16 %v811
    %v1160 = vunpack.c.l.b16 %v812
    %v1161 = vunpack.c.h.b16 %v812
    %v1162 = vunpack.c.l.b16 %v813
    %v1163 = vunpack.c.h.b16 %v813
    %v1164 = vunpack.c.l.b16 %v814
    %v1165 = vunpack.c.h.b16 %v814
    %v1166 = vunpack.c.l.b16 %v815
    %v1167 = vunpack.c.h.b16 %v815
    %v1168 = vunpack.c.l.b16 %v816
    %v1169 = vunpack.c.h.b16 %v816
    %v1170 = vunpack.c.l.b16 %v817
    %v1171 = vunpack.c.h.b16 %v817
    %v1172 = vunpack.c.l.b16 %v818
    %v1173 = vunpack.c.h.b16 %v818
    %v1174 = vunpack.c.l.b16 %v819
    %v1175 = vunpack.c.h.b16 %v819
    %v1176 = vunpack.c.l.b16 %v820
    %v1177 = vunpack.c.h.b16 %v820
    %v1178 = vunpack.c.l.b16 %v821
    %v1179 = vunpack.c.h.b16 %v821
    %v1180 = vunpack.c.l.b16 %v822
    %v1181 = vunpack.c.h.b16 %v822
    %v1182 = vunpack.c.l.b16 %v823
    %v1183 = vunpack.c.h.b16 %v823
    %v1184 = vunpack.c.l.b16 %v824
    %v1185 = vunpack.c.h.b16 %v824
    %v1186 = vunpack.c.l.b16 %v825
    %v1187 = vunpack.c.h.b16 %v825
    %v1188 = vunpack.c.l.b16 %v826
    %v1189 = vunpack.c.h.b16 %v826
    %v1190 = vunpack.c.l.b16 %v827
    %v1191 = vunpack.c.h.b16 %v827
    %v1192 = vunpack.c.l.b16 %v828
    %v1193 = vunpack.c.h.b16 %v828
    %v1194 = vunpack.c.l.b16 %v829
    %v1195 = vunpack.c.h.b16 %v829
    %v1196 = vunpack.c.l.b16 %v830
    %v1197 = vunpack.c.h.b16 %v830
    %v1198 = vunpack.c.l.b16 %v831
    %v1199 = vunpack.c.h.b16 %v831
    %v1200 = vunpack.c.l.b16 %v832
    %v1201 = vunpack.c.h.b16 %v832
    %v1202 = vunpack.c.l.b16 %v833
    %v1203 = vunpack.c.h.b16 %v833
    %v1204 = vunpack.c.l.b16 %v834
    %v1205 = vunpack.c.h.b16 %v834
    %v1206 = vpack.c.b16 %v1146, %v1142
    %v1207 = vpack.c.b16 %v1147, %v1143
    %v1208 = vpack.c.b16 %v1148, %v1144
    %v1209 = vpack.c.b16 %v1149, %v1145
    %v1210 = vpack.c.b16 %v1154, %v1150
    %v1211 = vpack.c.b16 %v1155, %v1151
    %v1212 = vpack.c.b16 %v1156, %v1152
    %v1213 = vpack.c.b16 %v1157, %v1153
    %v1214 = vpack.c.b16 %v1162, %v1158
    %v1215 = vpack.c.b16 %v1163, %v1159
    %v1216 = vpack.c.b16 %v1164, %v1160
    %v1217 = vpack.c.b16 %v1165, %v1161
    %v1218 = vpack.c.b16 %v1170, %v1166
    %v1219 = vpack.c.b16 %v1171, %v1167
    %v1220 = vpack.c.b16 %v1172, %v1168
    %v1221 = vpack.c.b16 %v1173, %v1169
    %v1222 = vpack.c.b16 %v1178, %v1174
    %v1223 = vpack.c.b16 %v1179, %v1175
    %v1224 = vpack.c.b16 %v1180, %v1176
    %v1225 = vpack.c.b16 %v1181, %v1177
    %v1226 = vpack.c.b16 %v1186, %v1182
    %v1227 = vpack.c.b16 %v1187, %v1183
    %v1228 = vpack.c.b16 %v1188, %v1184
    %v1229 = vpack.c.b16 %v1189, %v1185
    %v1230 = vpack.c.b16 %v1194, %v1190
    %v1231 = vpack.c.b16 %v1195, %v1191
    %v1232 = vpack.c.b16 %v1196, %v1192
    %v1233 = vpack.c.b16 %v1197, %v1193
    %v1234 = vpack.c.b16 %v1202, %v1198
    %v1235 = vpack.c.b16 %v1203, %v1199
    %v1236 = vpack.c.b16 %v1204, %v1200
    %v1237 = vpack.c.b16 %v1205, %v1201
    %1270 = vmatprep.subr.bf16.mxu0 %v1207
    %1271 = vmatpush1.bf16.msra.mxu0 %v1206
    %1272 = vmatprep.subr.bf16.mxu0 %v1211
    %1273 = vmatpush1.bf16.msra.mxu0 %v1210
    %1274 = vmatprep.subr.bf16.mxu0 %v1215
    %1275 = vmatpush1.bf16.msra.mxu0 %v1214
    %1276 = vmatprep.subr.bf16.mxu0 %v1219
    %1277 = vmatpush1.bf16.msra.mxu0 %v1218
    %1278 = vmatprep.subr.bf16.mxu0 %v1223
    %1279 = vmatpush1.bf16.msra.mxu0 %v1222
    %1280 = vmatprep.subr.bf16.mxu0 %v1227
    %1281 = vmatpush1.bf16.msra.mxu0 %v1226
    %1282 = vmatprep.subr.bf16.mxu0 %v1231
    %1283 = vmatpush1.bf16.msra.mxu0 %v1230
    %1284 = vmatprep.subr.bf16.mxu0 %v1235
    %1285 = vmatpush1.bf16.msra.mxu0 %v1234
    %1286 = vmatprep.subr.bf16.mxu0 0
    %1287 = vmatpush1.bf16.msra.mxu0 0
    %1288 = vmatprep.subr.bf16.mxu0 0
    %1289 = vmatpush1.bf16.msra.mxu0 0
    %1290 = vmatprep.subr.bf16.mxu0 0
    %1291 = vmatpush1.bf16.msra.mxu0 0
    %1292 = vmatprep.subr.bf16.mxu0 0
    %1293 = vmatpush1.bf16.msra.mxu0 0
    %1294 = vmatprep.subr.bf16.mxu0 0
    %1295 = vmatpush1.bf16.msra.mxu0 0
    %1296 = vmatprep.subr.bf16.mxu0 0
    %1297 = vmatpush1.bf16.msra.mxu0 0
    %1298 = vmatprep.subr.bf16.mxu0 0
    %1299 = vmatpush1.bf16.msra.mxu0 0
    %1300 = vmatprep.subr.bf16.mxu0 0
    %1301 = vmatpush1.bf16.msra.mxu0 0
    %1302 = vmatprep.mubr.bf16.mxu0 0
    %1303 = vmatmul.mubr.bf16.gmra.mrb[0].mxu0 %v802
    %v1304 = vpop.f32.mrb[0].mxu0
    %v1305 = vadd.f32 %v1063, %v1304
    %v1306 = vpop.f32.mrb[0].mxu0
    %v1307 = vadd.f32 %v1065, %v1306
    %v1308 = vpop.f32.mrb[0].mxu0
    %v1309 = vpop.f32.mrb[0].mxu0
    %1310 = vdwg.mxu0
    %1311 = vmatprep.subr.bf16.mxu0 %v1209
    %1312 = vmatpush1.bf16.msra.mxu0 %v1208
    %1313 = vmatprep.subr.bf16.mxu0 %v1213
    %1314 = vmatpush1.bf16.msra.mxu0 %v1212
    %1315 = vmatprep.subr.bf16.mxu0 %v1217
    %1316 = vmatpush1.bf16.msra.mxu0 %v1216
    %1317 = vmatprep.subr.bf16.mxu0 %v1221
    %1318 = vmatpush1.bf16.msra.mxu0 %v1220
    %1319 = vmatprep.subr.bf16.mxu0 %v1225
    %1320 = vmatpush1.bf16.msra.mxu0 %v1224
    %1321 = vmatprep.subr.bf16.mxu0 %v1229
    %1322 = vmatpush1.bf16.msra.mxu0 %v1228
    %1323 = vmatprep.subr.bf16.mxu0 %v1233
    %1324 = vmatpush1.bf16.msra.mxu0 %v1232
    %1325 = vmatprep.subr.bf16.mxu0 %v1237
    %1326 = vmatpush1.bf16.msra.mxu0 %v1236
    %1327 = vmatprep.subr.bf16.mxu0 0
    %1328 = vmatpush1.bf16.msra.mxu0 0
    %1329 = vmatprep.subr.bf16.mxu0 0
    %1330 = vmatpush1.bf16.msra.mxu0 0
    %1331 = vmatprep.subr.bf16.mxu0 0
    %1332 = vmatpush1.bf16.msra.mxu0 0
    %1333 = vmatprep.subr.bf16.mxu0 0
    %1334 = vmatpush1.bf16.msra.mxu0 0
    %1335 = vmatprep.subr.bf16.mxu0 0
    %1336 = vmatpush1.bf16.msra.mxu0 0
    %1337 = vmatprep.subr.bf16.mxu0 0
    %1338 = vmatpush1.bf16.msra.mxu0 0
    %1339 = vmatprep.subr.bf16.mxu0 0
    %1340 = vmatpush1.bf16.msra.mxu0 0
    %1341 = vmatprep.subr.bf16.mxu0 0
    %1342 = vmatpush1.bf16.msra.mxu0 0
    %1343 = vmatprep.mubr.bf16.mxu0 0
    %1344 = vmatmul.mubr.bf16.gmra.mrb[0].mxu0 %v802
    %v1345 = vpop.f32.mrb[0].mxu0
    %v1346 = vadd.f32 %v1104, %v1345
    %v1347 = vpop.f32.mrb[0].mxu0
    %v1348 = vadd.f32 %v1106, %v1347
    %v1349 = vpop.f32.mrb[0].mxu0
    %v1350 = vpop.f32.mrb[0].mxu0
    %1351 = vdwg.mxu0
    %v1352 = vld [vmem:[#allocation13] sm:$0xf]
    %v1354 = vlaneseq
    %v1355 = vshrl.u32 %v1354, 7
    %v1356 = vsub.s32 0, %v1355
    %v1357 = vrot.slane %v1352, %v1356
    %v1358 = vlaneseq
    %v1359 = vshrl.u32 %v1358, 7
    %v1360 = vsub.s32 1, %v1359
    %v1361 = vrot.slane %v1352, %v1360
    %v1362 = vlaneseq
    %v1363 = vshrl.u32 %v1362, 7
    %v1364 = vsub.s32 2, %v1363
    %v1365 = vrot.slane %v1352, %v1364
    %v1366 = vlaneseq
    %v1367 = vshrl.u32 %v1366, 7
    %v1368 = vsub.s32 3, %v1367
    %v1369 = vrot.slane %v1352, %v1368
    %v1374 = vadd.f32 %v1305, %v1357
    %v1375 = vadd.f32 %v1307, %v1361
    %v1376 = vadd.f32 %v1346, %v1365
    %v1377 = vadd.f32 %v1348, %v1369
    %v1378 = vxor.u32 %v1374, 2147483648
    %v1379 = vxor.u32 %v1375, 2147483648
    %v1380 = vmul.f32 %v1378, 1.442695
    %v1381 = vpow.pop %v1380
    %v1382 = vmul.f32 %v1379, 1.442695
    %v1383 = vpow.pop %v1382
    %v1384 = vadd.f32 %v1381, 1.0
    %v1385 = vadd.f32 %v1383, 1.0
    %v1386 = vrcp.pop %v1384
    %v1387 = vmul.f32 1.0, %v1386
    %v1388 = vrcp.pop %v1385
    %v1389 = vmul.f32 1.0, %v1388
    %v1390 = vtanh.pop %v1376
    %v1391 = vxor.u32 %v1377, 2147483648
    %v1392 = vmul.f32 %v1391, 1.442695
    %v1393 = vpow.pop %v1392
    %v1394 = vadd.f32 %v1393, 1.0
    %v1395 = vrcp.pop %v1394
    %v1396 = vmul.f32 1.0, %v1395
    %v1397 = vmul.f32 %v1389, %v801
    %v1398 = vmul.f32 %v1387, %v1390
    %v1399 = vadd.f32 %v1397, %v1398
    %v1400 = vtanh.pop %v1399
    %v1401 = vmul.f32 %v1396, %v1400
    %s1402 = scalar_lea.vmem %s14, 8
    %1403 = vst [vmem:[%s1402] sm:$0xff] %v1401
    %s1404 = scalar_lea.vmem %s15, 8
    %1405 = vst [vmem:[%s1404] sm:$0xff] %v1399
    %v1406 = vld [vmem:[#allocation2] sm:$0xf]
    %v1407 = vld [vmem:[#allocation2 + $0x4] sm:$0xf]
    %v1408 = vld [vmem:[#allocation2 + $0x8] sm:$0xf]
    %v1409 = vld [vmem:[#allocation2 + $0xc] sm:$0xf]
    %v1410 = vld [vmem:[#allocation2 + $0x10] sm:$0xf]
    %v1411 = vld [vmem:[#allocation2 + $0x14] sm:$0xf]
    %v1412 = vld [vmem:[#allocation2 + $0x18] sm:$0xf]
    %v1413 = vld [vmem:[#allocation2 + $0x1c] sm:$0xf]
    %v1414 = vunpack.c.l.bf16 %v1406
    %v1415 = vunpack.c.l.bf16 %v1407
    %v1416 = vunpack.c.l.bf16 %v1408
    %v1417 = vunpack.c.l.bf16 %v1409
    %v1418 = vunpack.c.l.bf16 %v1410
    %v1419 = vunpack.c.l.bf16 %v1411
    %v1420 = vunpack.c.l.bf16 %v1412
    %v1421 = vunpack.c.l.bf16 %v1413
    %v1423 = vcombine.high %v1401, %v1401
    %v1425 = vunpack.c.l.s4 1966171168
    %v1426 = vunpack.c.0.s8 %v1425
    %v1427 = vlaneseq
    %v1428 = vshrl.u32 %v1427, 7
    %v1429 = vsub.s32 %v1426, %v1428
    %v1430 = vrot.slane %v1401, %v1429
    %v1432 = vunpack.c.l.s4 1966171168
    %v1433 = vunpack.c.0.s8 %v1432
    %v1434 = vlaneseq
    %v1435 = vshrl.u32 %v1434, 7
    %v1436 = vsub.s32 %v1433, %v1435
    %v1437 = vrot.slane %v1423, %v1436
    %v1438 = vcombine.high %v1430, %v1430
    %v1439 = vcombine.high %v1437, %v1437
    %v1441 = vunpack.c.l.s4 1966171168
    %v1442 = vunpack.c.0.s8 %v1441
    %v1443 = vlaneseq
    %v1444 = vshrl.u32 %v1443, 7
    %v1445 = vsub.s32 %v1442, %v1444
    %v1446 = vrot.slane %v1430, %v1445
    %v1448 = vunpack.c.l.s4 1966171168
    %v1449 = vunpack.c.0.s8 %v1448
    %v1450 = vlaneseq
    %v1451 = vshrl.u32 %v1450, 7
    %v1452 = vsub.s32 %v1449, %v1451
    %v1453 = vrot.slane %v1437, %v1452
    %v1455 = vunpack.c.l.s4 1966171168
    %v1456 = vunpack.c.0.s8 %v1455
    %v1457 = vlaneseq
    %v1458 = vshrl.u32 %v1457, 7
    %v1459 = vsub.s32 %v1456, %v1458
    %v1460 = vrot.slane %v1438, %v1459
    %v1462 = vunpack.c.l.s4 1966171168
    %v1463 = vunpack.c.0.s8 %v1462
    %v1464 = vlaneseq
    %v1465 = vshrl.u32 %v1464, 7
    %v1466 = vsub.s32 %v1463, %v1465
    %v1467 = vrot.slane %v1439, %v1466
    %v1468 = vcombine.high %v1446, %v1446
    %v1469 = vcombine.high %v1453, %v1453
    %v1470 = vcombine.high %v1460, %v1460
    %v1471 = vcombine.high %v1467, %v1467
    %v1472 = vlaneseq
    %v1473 = vshrl.u32 %v1472, 7
    %v1474 = vsub.s32 0, %v1473
    %v1475 = vrot.slane %v1446, %v1474
    %v1476 = vlaneseq
    %v1477 = vshrl.u32 %v1476, 7
    %v1478 = vsub.s32 0, %v1477
    %v1479 = vrot.slane %v1460, %v1478
    %v1480 = vlaneseq
    %v1481 = vshrl.u32 %v1480, 7
    %v1482 = vsub.s32 0, %v1481
    %v1483 = vrot.slane %v1468, %v1482
    %v1484 = vlaneseq
    %v1485 = vshrl.u32 %v1484, 7
    %v1486 = vsub.s32 0, %v1485
    %v1487 = vrot.slane %v1470, %v1486
    %v1488 = vlaneseq
    %v1489 = vshrl.u32 %v1488, 7
    %v1490 = vsub.s32 0, %v1489
    %v1491 = vrot.slane %v1453, %v1490
    %v1492 = vlaneseq
    %v1493 = vshrl.u32 %v1492, 7
    %v1494 = vsub.s32 0, %v1493
    %v1495 = vrot.slane %v1467, %v1494
    %v1496 = vlaneseq
    %v1497 = vshrl.u32 %v1496, 7
    %v1498 = vsub.s32 0, %v1497
    %v1499 = vrot.slane %v1469, %v1498
    %v1500 = vlaneseq
    %v1501 = vshrl.u32 %v1500, 7
    %v1502 = vsub.s32 0, %v1501
    %v1503 = vrot.slane %v1471, %v1502
    %v1512 = vmul.f32 %v1414, %v1475
    %v1513 = vmul.f32 %v1415, %v1479
    %v1514 = vmul.f32 %v1416, %v1483
    %v1515 = vmul.f32 %v1417, %v1487
    %v1516 = vmul.f32 %v1418, %v1491
    %v1517 = vmul.f32 %v1419, %v1495
    %v1518 = vmul.f32 %v1420, %v1499
    %v1519 = vmul.f32 %v1421, %v1503
    %1520 = vadd.xlane.f32.xlu0 %v1512
    %v1521 = vpop.xlane.xlu0 %1520
    %1522 = vadd.xlane.f32.xlu0 %v1513
    %v1523 = vpop.xlane.xlu0 %1522
    %1524 = vadd.xlane.f32.xlu0 %v1514
    %v1525 = vpop.xlane.xlu0 %1524
    %1526 = vadd.xlane.f32.xlu0 %v1515
    %v1527 = vpop.xlane.xlu0 %1526
    %1528 = vadd.xlane.f32.xlu0 %v1516
    %v1529 = vpop.xlane.xlu0 %1528
    %1530 = vadd.xlane.f32.xlu0 %v1517
    %v1531 = vpop.xlane.xlu0 %1530
    %1532 = vadd.xlane.f32.xlu0 %v1518
    %v1533 = vpop.xlane.xlu0 %1532
    %1534 = vadd.xlane.f32.xlu0 %v1519
    %v1535 = vpop.xlane.xlu0 %1534
    %v1536 = vld [vmem:[#allocation4] sm:$0xff]
    %vm1537 = vcmp.gt.f32.partialorder %v1536, 0.5
    %v1546 = vlaneseq
    %v1547 = vand.u32 %v1546, 127
    %v1548 = vlaneseq
    %v1549 = vshrl.u32 %v1548, 7
    %v1550 = vsub.s32 %v1547, %v1549
    %v1551 = vrot.slane %v1521, %v1550
    %v1552 = vlaneseq
    %v1553 = vshrl.u32 %v1552, 7
    %v1554 = vsub.s32 %v1547, %v1553
    %v1555 = vrot.slane %v1523, %v1554
    %v1556 = vlaneseq
    %v1557 = vshrl.u32 %v1556, 7
    %v1558 = vsub.s32 %v1547, %v1557
    %v1559 = vrot.slane %v1525, %v1558
    %v1560 = vlaneseq
    %v1561 = vshrl.u32 %v1560, 7
    %v1562 = vsub.s32 %v1547, %v1561
    %v1563 = vrot.slane %v1527, %v1562
    %v1564 = vlaneseq
    %v1565 = vshrl.u32 %v1564, 7
    %v1566 = vsub.s32 %v1547, %v1565
    %v1567 = vrot.slane %v1529, %v1566
    %v1568 = vlaneseq
    %v1569 = vshrl.u32 %v1568, 7
    %v1570 = vsub.s32 %v1547, %v1569
    %v1571 = vrot.slane %v1531, %v1570
    %v1572 = vlaneseq
    %v1573 = vshrl.u32 %v1572, 7
    %v1574 = vsub.s32 %v1547, %v1573
    %v1575 = vrot.slane %v1533, %v1574
    %v1576 = vlaneseq
    %v1577 = vshrl.u32 %v1576, 7
    %v1578 = vsub.s32 %v1547, %v1577
    %v1579 = vrot.slane %v1535, %v1578
    %vm1580 = vcmask 1041409
    %v1581 = vsel %vm1580, %v1555, %v1551
    %vm1582 = vcmask 1042434
    %v1583 = vsel %vm1582, %v1559, %v1581
    %vm1584 = vcmask 1043459
    %v1585 = vsel %vm1584, %v1563, %v1583
    %vm1586 = vcmask 1044484
    %v1587 = vsel %vm1586, %v1567, %v1585
    %vm1588 = vcmask 1045509
    %v1589 = vsel %vm1588, %v1571, %v1587
    %vm1590 = vcmask 1046534
    %v1591 = vsel %vm1590, %v1575, %v1589
    %vm1592 = vcmask 1047559
    %v1593 = vsel %vm1592, %v1579, %v1591
    %v1595 = vsel %vm1537, %v1593, -1e+30
    %vm1596 = vcmask 64512
    %v1597 = vsel %vm1596, %v1595, -inf
    %1598 = vmax.xlane.f32.xlu0 %v1597
    %v1599 = vpop.xlane.xlu0 %1598
    %v1600 = vsub.f32 %v1595, %v1599
    %v1601 = vmul.f32 %v1600, 1.442695
    %v1602 = vpow.pop %v1601
    %v1603 = vsel %vm1596, %v1602, 0.0
    %1604 = vadd.xlane.f32.xlu0 %v1603
    %v1605 = vpop.xlane.xlu0 %1604
    %v1606 = vrcp.pop %v1605
    %v1607 = vmul.f32 %v1602, %v1606
    %1608 = vst.msk [vmem:[%s16] sm:$0xff] %vm1596, %v1607
    %v1609 = vlaneseq
    %v1610 = vshrl.u32 %v1609, 7
    %v1611 = vsub.s32 0, %v1610
    %v1612 = vrot.slane %v1607, %v1611
    %1614 = vbcast.lane.b32.xlu0 %v1612, 256
    %v1615 = vpop.permute.xlu0 %1614
    %v1616 = vlaneseq
    %v1617 = vshrl.u32 %v1616, 7
    %v1618 = vsub.s32 1, %v1617
    %v1619 = vrot.slane %v1607, %v1618
    %1621 = vbcast.lane.b32.xlu0 %v1619, 256
    %v1622 = vpop.permute.xlu0 %1621
    %v1623 = vlaneseq
    %v1624 = vshrl.u32 %v1623, 7
    %v1625 = vsub.s32 2, %v1624
    %v1626 = vrot.slane %v1607, %v1625
    %1628 = vbcast.lane.b32.xlu0 %v1626, 256
    %v1629 = vpop.permute.xlu0 %1628
    %v1630 = vlaneseq
    %v1631 = vshrl.u32 %v1630, 7
    %v1632 = vsub.s32 3, %v1631
    %v1633 = vrot.slane %v1607, %v1632
    %1635 = vbcast.lane.b32.xlu0 %v1633, 256
    %v1636 = vpop.permute.xlu0 %1635
    %v1637 = vlaneseq
    %v1638 = vshrl.u32 %v1637, 7
    %v1639 = vsub.s32 4, %v1638
    %v1640 = vrot.slane %v1607, %v1639
    %1642 = vbcast.lane.b32.xlu0 %v1640, 256
    %v1643 = vpop.permute.xlu0 %1642
    %v1644 = vlaneseq
    %v1645 = vshrl.u32 %v1644, 7
    %v1646 = vsub.s32 5, %v1645
    %v1647 = vrot.slane %v1607, %v1646
    %1649 = vbcast.lane.b32.xlu0 %v1647, 256
    %v1650 = vpop.permute.xlu0 %1649
    %v1651 = vlaneseq
    %v1652 = vshrl.u32 %v1651, 7
    %v1653 = vsub.s32 6, %v1652
    %v1654 = vrot.slane %v1607, %v1653
    %1656 = vbcast.lane.b32.xlu0 %v1654, 256
    %v1657 = vpop.permute.xlu0 %1656
    %v1658 = vlaneseq
    %v1659 = vshrl.u32 %v1658, 7
    %v1660 = vsub.s32 7, %v1659
    %v1661 = vrot.slane %v1607, %v1660
    %1663 = vbcast.lane.b32.xlu0 %v1661, 256
    %v1664 = vpop.permute.xlu0 %1663
    %v1665 = vmul.f32 %v1615, %v1414
    %v1666 = vmul.f32 %v1622, %v1415
    %v1667 = vmul.f32 %v1629, %v1416
    %v1668 = vmul.f32 %v1636, %v1417
    %v1669 = vmul.f32 %v1643, %v1418
    %v1670 = vmul.f32 %v1650, %v1419
    %v1671 = vmul.f32 %v1657, %v1420
    %v1672 = vmul.f32 %v1664, %v1421
    %v1673 = vrot.slane %v1665, 4
    %v1674 = vadd.f32 %v1665, %v1673
    %v1675 = vrot.slane %v1674, 2
    %v1676 = vadd.f32 %v1674, %v1675
    %v1677 = vrot.slane %v1676, 1
    %v1678 = vadd.f32 %v1676, %v1677
    %v1679 = vrot.slane %v1666, 4
    %v1680 = vadd.f32 %v1666, %v1679
    %v1681 = vrot.slane %v1680, 2
    %v1682 = vadd.f32 %v1680, %v1681
    %v1683 = vrot.slane %v1682, 1
    %v1684 = vadd.f32 %v1682, %v1683
    %v1685 = vrot.slane %v1667, 4
    %v1686 = vadd.f32 %v1667, %v1685
    %v1687 = vrot.slane %v1686, 2
    %v1688 = vadd.f32 %v1686, %v1687
    %v1689 = vrot.slane %v1688, 1
    %v1690 = vadd.f32 %v1688, %v1689
    %v1691 = vrot.slane %v1668, 4
    %v1692 = vadd.f32 %v1668, %v1691
    %v1693 = vrot.slane %v1692, 2
    %v1694 = vadd.f32 %v1692, %v1693
    %v1695 = vrot.slane %v1694, 1
    %v1696 = vadd.f32 %v1694, %v1695
    %v1697 = vrot.slane %v1669, 4
    %v1698 = vadd.f32 %v1669, %v1697
    %v1699 = vrot.slane %v1698, 2
    %v1700 = vadd.f32 %v1698, %v1699
    %v1701 = vrot.slane %v1700, 1
    %v1702 = vadd.f32 %v1700, %v1701
    %v1703 = vrot.slane %v1670, 4
    %v1704 = vadd.f32 %v1670, %v1703
    %v1705 = vrot.slane %v1704, 2
    %v1706 = vadd.f32 %v1704, %v1705
    %v1707 = vrot.slane %v1706, 1
    %v1708 = vadd.f32 %v1706, %v1707
    %v1709 = vrot.slane %v1671, 4
    %v1710 = vadd.f32 %v1671, %v1709
    %v1711 = vrot.slane %v1710, 2
    %v1712 = vadd.f32 %v1710, %v1711
    %v1713 = vrot.slane %v1712, 1
    %v1714 = vadd.f32 %v1712, %v1713
    %v1715 = vrot.slane %v1672, 4
    %v1716 = vadd.f32 %v1672, %v1715
    %v1717 = vrot.slane %v1716, 2
    %v1718 = vadd.f32 %v1716, %v1717
    %v1719 = vrot.slane %v1718, 1
    %v1720 = vadd.f32 %v1718, %v1719
    %v1721 = vpack.c.bf16 %v1678, %v1678
    %v1722 = vpack.c.bf16 %v1684, %v1684
    %v1723 = vpack.c.bf16 %v1690, %v1690
    %v1724 = vpack.c.bf16 %v1696, %v1696
    %v1725 = vpack.c.bf16 %v1702, %v1702
    %v1726 = vpack.c.bf16 %v1708, %v1708
    %v1727 = vpack.c.bf16 %v1714, %v1714
    %v1728 = vpack.c.bf16 %v1720, %v1720
    %v1729 = vld [vmem:[#allocation15] sm:$0xf]
    %v1730 = vld [vmem:[#allocation15 + $0x4] sm:$0xf]
    %v1731 = vld [vmem:[#allocation15 + $0x8] sm:$0xf]
    %v1732 = vld [vmem:[#allocation15 + $0xc] sm:$0xf]
    %v1733 = vld [vmem:[#allocation15 + $0x10] sm:$0xf]
    %v1734 = vld [vmem:[#allocation15 + $0x14] sm:$0xf]
    %v1735 = vld [vmem:[#allocation15 + $0x18] sm:$0xf]
    %v1736 = vld [vmem:[#allocation15 + $0x1c] sm:$0xf]
    %v1737 = vld [vmem:[#allocation15 + $0x20] sm:$0xf]
    %v1738 = vld [vmem:[#allocation15 + $0x24] sm:$0xf]
    %v1739 = vld [vmem:[#allocation15 + $0x28] sm:$0xf]
    %v1740 = vld [vmem:[#allocation15 + $0x2c] sm:$0xf]
    %v1741 = vld [vmem:[#allocation15 + $0x30] sm:$0xf]
    %v1742 = vld [vmem:[#allocation15 + $0x34] sm:$0xf]
    %v1743 = vld [vmem:[#allocation15 + $0x38] sm:$0xf]
    %v1744 = vld [vmem:[#allocation15 + $0x3c] sm:$0xf]
    %v1745 = vpack.c.bf16 %v1401, %v1401
    %v1746 = vld [vmem:[#allocation16] sm:$0xf]
    %v1747 = vld [vmem:[#allocation16 + $0x4] sm:$0xf]
    %v1748 = vld [vmem:[#allocation16 + $0x8] sm:$0xf]
    %v1749 = vld [vmem:[#allocation16 + $0xc] sm:$0xf]
    %v1750 = vld [vmem:[#allocation16 + $0x10] sm:$0xf]
    %v1751 = vld [vmem:[#allocation16 + $0x14] sm:$0xf]
    %v1752 = vld [vmem:[#allocation16 + $0x18] sm:$0xf]
    %v1753 = vld [vmem:[#allocation16 + $0x1c] sm:$0xf]
    %v1754 = vld [vmem:[#allocation16 + $0x20] sm:$0xf]
    %v1755 = vld [vmem:[#allocation16 + $0x24] sm:$0xf]
    %v1756 = vld [vmem:[#allocation16 + $0x28] sm:$0xf]
    %v1757 = vld [vmem:[#allocation16 + $0x2c] sm:$0xf]
    %v1758 = vld [vmem:[#allocation16 + $0x30] sm:$0xf]
    %v1759 = vld [vmem:[#allocation16 + $0x34] sm:$0xf]
    %v1760 = vld [vmem:[#allocation16 + $0x38] sm:$0xf]
    %v1761 = vld [vmem:[#allocation16 + $0x3c] sm:$0xf]
    %v1778 = vunpack.c.l.b16 %v1746
    %v1779 = vunpack.c.l.b16 %v1747
    %v1780 = vunpack.c.l.b16 %v1748
    %v1781 = vunpack.c.l.b16 %v1749
    %v1782 = vunpack.c.l.b16 %v1750
    %v1783 = vunpack.c.l.b16 %v1751
    %v1784 = vunpack.c.l.b16 %v1752
    %v1785 = vunpack.c.l.b16 %v1753
    %v1786 = vunpack.c.l.b16 %v1754
    %v1787 = vunpack.c.l.b16 %v1755
    %v1788 = vunpack.c.l.b16 %v1756
    %v1789 = vunpack.c.l.b16 %v1757
    %v1790 = vunpack.c.l.b16 %v1758
    %v1791 = vunpack.c.l.b16 %v1759
    %v1792 = vunpack.c.l.b16 %v1760
    %v1793 = vunpack.c.l.b16 %v1761
    %v1794 = vpack.c.b16 %v1779, %v1778
    %v1795 = vpack.c.b16 %v1781, %v1780
    %v1796 = vpack.c.b16 %v1783, %v1782
    %v1797 = vpack.c.b16 %v1785, %v1784
    %v1798 = vpack.c.b16 %v1787, %v1786
    %v1799 = vpack.c.b16 %v1789, %v1788
    %v1800 = vpack.c.b16 %v1791, %v1790
    %v1801 = vpack.c.b16 %v1793, %v1792
    %1810 = vmatprep.subr.bf16.mxu0 0
    %1811 = vmatpush1.bf16.msra.mxu0 %v1794
    %1812 = vmatprep.subr.bf16.mxu0 0
    %1813 = vmatpush1.bf16.msra.mxu0 %v1795
    %1814 = vmatprep.subr.bf16.mxu0 0
    %1815 = vmatpush1.bf16.msra.mxu0 %v1796
    %1816 = vmatprep.subr.bf16.mxu0 0
    %1817 = vmatpush1.bf16.msra.mxu0 %v1797
    %1818 = vmatprep.subr.bf16.mxu0 0
    %1819 = vmatpush1.bf16.msra.mxu0 %v1798
    %1820 = vmatprep.subr.bf16.mxu0 0
    %1821 = vmatpush1.bf16.msra.mxu0 %v1799
    %1822 = vmatprep.subr.bf16.mxu0 0
    %1823 = vmatpush1.bf16.msra.mxu0 %v1800
    %1824 = vmatprep.subr.bf16.mxu0 0
    %1825 = vmatpush1.bf16.msra.mxu0 %v1801
    %1826 = vmatprep.subr.bf16.mxu0 0
    %1827 = vmatpush1.bf16.msra.mxu0 0
    %1828 = vmatprep.subr.bf16.mxu0 0
    %1829 = vmatpush1.bf16.msra.mxu0 0
    %1830 = vmatprep.subr.bf16.mxu0 0
    %1831 = vmatpush1.bf16.msra.mxu0 0
    %1832 = vmatprep.subr.bf16.mxu0 0
    %1833 = vmatpush1.bf16.msra.mxu0 0
    %1834 = vmatprep.subr.bf16.mxu0 0
    %1835 = vmatpush1.bf16.msra.mxu0 0
    %1836 = vmatprep.subr.bf16.mxu0 0
    %1837 = vmatpush1.bf16.msra.mxu0 0
    %1838 = vmatprep.subr.bf16.mxu0 0
    %1839 = vmatpush1.bf16.msra.mxu0 0
    %1840 = vmatprep.subr.bf16.mxu0 0
    %1841 = vmatpush1.bf16.msra.mxu0 0
    %1842 = vmatprep.mubr.bf16.mxu0 0
    %1843 = vmatmul.mubr.bf16.gmra.mrb[0].mxu0 %v1745
    %v1844 = vpop.f32.mrb[0].mxu0
    %v1845 = vadd.f32 0.0, %v1844
    %v1846 = vpop.f32.mrb[0].mxu0
    %v1847 = vpop.f32.mrb[0].mxu0
    %v1848 = vpop.f32.mrb[0].mxu0
    %1849 = vdwg.mxu0
    %v1858 = vunpack.c.l.b16 %v1721
    %v1859 = vunpack.c.l.b16 %v1722
    %v1860 = vunpack.c.l.b16 %v1723
    %v1861 = vunpack.c.l.b16 %v1724
    %v1862 = vunpack.c.l.b16 %v1725
    %v1863 = vunpack.c.l.b16 %v1726
    %v1864 = vunpack.c.l.b16 %v1727
    %v1865 = vunpack.c.l.b16 %v1728
    %v1866 = vsel %vm1580, %v1859, %v1858
    %v1867 = vsel %vm1582, %v1860, %v1866
    %v1868 = vsel %vm1584, %v1861, %v1867
    %v1869 = vsel %vm1586, %v1862, %v1868
    %v1870 = vsel %vm1588, %v1863, %v1869
    %v1871 = vsel %vm1590, %v1864, %v1870
    %v1872 = vsel %vm1592, %v1865, %v1871
    %v1873 = vpack.c.b16 %v1872, %v1872
    %v1891 = vunpack.c.l.b16 %v1729
    %v1892 = vunpack.c.l.b16 %v1730
    %v1893 = vunpack.c.l.b16 %v1731
    %v1894 = vunpack.c.l.b16 %v1732
    %v1895 = vunpack.c.l.b16 %v1733
    %v1896 = vunpack.c.l.b16 %v1734
    %v1897 = vunpack.c.l.b16 %v1735
    %v1898 = vunpack.c.l.b16 %v1736
    %v1899 = vunpack.c.l.b16 %v1737
    %v1900 = vunpack.c.l.b16 %v1738
    %v1901 = vunpack.c.l.b16 %v1739
    %v1902 = vunpack.c.l.b16 %v1740
    %v1903 = vunpack.c.l.b16 %v1741
    %v1904 = vunpack.c.l.b16 %v1742
    %v1905 = vunpack.c.l.b16 %v1743
    %v1906 = vunpack.c.l.b16 %v1744
    %v1907 = vpack.c.b16 %v1892, %v1891
    %v1908 = vpack.c.b16 %v1894, %v1893
    %v1909 = vpack.c.b16 %v1896, %v1895
    %v1910 = vpack.c.b16 %v1898, %v1897
    %v1911 = vpack.c.b16 %v1900, %v1899
    %v1912 = vpack.c.b16 %v1902, %v1901
    %v1913 = vpack.c.b16 %v1904, %v1903
    %v1914 = vpack.c.b16 %v1906, %v1905
    %1923 = vmatprep.subr.bf16.mxu0 0
    %1924 = vmatpush1.bf16.msra.mxu0 %v1907
    %1925 = vmatprep.subr.bf16.mxu0 0
    %1926 = vmatpush1.bf16.msra.mxu0 %v1908
    %1927 = vmatprep.subr.bf16.mxu0 0
    %1928 = vmatpush1.bf16.msra.mxu0 %v1909
    %1929 = vmatprep.subr.bf16.mxu0 0
    %1930 = vmatpush1.bf16.msra.mxu0 %v1910
    %1931 = vmatprep.subr.bf16.mxu0 0
    %1932 = vmatpush1.bf16.msra.mxu0 %v1911
    %1933 = vmatprep.subr.bf16.mxu0 0
    %1934 = vmatpush1.bf16.msra.mxu0 %v1912
    %1935 = vmatprep.subr.bf16.mxu0 0
    %1936 = vmatpush1.bf16.msra.mxu0 %v1913
    %1937 = vmatprep.subr.bf16.mxu0 0
    %1938 = vmatpush1.bf16.msra.mxu0 %v1914
    %1939 = vmatprep.subr.bf16.mxu0 0
    %1940 = vmatpush1.bf16.msra.mxu0 0
    %1941 = vmatprep.subr.bf16.mxu0 0
    %1942 = vmatpush1.bf16.msra.mxu0 0
    %1943 = vmatprep.subr.bf16.mxu0 0
    %1944 = vmatpush1.bf16.msra.mxu0 0
    %1945 = vmatprep.subr.bf16.mxu0 0
    %1946 = vmatpush1.bf16.msra.mxu0 0
    %1947 = vmatprep.subr.bf16.mxu0 0
    %1948 = vmatpush1.bf16.msra.mxu0 0
    %1949 = vmatprep.subr.bf16.mxu0 0
    %1950 = vmatpush1.bf16.msra.mxu0 0
    %1951 = vmatprep.subr.bf16.mxu0 0
    %1952 = vmatpush1.bf16.msra.mxu0 0
    %1953 = vmatprep.subr.bf16.mxu0 0
    %1954 = vmatpush1.bf16.msra.mxu0 0
    %1955 = vmatprep.mubr.bf16.mxu0 0
    %1956 = vmatmul.mubr.bf16.gmra.mrb[0].mxu0 %v1873
    %v1957 = vpop.f32.mrb[0].mxu0
    %v1958 = vadd.f32 %v1845, %v1957
    %v1959 = vpop.f32.mrb[0].mxu0
    %v1960 = vpop.f32.mrb[0].mxu0
    %v1961 = vpop.f32.mrb[0].mxu0
    %1962 = vdwg.mxu0
    %v1963 = vld [vmem:[#allocation18] sm:$0x1]
    %v1965 = vlaneseq
    %v1966 = vshrl.u32 %v1965, 7
    %v1967 = vsub.s32 0, %v1966
    %v1968 = vrot.slane %v1963, %v1967
    %v1970 = vadd.f32 %v1958, %v1968
    %vm1971 = vcmp.gt.f32.partialorder %v1970, 0.0
    %v1972 = vmul.f32 %v1970, 0.01
    %v1973 = vsel %vm1971, %v1970, %v1972
    %v1974 = vpack.c.bf16 %v1973, %v1973
    %1975 = vst [vmem:[%s17] sm:$0xf] %v1974
    // Predicated region
    $region102: #{luong_decoder_step.2} parent=1 // pred_check
      _
    $region103: #{luong_decoder_step.2} parent=1 // pred_check_branch
      %1977 = sbr.rel (0) target = $region105
    $region104: #{luong_decoder_step.2} parent=1 // pred_region
      _
    $region105: #{luong_decoder_step.2} parent=1 // pred_fallthru
      _
    // Predicated region
    $region106: #{luong_decoder_step.2} parent=1 // pred_check
      _
    $region107: #{luong_decoder_step.2} parent=1 // pred_check_branch
      %1979 = sbr.rel (0) target = $region109
    $region108: #{luong_decoder_step.2} parent=1 // pred_region
      _
    $region109: #{luong_decoder_step.2} parent=1 // pred_fallthru
      _
    // Predicated region
    $region110: #{luong_decoder_step.2} parent=1 // pred_check
      _
    $region111: #{luong_decoder_step.2} parent=1 // pred_check_branch
      %1981 = sbr.rel (0) target = $region113
    $region112: #{luong_decoder_step.2} parent=1 // pred_region
      _
    $region113: #{luong_decoder_step.2} parent=1 // pred_fallthru
      _
    // Predicated region
    $region114: #{luong_decoder_step.2} parent=1 // pred_check
      _
    $region115: #{luong_decoder_step.2} parent=1 // pred_check_branch
      %1983 = sbr.rel (0) target = $region117
    $region116: #{luong_decoder_step.2} parent=1 // pred_region
      _
    $region117: #{luong_decoder_step.2} parent=1 // pred_fallthru
      _
    // Predicated region
    $region118: #{luong_decoder_step.2} parent=1 // pred_check
      _
    $region119: #{luong_decoder_step.2} parent=1 // pred_check_branch
      %1985 = sbr.rel (0) target = $region121
    $region120: #{luong_decoder_step.2} parent=1 // pred_region
      _
    $region121: #{luong_decoder_step.2} parent=1 // pred_fallthru
      _
    // Predicated region
    $region122: #{luong_decoder_step.2} parent=1 // pred_check
      _
    $region123: #{luong_decoder_step.2} parent=1 // pred_check_branch
      %1987 = sbr.rel (0) target = $region125
    $region124: #{luong_decoder_step.2} parent=1 // pred_region
      _
    $region125: #{luong_decoder_step.2} parent=1 // pred_fallthru
      _
    // Predicated region
    $region126: #{luong_decoder_step.2} parent=1 // pred_check
      _
    $region127: #{luong_decoder_step.2} parent=1 // pred_check_branch
      %1989 = sbr.rel (0) target = $region129
    $region128: #{luong_decoder_step.2} parent=1 // pred_region
      _
    $region129: #{luong_decoder_step.2} parent=1 // pred_fallthru
      _
    // Predicated region
    $region130: #{luong_decoder_step.2} parent=1 // pred_check
      _
    $region131: #{luong_decoder_step.2} parent=1 // pred_check_branch
      %1991 = sbr.rel (0) target = $region133
    $region132: #{luong_decoder_step.2} parent=1 // pred_region
      _
    $region133: #{luong_decoder_step.2} parent=1 // pred_fallthru
      _
    %1992 = vsyncpa [#allocation3], 1
    %1993 = vsyncpa [#allocation5], 1
    %1994 = vsyncpa [#allocation8], 1
    %1995 = vsyncpa [#allocation11], 1
    %1996 = vsyncpa [#allocation14], 1
    %1997 = vsyncpa [#allocation17], 1

</llo_original>
